<compile_context>
chip_gen: v5e
topology: v5e:2x2
jax: 0.10.0
libtpu: 0.0.40
codegen_flags: <defaults>
</compile_context>

<pallas_src>
import jax
import jax.numpy as jnp
from jax.experimental import pallas as pl
from jax.experimental.pallas import tpu as pltpu


# --------------------------------------------------------------------------
# Kernel A: fused per-point chain
# --------------------------------------------------------------------------

def _pointwise_kernel(x_ref, ew_ref, eb_ref, bw_ref, bb_ref,
                      pw_ref, pb_ref, ow_ref, ob_ref,
                      bf_ref, bfn_ref, ol_ref):
    # Encoder stand-in.  TODO(synk): real KPConv encoder blocks not provided.
    h = jnp.dot(x_ref[...], ew_ref[...],
                preferred_element_type=jnp.float32) + eb_ref[...]
    # bottleneck: Conv1d(enc_dim, gnn_dim, 1)
    h = jnp.dot(h, bw_ref[...], preferred_element_type=jnp.float32) + bb_ref[...]
    # TODO(synk): InformationInteractive (GNN / cross-attention) -> identity.
    # pro_gnn: Conv1d(gnn_dim, gnn_dim, 1)
    bf = jnp.dot(h, pw_ref[...], preferred_element_type=jnp.float32) + pb_ref[...]
    # ol_score: Conv1d(gnn_dim, 1, 1) folded into a VPU reduction
    # (avoids a lane-width-1 MXU matmul / masked store path).
    ol = jnp.sum(bf * ow_ref[...], axis=1, keepdims=True) + ob_ref[...]
    # Feature L2 normalization for the saliency path (torch: / (norm + 1e-8)).
    nrm = jnp.sqrt(jnp.sum(bf * bf, axis=1, keepdims=True))

    bf_ref[...] = bf
    bfn_ref[...] = (bf / (nrm + 1e-8)).astype(jnp.bfloat16)  # bf16 for MXU pass
    ol_ref[...] = ol


def _pointwise_chain(feats_pad, params, *, tm):
    n_pad, cin = feats_pad.shape
    gnn = params["pro_w"].shape[1]

    def wspec(arr):
        return pl.BlockSpec(arr.shape, lambda i: (0, 0))     # resident in VMEM

    return pl.pallas_call(
        _pointwise_kernel,
        out_shape=(
            jax.ShapeDtypeStruct((n_pad, gnn), jnp.float32),   # raw pro_gnn feats
            jax.ShapeDtypeStruct((n_pad, gnn), jnp.bfloat16),  # L2-normalized feats
            jax.ShapeDtypeStruct((n_pad, 1), jnp.float32),     # overlap logits
        ),
        grid=(n_pad // tm,),
        in_specs=[
            pl.BlockSpec((tm, cin), lambda i: (i, 0)),
            wspec(params["enc_w"]), wspec(params["enc_b"]),
            wspec(params["bneck_w"]), wspec(params["bneck_b"]),
            wspec(params["pro_w"]), wspec(params["pro_b"]),
            wspec(params["ol_w_row"]), wspec(params["ol_b"]),
        ],
        out_specs=(
            pl.BlockSpec((tm, gnn), lambda i: (i, 0)),
            pl.BlockSpec((tm, gnn), lambda i: (i, 0)),
            pl.BlockSpec((tm, 1), lambda i: (i, 0)),
        ),
        compiler_params=pltpu.CompilerParams(dimension_semantics=("parallel",)),
    )(feats_pad,
      params["enc_w"], params["enc_b"],
      params["bneck_w"], params["bneck_b"],
      params["pro_w"], params["pro_b"],
      params["ol_w_row"], params["ol_b"])


# --------------------------------------------------------------------------
# Kernel B: tiled flash-style saliency  (softmax(q @ k.T / T) @ k_scores)
# --------------------------------------------------------------------------

def _sali_kernel(nk_ref, invt_ref, q_ref, k_ref, ks_ref, o_ref,
                 m_ref, l_ref, acc_ref):
    ki = pl.program_id(1)

    @pl.when(ki == 0)
    def _():
        m_ref[...] = jnp.full_like(m_ref, -1e30)
        l_ref[...] = jnp.zeros_like(l_ref)
        acc_ref[...] = jnp.zeros_like(acc_ref)

    # (tq, C) x (tk, C) -> (tq, tk), bf16 inputs, f32 accumulation on the MXU.
    s = jax.lax.dot_general(
        q_ref[...], k_ref[...],
        dimension_numbers=(((1,), (1,)), ((), ())),
        preferred_element_type=jnp.float32,
    ) * invt_ref[0]

    # Mask padded keys (padding is always at the tail, so block ki=0 is valid).
    tk = k_ref.shape[0]
    col = jax.lax.broadcasted_iota(jnp.int32, s.shape, 1) + ki * tk
    s = jnp.where(col < nk_ref[0], s, -1e30)

    # Online softmax + fused weighted-sum accumulator (replaces the (tk,1) matmul).
    m_prev = m_ref[...]
    m_new = jnp.maximum(m_prev, jnp.max(s, axis=1, keepdims=True))
    alpha = jnp.exp(m_prev - m_new)
    p = jnp.exp(s - m_new)
    l_ref[...] = alpha * l_ref[...] + jnp.sum(p, axis=1, keepdims=True)
    acc_ref[...] = alpha * acc_ref[...] + jnp.sum(p * ks_ref[...], axis=1,
                                                  keepdims=True)
    m_ref[...] = m_new

    @pl.when(ki == pl.num_programs(1) - 1)
    def _():
        o_ref[...] = acc_ref[...] * pl.reciprocal(l_ref[...], approx=True)


def _saliency_scores(q_norm, k_norm, k_scores_row, n_k, inv_temp, *, tq, tk):
    """softmax_j(q_norm @ k_norm.T / T)[i, j] * k_scores[j] summed over j."""
    nq_pad, c = q_norm.shape
    nk_pad = k_norm.shape[0]
    # Tile notes: 256x256 is safe on all generations.  v6e (128 MiB VMEM) can go
    # tk=1024-2048 with deeper buffering; v7x (64 MiB, 2 TCs) keeps the query
    # axis "parallel" so both cores split the work.
    return pl.pallas_call(
        _sali_kernel,
        out_shape=jax.ShapeDtypeStruct((nq_pad, 1), jnp.float32),
        grid_spec=pltpu.PrefetchScalarGridSpec(
            num_scalar_prefetch=2,
            grid=(nq_pad // tq, nk_pad // tk),
            in_specs=[
                pl.BlockSpec((tq, c), lambda qi, ki, nk, it: (qi, 0)),
                pl.BlockSpec((tk, c), lambda qi, ki, nk, it: (ki, 0)),
                pl.BlockSpec((1, tk), lambda qi, ki, nk, it: (0, ki)),
            ],
            out_specs=pl.BlockSpec((tq, 1), lambda qi, ki, nk, it: (qi, 0)),
            scratch_shapes=[
                pltpu.VMEM((tq, 1), jnp.float32),   # running max
                pltpu.VMEM((tq, 1), jnp.float32),   # running exp-sum
                pltpu.VMEM((tq, 1), jnp.float32),   # running sum(exp * score)
            ],
        ),
        compiler_params=pltpu.CompilerParams(
            dimension_semantics=("parallel", "arbitrary")),
    )(n_k, inv_temp, q_norm, k_norm, k_scores_row)


# --------------------------------------------------------------------------
# Kernel C: final head (normalize features, sigmoid scores, assemble output)
# --------------------------------------------------------------------------

def _final_head_kernel(bf_ref, ol_ref, sl_ref, o_ref):
    bf = bf_ref[...]
    g = bf.shape[1]
    nrm = jnp.sqrt(jnp.sum(bf * bf, axis=1, keepdims=True))
    o_ref[:, :g] = bf / jnp.maximum(nrm, 1e-12)            # clamp: no NaN
    o_ref[:, g:g + 1] = jax.nn.sigmoid(ol_ref[...])        # overlap
    o_ref[:, g + 1:g + 2] = jax.nn.sigmoid(sl_ref[...])    # saliency


def _final_head(bf_pad, ol_pad, sali_pad, *, tm):
    n_pad, gnn = bf_pad.shape
    return pl.pallas_call(
        _final_head_kernel,
        out_shape=jax.ShapeDtypeStruct((n_pad, gnn + 2), jnp.float32),
        grid=(n_pad // tm,),
        in_specs=[
            pl.BlockSpec((tm, gnn), lambda i: (i, 0)),
            pl.BlockSpec((tm, 1), lambda i: (i, 0)),
            pl.BlockSpec((tm, 1), lambda i: (i, 0)),
        ],
        out_specs=pl.BlockSpec((tm, gnn + 2), lambda i: (i, 0)),
        compiler_params=pltpu.CompilerParams(dimension_semantics=("parallel",)),
    )(bf_pad, ol_pad, sali_pad)


# --------------------------------------------------------------------------
# Forward
# --------------------------------------------------------------------------

def _pad_rows(x, m):
    pad = (-x.shape[0]) % m
    if pad:
        x = jnp.pad(x, ((0, pad), (0, 0)))
    return x


def predator_forward(params, points, feats, len_src, *, tm=256, tq=256, tk=256):
    del points  # TODO(synk): real KPConv encoder consumes point/neighbor stacks.
    n = feats.shape[0]
    len_tgt = n - len_src

    # --- fused per-point chain (enc -> bottleneck -> pro_gnn -> ol + L2 norm) --
    feats_pad = _pad_rows(feats, tm)
    bf_pad, bfn_pad, ol_pad = _pointwise_chain(feats_pad, params, tm=tm)

    bfn = bfn_pad[:n]
    ol = ol_pad[:n]
    fs_n, ft_n = bfn[:len_src], bfn[len_src:]
    ols, olt = ol[:len_src], ol[len_src:]

    inv_temp = (1.0 / (jnp.exp(params["epsilon"]) + 0.03)).reshape(1)
    inv_temp = inv_temp.astype(jnp.float32)

    # --- saliency scores (flash-style; never builds the (Ns, Nt) matrix) -------
    ss = _saliency_scores(
        _pad_rows(fs_n, tq), _pad_rows(ft_n, tk),
        _pad_rows(olt, tk).T,                       # (1, Nt_pad) lane-dense scores
        jnp.array([len_tgt], jnp.int32), inv_temp, tq=tq, tk=tk)[:len_src]
    st = _saliency_scores(                          # replaces ip.T softmax
        _pad_rows(ft_n, tq), _pad_rows(fs_n, tk),
        _pad_rows(ols, tk).T,
        jnp.array([len_src], jnp.int32), inv_temp, tq=tq, tk=tk)[:len_tgt]
    sali = jnp.concatenate([ss, st], axis=0)        # (N, 1)

    # --- decoder ---------------------------------------------------------------
    # TODO(synk): KPConv decoder / upsample blocks (and skip concats) -> identity.

    # --- final head ------------------------------------------------------------
    out_pad = _final_head(bf_pad, ol_pad, _pad_rows(sali, tm), tm=tm)
    return out_pad[:n]


# --------------------------------------------------------------------------
# Pure-JAX reference (for correctness check in main)
# --------------------------------------------------------------------------

def _ref_forward(params, feats, len_src):
    h = feats @ params["enc_w"] + params["enc_b"]
    h = h @ params["bneck_w"] + params["bneck_b"]
    bf = h @ params["pro_w"] + params["pro_b"]
    ol = jnp.sum(bf * params["ol_w_row"], axis=1, keepdims=True) + params["ol_b"]
    temp = jnp.exp(params["epsilon"]) + 0.03
    nrm = jnp.linalg.norm(bf, axis=1, keepdims=True)
    bfn = bf / (nrm + 1e-8)
    bfn = bfn.astype(jnp.bfloat16).astype(jnp.float32)   # match kernel's MXU dtype
    fs, ft = bfn[:len_src], bfn[len_src:]
    ols, olt = ol[:len_src], ol[len_src:]
    ip = fs @ ft.T
    ss = jax.nn.softmax(ip / temp, axis=1) @ olt
    st = jax.nn.softmax(ip.T / temp, axis=1) @ ols
    sali = jnp.concatenate([ss, st], axis=0)
    return jnp.concatenate(
        [bf / jnp.maximum(nrm, 1e-12), jax.nn.sigmoid(ol), jax.nn.sigmoid(sali)],
        axis=1)


# --------------------------------------------------------------------------
# Main
# --------------------------------------------------------------------------

if __name__ == "__main__":
    # Small synthetic config (multi-tile grids + key masking are exercised).
    N_SRC, N_TGT = 192, 160
    N = N_SRC + N_TGT
    IN_FEATS = 4          # config.in_feats_dim
    ENC_DIM = 64          # final encoder out_dim (stand-in)
    GNN_DIM = 32          # config.gnn_feats_dim

    key = jax.random.PRNGKey(0)
    ks = jax.random.split(key, 10)

    def init_lin(kw, kb, cin, cout):
        w = jax.random.normal(kw, (cin, cout), jnp.float32) / jnp.sqrt(cin)
        b = 0.01 * jax.random.normal(kb, (1, cout), jnp.float32)
        return w, b

    enc_w, enc_b = init_lin(ks[0], ks[1], IN_FEATS, ENC_DIM)
    bneck_w, bneck_b = init_lin(ks[2], ks[3], ENC_DIM, GNN_DIM)
    pro_w, pro_b = init_lin(ks[4], ks[5], GNN_DIM, GNN_DIM)
    ol_w, ol_b = init_lin(ks[6], ks[7], GNN_DIM, 1)

    params = {
        "enc_w": enc_w, "enc_b": enc_b,
        "bneck_w": bneck_w, "bneck_b": bneck_b,
        "pro_w": pro_w, "pro_b": pro_b,
        "ol_w_row": ol_w.T,          # (1, GNN): row layout for the VPU reduction
        "ol_b": ol_b,                # (1, 1)
        "epsilon": jnp.array(-5.0, jnp.float32),
    }

    points = jax.random.normal(ks[8], (N, 3), jnp.float32)
    feats = jax.random.normal(ks[9], (N, IN_FEATS), jnp.float32)

    @jax.jit
    def fwd(params, points, feats):
        return predator_forward(params, points, feats, N_SRC,
                                tm=128, tq=128, tk=128)

    out = jax.block_until_ready(fwd(params, points, feats))

    assert out.shape == (N, GNN_DIM + 2), out.shape
    assert bool(jnp.all(jnp.isfinite(out)))

    # Structural sanity: unit-norm features, probabilities in (0, 1).
    rown = jnp.linalg.norm(out[:, :GNN_DIM], axis=1)
    assert float(jnp.max(jnp.abs(rown - 1.0))) < 1e-2
    assert float(jnp.min(out[:, GNN_DIM:])) > 0.0
    assert float(jnp.max(out[:, GNN_DIM:])) < 1.0

    # Reference comparison.  The saliency column goes through a bf16 MXU matmul
    # amplified by ~1/temperature (~27x), so it gets a looser tolerance.
    ref = _ref_forward(params, feats, N_SRC)
    err_main = float(jnp.max(jnp.abs(out[:, :GNN_DIM + 1] - ref[:, :GNN_DIM + 1])))
    err_sali = float(jnp.max(jnp.abs(out[:, -1] - ref[:, -1])))
    assert err_main < 0.05, ("feats/overlap mismatch", err_main)
    assert err_sali < 0.25, ("saliency mismatch", err_sali)

    print("KERNEL_OK")
</pallas_src>

<mosaic_0001>
module attributes {stable_mosaic.version = 11 : i64} {
  func.func @_pointwise_kernel(%arg0: i32, %arg1: memref<128x4xf32, #tpu.memory_space<vmem>>, %arg2: memref<4x64xf32, #tpu.memory_space<vmem>>, %arg3: memref<1x64xf32, #tpu.memory_space<vmem>>, %arg4: memref<64x32xf32, #tpu.memory_space<vmem>>, %arg5: memref<1x32xf32, #tpu.memory_space<vmem>>, %arg6: memref<32x32xf32, #tpu.memory_space<vmem>>, %arg7: memref<1x32xf32, #tpu.memory_space<vmem>>, %arg8: memref<1x32xf32, #tpu.memory_space<vmem>>, %arg9: memref<1x1xf32, #tpu.memory_space<vmem>>, %arg10: memref<128x32xf32, #tpu.memory_space<vmem>>, %arg11: memref<128x32xbf16, #tpu.memory_space<vmem>>, %arg12: memref<128x1xf32, #tpu.memory_space<vmem>>) attributes {dimension_semantics = [#tpu.dimension_semantics<parallel>], iteration_bounds = array<i64: 3>, scalar_prefetch = 0 : i64, scratch_operands = 0 : i64, tpu.core_type = #tpu.core_type<tc>, window_params = [{transform_indices = @transform_0, window_bounds = array<i64: 128, 4>}, {pipeline_mode = #tpu.pipeline_mode<synchronous>, transform_indices = @transform_1, window_bounds = array<i64: 4, 64>}, {pipeline_mode = #tpu.pipeline_mode<synchronous>, transform_indices = @transform_2, window_bounds = array<i64: 1, 64>}, {pipeline_mode = #tpu.pipeline_mode<synchronous>, transform_indices = @transform_3, window_bounds = array<i64: 64, 32>}, {pipeline_mode = #tpu.pipeline_mode<synchronous>, transform_indices = @transform_4, window_bounds = array<i64: 1, 32>}, {pipeline_mode = #tpu.pipeline_mode<synchronous>, transform_indices = @transform_5, window_bounds = array<i64: 32, 32>}, {pipeline_mode = #tpu.pipeline_mode<synchronous>, transform_indices = @transform_6, window_bounds = array<i64: 1, 32>}, {pipeline_mode = #tpu.pipeline_mode<synchronous>, transform_indices = @transform_7, window_bounds = array<i64: 1, 32>}, {pipeline_mode = #tpu.pipeline_mode<synchronous>, transform_indices = @transform_8, window_bounds = array<i64: 1, 1>}, {transform_indices = @transform_9, window_bounds = array<i64: 128, 32>}, {transform_indices = @transform_10, window_bounds = array<i64: 128, 32>}, {transform_indices = @transform_11, window_bounds = array<i64: 128, 1>}]} {
    %c0 = arith.constant 0 : index
    %c0_0 = arith.constant 0 : index
    %0 = vector.load %arg1[%c0, %c0_0] : memref<128x4xf32, #tpu.memory_space<vmem>>, vector<128x4xf32>
    %c0_1 = arith.constant 0 : index
    %c0_2 = arith.constant 0 : index
    %1 = vector.load %arg2[%c0_1, %c0_2] : memref<4x64xf32, #tpu.memory_space<vmem>>, vector<4x64xf32>
    %cst = arith.constant dense<0.000000e+00> : vector<128x64xf32>
    %2 = tpu.matmul %0, %1, %cst {dimension_numbers = #tpu.dot_dimension_numbers<[1], [0], [0], [1], [0, 0, 1, 1], [], []>} : vector<128x4xf32>, vector<4x64xf32>, vector<128x64xf32> -> vector<128x64xf32>
    %c0_3 = arith.constant 0 : index
    %c0_4 = arith.constant 0 : index
    %3 = vector.load %arg3[%c0_3, %c0_4] : memref<1x64xf32, #tpu.memory_space<vmem>>, vector<1x64xf32>
    %4 = vector.broadcast %3 : vector<1x64xf32> to vector<128x64xf32>
    %5 = arith.addf %2, %4 : vector<128x64xf32>
    %c0_5 = arith.constant 0 : index
    %c0_6 = arith.constant 0 : index
    %6 = vector.load %arg4[%c0_5, %c0_6] : memref<64x32xf32, #tpu.memory_space<vmem>>, vector<64x32xf32>
    %cst_7 = arith.constant dense<0.000000e+00> : vector<128x32xf32>
    %7 = tpu.matmul %5, %6, %cst_7 {dimension_numbers = #tpu.dot_dimension_numbers<[1], [0], [0], [1], [0, 0, 1, 1], [], []>} : vector<128x64xf32>, vector<64x32xf32>, vector<128x32xf32> -> vector<128x32xf32>
    %c0_8 = arith.constant 0 : index
    %c0_9 = arith.constant 0 : index
    %8 = vector.load %arg5[%c0_8, %c0_9] : memref<1x32xf32, #tpu.memory_space<vmem>>, vector<1x32xf32>
    %9 = vector.broadcast %8 : vector<1x32xf32> to vector<128x32xf32>
    %10 = arith.addf %7, %9 : vector<128x32xf32>
    %c0_10 = arith.constant 0 : index
    %c0_11 = arith.constant 0 : index
    %11 = vector.load %arg6[%c0_10, %c0_11] : memref<32x32xf32, #tpu.memory_space<vmem>>, vector<32x32xf32>
    %cst_12 = arith.constant dense<0.000000e+00> : vector<128x32xf32>
    %12 = tpu.matmul %10, %11, %cst_12 {dimension_numbers = #tpu.dot_dimension_numbers<[1], [0], [0], [1], [0, 0, 1, 1], [], []>} : vector<128x32xf32>, vector<32x32xf32>, vector<128x32xf32> -> vector<128x32xf32>
    %c0_13 = arith.constant 0 : index
    %c0_14 = arith.constant 0 : index
    %13 = vector.load %arg7[%c0_13, %c0_14] : memref<1x32xf32, #tpu.memory_space<vmem>>, vector<1x32xf32>
    %14 = vector.broadcast %13 : vector<1x32xf32> to vector<128x32xf32>
    %15 = arith.addf %12, %14 : vector<128x32xf32>
    %c0_15 = arith.constant 0 : index
    %c0_16 = arith.constant 0 : index
    %16 = vector.load %arg8[%c0_15, %c0_16] : memref<1x32xf32, #tpu.memory_space<vmem>>, vector<1x32xf32>
    %17 = vector.broadcast %16 : vector<1x32xf32> to vector<128x32xf32>
    %18 = arith.mulf %15, %17 : vector<128x32xf32>
    %cst_17 = arith.constant dense<0.000000e+00> : vector<128xf32>
    %19 = vector.multi_reduction <add>, %18, %cst_17 [1] : vector<128x32xf32> to vector<128xf32>
    %20 = vector.shape_cast %19 : vector<128xf32> to vector<128x1xf32>
    %c0_18 = arith.constant 0 : index
    %c0_19 = arith.constant 0 : index
    %21 = vector.load %arg9[%c0_18, %c0_19] : memref<1x1xf32, #tpu.memory_space<vmem>>, vector<1x1xf32>
    %22 = vector.broadcast %21 : vector<1x1xf32> to vector<128x1xf32>
    %23 = arith.addf %20, %22 : vector<128x1xf32>
    %24 = arith.mulf %15, %15 : vector<128x32xf32>
    %cst_20 = arith.constant dense<0.000000e+00> : vector<128xf32>
    %25 = vector.multi_reduction <add>, %24, %cst_20 [1] : vector<128x32xf32> to vector<128xf32>
    %26 = vector.shape_cast %25 : vector<128xf32> to vector<128x1xf32>
    %27 = math.sqrt %26 : vector<128x1xf32>
    %c0_21 = arith.constant 0 : index
    %c0_22 = arith.constant 0 : index
    %28 = vector.load %arg10[%c0_21, %c0_22] : memref<128x32xf32, #tpu.memory_space<vmem>>, vector<128x32xf32>
    tpu.vector_store %arg10[%c0_21, %c0_22], %15 {strides = array<i32>} : memref<128x32xf32, #tpu.memory_space<vmem>>, vector<128x32xf32>,
    %cst_23 = arith.constant 9.99999993E-9 : f32
    %29 = vector.broadcast %cst_23 : f32 to vector<128x1xf32>
    %30 = arith.addf %27, %29 : vector<128x1xf32>
    %31 = vector.broadcast %30 : vector<128x1xf32> to vector<128x32xf32>
    %32 = arith.divf %15, %31 : vector<128x32xf32>
    %33 = arith.truncf %32 : vector<128x32xf32> to vector<128x32xbf16>
    %c0_24 = arith.constant 0 : index
    %c0_25 = arith.constant 0 : index
    %34 = vector.load %arg11[%c0_24, %c0_25] : memref<128x32xbf16, #tpu.memory_space<vmem>>, vector<128x32xbf16>
    tpu.vector_store %arg11[%c0_24, %c0_25], %33 {strides = array<i32>} : memref<128x32xbf16, #tpu.memory_space<vmem>>, vector<128x32xbf16>,
    %c0_26 = arith.constant 0 : index
    %c0_27 = arith.constant 0 : index
    %35 = vector.load %arg12[%c0_26, %c0_27] : memref<128x1xf32, #tpu.memory_space<vmem>>, vector<128x1xf32>
    tpu.vector_store %arg12[%c0_26, %c0_27], %23 {strides = array<i32>} : memref<128x1xf32, #tpu.memory_space<vmem>>, vector<128x1xf32>,
    return
  }
  func.func @transform_0(%arg0: i32) -> (i32, i32) {
    %c0_i32 = arith.constant 0 : i32
    %c0_i32_0 = arith.constant 0 : i32
    return %arg0, %c0_i32 : i32, i32
  }
  func.func @transform_1(%arg0: i32) -> (i32, i32) {
    %c0_i32 = arith.constant 0 : i32
    %c0_i32_0 = arith.constant 0 : i32
    %c0_i32_1 = arith.constant 0 : i32
    return %c0_i32, %c0_i32_0 : i32, i32
  }
  func.func @transform_2(%arg0: i32) -> (i32, i32) {
    %c0_i32 = arith.constant 0 : i32
    %c0_i32_0 = arith.constant 0 : i32
    %c0_i32_1 = arith.constant 0 : i32
    return %c0_i32, %c0_i32_0 : i32, i32
  }
  func.func @transform_3(%arg0: i32) -> (i32, i32) {
    %c0_i32 = arith.constant 0 : i32
    %c0_i32_0 = arith.constant 0 : i32
    %c0_i32_1 = arith.constant 0 : i32
    return %c0_i32, %c0_i32_0 : i32, i32
  }
  func.func @transform_4(%arg0: i32) -> (i32, i32) {
    %c0_i32 = arith.constant 0 : i32
    %c0_i32_0 = arith.constant 0 : i32
    %c0_i32_1 = arith.constant 0 : i32
    return %c0_i32, %c0_i32_0 : i32, i32
  }
  func.func @transform_5(%arg0: i32) -> (i32, i32) {
    %c0_i32 = arith.constant 0 : i32
    %c0_i32_0 = arith.constant 0 : i32
    %c0_i32_1 = arith.constant 0 : i32
    return %c0_i32, %c0_i32_0 : i32, i32
  }
  func.func @transform_6(%arg0: i32) -> (i32, i32) {
    %c0_i32 = arith.constant 0 : i32
    %c0_i32_0 = arith.constant 0 : i32
    %c0_i32_1 = arith.constant 0 : i32
    return %c0_i32, %c0_i32_0 : i32, i32
  }
  func.func @transform_7(%arg0: i32) -> (i32, i32) {
    %c0_i32 = arith.constant 0 : i32
    %c0_i32_0 = arith.constant 0 : i32
    %c0_i32_1 = arith.constant 0 : i32
    return %c0_i32, %c0_i32_0 : i32, i32
  }
  func.func @transform_8(%arg0: i32) -> (i32, i32) {
    %c0_i32 = arith.constant 0 : i32
    %c0_i32_0 = arith.constant 0 : i32
    %c0_i32_1 = arith.constant 0 : i32
    return %c0_i32, %c0_i32_0 : i32, i32
  }
  func.func @transform_9(%arg0: i32) -> (i32, i32) {
    %c0_i32 = arith.constant 0 : i32
    %c0_i32_0 = arith.constant 0 : i32
    return %arg0, %c0_i32 : i32, i32
  }
  func.func @transform_10(%arg0: i32) -> (i32, i32) {
    %c0_i32 = arith.constant 0 : i32
    %c0_i32_0 = arith.constant 0 : i32
    return %arg0, %c0_i32 : i32, i32
  }
  func.func @transform_11(%arg0: i32) -> (i32, i32) {
    %c0_i32 = arith.constant 0 : i32
    %c0_i32_0 = arith.constant 0 : i32
    return %arg0, %c0_i32 : i32, i32
  }
}

module attributes {stable_mosaic.version = 11 : i64} {
  func.func @_sali_kernel(%arg0: i32, %arg1: i32, %arg2: memref<1xi32, #tpu.memory_space<smem>>, %arg3: memref<1xf32, #tpu.memory_space<smem>>, %arg4: memref<128x32xbf16, #tpu.memory_space<vmem>>, %arg5: memref<128x32xbf16, #tpu.memory_space<vmem>>, %arg6: memref<1x128xf32, #tpu.memory_space<vmem>>, %arg7: memref<128x1xf32, #tpu.memory_space<vmem>>, %arg8: memref<128x1xf32, #tpu.memory_space<vmem>>, %arg9: memref<128x1xf32, #tpu.memory_space<vmem>>, %arg10: memref<128x1xf32, #tpu.memory_space<vmem>>) attributes {dimension_semantics = [#tpu.dimension_semantics<parallel>, #tpu.dimension_semantics<arbitrary>], iteration_bounds = array<i64: 2, 2>, scalar_prefetch = 2 : i64, scratch_operands = 3 : i64, tpu.core_type = #tpu.core_type<tc>, window_params = [{transform_indices = @transform_0, window_bounds = array<i64: 128, 32>}, {transform_indices = @transform_1, window_bounds = array<i64: 128, 32>}, {transform_indices = @transform_2, window_bounds = array<i64: 1, 128>}, {transform_indices = @transform_3, window_bounds = array<i64: 128, 1>}]} {
    %c0_i32 = arith.constant 0 : i32
    %0 = arith.cmpi eq, %arg1, %c0_i32 : i32
    %1 = arith.extui %0 : i1 to i32
    %c0_i32_0 = arith.constant 0 : i32
    %2 = arith.cmpi ne, %1, %c0_i32_0 : i32
    scf.if %2 {
      %cst_25 = arith.constant -1.000000e+30 : f32
      %46 = vector.broadcast %cst_25 : f32 to vector<128x1xf32>
      %c0_26 = arith.constant 0 : index
      %c0_27 = arith.constant 0 : index
      %47 = vector.load %arg8[%c0_26, %c0_27] : memref<128x1xf32, #tpu.memory_space<vmem>>, vector<128x1xf32>
      tpu.vector_store %arg8[%c0_26, %c0_27], %46 {strides = array<i32>} : memref<128x1xf32, #tpu.memory_space<vmem>>, vector<128x1xf32>,
      %cst_28 = arith.constant 0.000000e+00 : f32
      %48 = vector.broadcast %cst_28 : f32 to vector<128x1xf32>
      %c0_29 = arith.constant 0 : index
      %c0_30 = arith.constant 0 : index
      %49 = vector.load %arg9[%c0_29, %c0_30] : memref<128x1xf32, #tpu.memory_space<vmem>>, vector<128x1xf32>
      tpu.vector_store %arg9[%c0_29, %c0_30], %48 {strides = array<i32>} : memref<128x1xf32, #tpu.memory_space<vmem>>, vector<128x1xf32>,
      %cst_31 = arith.constant 0.000000e+00 : f32
      %50 = vector.broadcast %cst_31 : f32 to vector<128x1xf32>
      %c0_32 = arith.constant 0 : index
      %c0_33 = arith.constant 0 : index
      %51 = vector.load %arg10[%c0_32, %c0_33] : memref<128x1xf32, #tpu.memory_space<vmem>>, vector<128x1xf32>
      tpu.vector_store %arg10[%c0_32, %c0_33], %50 {strides = array<i32>} : memref<128x1xf32, #tpu.memory_space<vmem>>, vector<128x1xf32>,
    } else {
    }
    %c0 = arith.constant 0 : index
    %c0_1 = arith.constant 0 : index
    %3 = vector.load %arg4[%c0, %c0_1] : memref<128x32xbf16, #tpu.memory_space<vmem>>, vector<128x32xbf16>
    %c0_2 = arith.constant 0 : index
    %c0_3 = arith.constant 0 : index
    %4 = vector.load %arg5[%c0_2, %c0_3] : memref<128x32xbf16, #tpu.memory_space<vmem>>, vector<128x32xbf16>
    %cst = arith.constant dense<0.000000e+00> : vector<128x128xf32>
    %5 = tpu.matmul %3, %4, %cst {dimension_numbers = #tpu.dot_dimension_numbers<[1], [1], [0], [0], [0, 0, 1, 0], [], []>} : vector<128x32xbf16>, vector<128x32xbf16>, vector<128x128xf32> -> vector<128x128xf32>
    %c0_4 = arith.constant 0 : index
    %6 = memref.load %arg3[%c0_4] : memref<1xf32, #tpu.memory_space<smem>>
    %7 = vector.broadcast %6 : f32 to vector<128x128xf32>
    %8 = arith.mulf %5, %7 : vector<128x128xf32>
    %9 = tpu.iota {dimensions = array<i32: 1>} : vector<128x128xi32>
    %c128_i32 = arith.constant 128 : i32
    %10 = arith.muli %arg1, %c128_i32 : i32
    %11 = vector.broadcast %10 : i32 to vector<128x128xi32>
    %12 = arith.addi %9, %11 : vector<128x128xi32>
    %c0_5 = arith.constant 0 : index
    %13 = memref.load %arg2[%c0_5] : memref<1xi32, #tpu.memory_space<smem>>
    %14 = vector.broadcast %13 : i32 to vector<128x128xi32>
    %15 = arith.cmpi slt, %12, %14 : vector<128x128xi32>
    %cst_6 = arith.constant -1.000000e+30 : f32
    %16 = vector.broadcast %cst_6 : f32 to vector<128x128xf32>
    %17 = arith.select %15, %8, %16 : vector<128x128xi1>, vector<128x128xf32>
    %c0_7 = arith.constant 0 : index
    %c0_8 = arith.constant 0 : index
    %18 = vector.load %arg8[%c0_7, %c0_8] : memref<128x1xf32, #tpu.memory_space<vmem>>, vector<128x1xf32>
    %cst_9 = arith.constant dense<0xFF800000> : vector<128xf32>
    %19 = vector.multi_reduction <maximumf>, %17, %cst_9 [1] : vector<128x128xf32> to vector<128xf32>
    %20 = vector.shape_cast %19 : vector<128xf32> to vector<128x1xf32>
    %21 = arith.maximumf %18, %20 : vector<128x1xf32>
    %22 = arith.subf %18, %21 : vector<128x1xf32>
    %23 = math.exp %22 : vector<128x1xf32>
    %24 = vector.broadcast %21 : vector<128x1xf32> to vector<128x128xf32>
    %25 = arith.subf %17, %24 : vector<128x128xf32>
    %26 = math.exp %25 : vector<128x128xf32>
    %c0_10 = arith.constant 0 : index
    %c0_11 = arith.constant 0 : index
    %27 = vector.load %arg9[%c0_10, %c0_11] : memref<128x1xf32, #tpu.memory_space<vmem>>, vector<128x1xf32>
    %28 = arith.mulf %23, %27 : vector<128x1xf32>
    %cst_12 = arith.constant dense<0.000000e+00> : vector<128xf32>
    %29 = vector.multi_reduction <add>, %26, %cst_12 [1] : vector<128x128xf32> to vector<128xf32>
    %30 = vector.shape_cast %29 : vector<128xf32> to vector<128x1xf32>
    %31 = arith.addf %28, %30 : vector<128x1xf32>
    %c0_13 = arith.constant 0 : index
    %c0_14 = arith.constant 0 : index
    %32 = vector.load %arg9[%c0_13, %c0_14] : memref<128x1xf32, #tpu.memory_space<vmem>>, vector<128x1xf32>
    tpu.vector_store %arg9[%c0_13, %c0_14], %31 {strides = array<i32>} : memref<128x1xf32, #tpu.memory_space<vmem>>, vector<128x1xf32>,
    %c0_15 = arith.constant 0 : index
    %c0_16 = arith.constant 0 : index
    %33 = vector.load %arg10[%c0_15, %c0_16] : memref<128x1xf32, #tpu.memory_space<vmem>>, vector<128x1xf32>
    %34 = arith.mulf %23, %33 : vector<128x1xf32>
    %c0_17 = arith.constant 0 : index
    %c0_18 = arith.constant 0 : index
    %35 = vector.load %arg6[%c0_17, %c0_18] : memref<1x128xf32, #tpu.memory_space<vmem>>, vector<1x128xf32>
    %36 = vector.broadcast %35 : vector<1x128xf32> to vector<128x128xf32>
    %37 = arith.mulf %26, %36 : vector<128x128xf32>
    %cst_19 = arith.constant dense<0.000000e+00> : vector<128xf32>
    %38 = vector.multi_reduction <add>, %37, %cst_19 [1] : vector<128x128xf32> to vector<128xf32>
    %39 = vector.shape_cast %38 : vector<128xf32> to vector<128x1xf32>
    %40 = arith.addf %34, %39 : vector<128x1xf32>
    %c0_20 = arith.constant 0 : index
    %c0_21 = arith.constant 0 : index
    %41 = vector.load %arg10[%c0_20, %c0_21] : memref<128x1xf32, #tpu.memory_space<vmem>>, vector<128x1xf32>
    tpu.vector_store %arg10[%c0_20, %c0_21], %40 {strides = array<i32>} : memref<128x1xf32, #tpu.memory_space<vmem>>, vector<128x1xf32>,
    %c0_22 = arith.constant 0 : index
    %c0_23 = arith.constant 0 : index
    %42 = vector.load %arg8[%c0_22, %c0_23] : memref<128x1xf32, #tpu.memory_space<vmem>>, vector<128x1xf32>
    tpu.vector_store %arg8[%c0_22, %c0_23], %21 {strides = array<i32>} : memref<128x1xf32, #tpu.memory_space<vmem>>, vector<128x1xf32>,
    %c1_i32 = arith.constant 1 : i32
    %43 = arith.cmpi eq, %arg1, %c1_i32 : i32
    %44 = arith.extui %43 : i1 to i32
    %c0_i32_24 = arith.constant 0 : i32
    %45 = arith.cmpi ne, %44, %c0_i32_24 : i32
    scf.if %45 {
      %c0_25 = arith.constant 0 : index
      %c0_26 = arith.constant 0 : index
      %46 = vector.load %arg10[%c0_25, %c0_26] : memref<128x1xf32, #tpu.memory_space<vmem>>, vector<128x1xf32>
      %c0_27 = arith.constant 0 : index
      %c0_28 = arith.constant 0 : index
      %47 = vector.load %arg9[%c0_27, %c0_28] : memref<128x1xf32, #tpu.memory_space<vmem>>, vector<128x1xf32>
      %48 = tpu.reciprocal %47 {approx = true} : vector<128x1xf32> -> vector<128x1xf32>
      %49 = arith.mulf %46, %48 : vector<128x1xf32>
      %c0_29 = arith.constant 0 : index
      %c0_30 = arith.constant 0 : index
      %50 = vector.load %arg7[%c0_29, %c0_30] : memref<128x1xf32, #tpu.memory_space<vmem>>, vector<128x1xf32>
      tpu.vector_store %arg7[%c0_29, %c0_30], %49 {strides = array<i32>} : memref<128x1xf32, #tpu.memory_space<vmem>>, vector<128x1xf32>,
    } else {
    }
    return
  }
  func.func @transform_0(%arg0: i32, %arg1: i32, %arg2: memref<1xi32, #tpu.memory_space<smem>>, %arg3: memref<1xf32, #tpu.memory_space<smem>>) -> (i32, i32) {
    %c0_i32 = arith.constant 0 : i32
    %c0_i32_0 = arith.constant 0 : i32
    return %arg0, %c0_i32 : i32, i32
  }
  func.func @transform_1(%arg0: i32, %arg1: i32, %arg2: memref<1xi32, #tpu.memory_space<smem>>, %arg3: memref<1xf32, #tpu.memory_space<smem>>) -> (i32, i32) {
    %c0_i32 = arith.constant 0 : i32
    %c0_i32_0 = arith.constant 0 : i32
    return %arg1, %c0_i32 : i32, i32
  }
  func.func @transform_2(%arg0: i32, %arg1: i32, %arg2: memref<1xi32, #tpu.memory_space<smem>>, %arg3: memref<1xf32, #tpu.memory_space<smem>>) -> (i32, i32) {
    %c0_i32 = arith.constant 0 : i32
    %c0_i32_0 = arith.constant 0 : i32
    return %c0_i32, %arg1 : i32, i32
  }
  func.func @transform_3(%arg0: i32, %arg1: i32, %arg2: memref<1xi32, #tpu.memory_space<smem>>, %arg3: memref<1xf32, #tpu.memory_space<smem>>) -> (i32, i32) {
    %c0_i32 = arith.constant 0 : i32
    %c0_i32_0 = arith.constant 0 : i32
    return %arg0, %c0_i32 : i32, i32
  }
}

module attributes {stable_mosaic.version = 11 : i64} {
  func.func @_final_head_kernel(%arg0: i32, %arg1: memref<128x32xf32, #tpu.memory_space<vmem>>, %arg2: memref<128x1xf32, #tpu.memory_space<vmem>>, %arg3: memref<128x1xf32, #tpu.memory_space<vmem>>, %arg4: memref<128x34xf32, #tpu.memory_space<vmem>>) attributes {dimension_semantics = [#tpu.dimension_semantics<parallel>], iteration_bounds = array<i64: 3>, scalar_prefetch = 0 : i64, scratch_operands = 0 : i64, tpu.core_type = #tpu.core_type<tc>, window_params = [{transform_indices = @transform_0, window_bounds = array<i64: 128, 32>}, {transform_indices = @transform_1, window_bounds = array<i64: 128, 1>}, {transform_indices = @transform_2, window_bounds = array<i64: 128, 1>}, {transform_indices = @transform_3, window_bounds = array<i64: 128, 34>}]} {
    %c0 = arith.constant 0 : index
    %c0_0 = arith.constant 0 : index
    %0 = vector.load %arg1[%c0, %c0_0] : memref<128x32xf32, #tpu.memory_space<vmem>>, vector<128x32xf32>
    %1 = arith.mulf %0, %0 : vector<128x32xf32>
    %cst = arith.constant dense<0.000000e+00> : vector<128xf32>
    %2 = vector.multi_reduction <add>, %1, %cst [1] : vector<128x32xf32> to vector<128xf32>
    %3 = vector.shape_cast %2 : vector<128xf32> to vector<128x1xf32>
    %4 = math.sqrt %3 : vector<128x1xf32>
    %cst_1 = arith.constant 9.99999996E-13 : f32
    %5 = vector.broadcast %cst_1 : f32 to vector<128x1xf32>
    %6 = arith.maximumf %4, %5 : vector<128x1xf32>
    %7 = vector.broadcast %6 : vector<128x1xf32> to vector<128x32xf32>
    %8 = arith.divf %0, %7 : vector<128x32xf32>
    %c0_2 = arith.constant 0 : index
    %c0_3 = arith.constant 0 : index
    %9 = vector.load %arg4[%c0_2, %c0_3] : memref<128x34xf32, #tpu.memory_space<vmem>>, vector<128x32xf32>
    tpu.vector_store %arg4[%c0_2, %c0_3], %8 {strides = array<i32>} : memref<128x34xf32, #tpu.memory_space<vmem>>, vector<128x32xf32>,
    %c0_4 = arith.constant 0 : index
    %c0_5 = arith.constant 0 : index
    %10 = vector.load %arg2[%c0_4, %c0_5] : memref<128x1xf32, #tpu.memory_space<vmem>>, vector<128x1xf32>
    %11 = arith.negf %10 : vector<128x1xf32>
    %12 = math.exp %11 : vector<128x1xf32>
    %cst_6 = arith.constant 1.000000e+00 : f32
    %13 = vector.broadcast %cst_6 : f32 to vector<128x1xf32>
    %14 = arith.addf %13, %12 : vector<128x1xf32>
    %15 = arith.divf %13, %14 : vector<128x1xf32>
    %c0_7 = arith.constant 0 : index
    %c32 = arith.constant 32 : index
    %16 = vector.load %arg4[%c0_7, %c32] : memref<128x34xf32, #tpu.memory_space<vmem>>, vector<128x1xf32>
    tpu.vector_store %arg4[%c0_7, %c32], %15 {strides = array<i32>} : memref<128x34xf32, #tpu.memory_space<vmem>>, vector<128x1xf32>,
    %c0_8 = arith.constant 0 : index
    %c0_9 = arith.constant 0 : index
    %17 = vector.load %arg3[%c0_8, %c0_9] : memref<128x1xf32, #tpu.memory_space<vmem>>, vector<128x1xf32>
    %18 = arith.negf %17 : vector<128x1xf32>
    %19 = math.exp %18 : vector<128x1xf32>
    %cst_10 = arith.constant 1.000000e+00 : f32
    %20 = vector.broadcast %cst_10 : f32 to vector<128x1xf32>
    %21 = arith.addf %20, %19 : vector<128x1xf32>
    %22 = arith.divf %20, %21 : vector<128x1xf32>
    %c0_11 = arith.constant 0 : index
    %c33 = arith.constant 33 : index
    %23 = vector.load %arg4[%c0_11, %c33] : memref<128x34xf32, #tpu.memory_space<vmem>>, vector<128x1xf32>
    tpu.vector_store %arg4[%c0_11, %c33], %22 {strides = array<i32>} : memref<128x34xf32, #tpu.memory_space<vmem>>, vector<128x1xf32>,
    return
  }
  func.func @transform_0(%arg0: i32) -> (i32, i32) {
    %c0_i32 = arith.constant 0 : i32
    %c0_i32_0 = arith.constant 0 : i32
    return %arg0, %c0_i32 : i32, i32
  }
  func.func @transform_1(%arg0: i32) -> (i32, i32) {
    %c0_i32 = arith.constant 0 : i32
    %c0_i32_0 = arith.constant 0 : i32
    return %arg0, %c0_i32 : i32, i32
  }
  func.func @transform_2(%arg0: i32) -> (i32, i32) {
    %c0_i32 = arith.constant 0 : i32
    %c0_i32_0 = arith.constant 0 : i32
    return %arg0, %c0_i32 : i32, i32
  }
  func.func @transform_3(%arg0: i32) -> (i32, i32) {
    %c0_i32 = arith.constant 0 : i32
    %c0_i32_0 = arith.constant 0 : i32
    return %arg0, %c0_i32 : i32, i32
  }
}

</mosaic_0001>

<llo_original>
// kernel: fwd.4
$region0: #{fwd.4}
  #allocation0 [shape = 'u32[]', space=smem, size = 0x4, offset = 0x4, fixed_abs, tag = 'smem constant byte address 0x4 - core index']
  #allocation1 [shape = 'u32[72,128]{1,0:T(1,128)}', space=vmem, size = 0x9000, scoped, tag = 'internal scratch']
  #allocation2 [shape = 'f32[1,1]{1,0:T(1,128)S(1)}', space=vmem, size = 0x200, scoped, tag = 'scoped memory for fwd.4']
  %s0 = inlined_call_operand.vmem [shape: f32[384,4], index: 0, kind: input, shape index: {}]
  %s1 = inlined_call_operand.vmem [shape: f32[4,64], index: 1, kind: input, shape index: {}]
  %s2 = inlined_call_operand.vmem [shape: f32[1,64], index: 2, kind: input, shape index: {}]
  %s3 = inlined_call_operand.vmem [shape: f32[64,32], index: 3, kind: input, shape index: {}]
  %s4 = inlined_call_operand.vmem [shape: f32[1,32], index: 4, kind: input, shape index: {}]
  %s5 = inlined_call_operand.vmem [shape: f32[32,32], index: 5, kind: input, shape index: {}]
  %s6 = inlined_call_operand.vmem [shape: f32[1,32], index: 6, kind: input, shape index: {}]
  %s7 = inlined_call_operand.vmem [shape: f32[1,32], index: 7, kind: input, shape index: {}]
  %s8 = inlined_call_operand.<no memory space> [shape: f32[1,1], index: 8, kind: input, shape index: {}]
  %s9 = inlined_call_operand.vmem [shape: f32[384,32], index: 9, kind: output, shape index: {0}]
  %s10 = inlined_call_operand.vmem [shape: bf16[384,32], index: 10, kind: output, shape index: {1}]
  %s11 = inlined_call_operand.vmem [shape: f32[384,1], index: 11, kind: output, shape index: {2}]
  %12 = xla_tuple %s9, %s10, %s11
  %s13 = sld [smem:[#allocation0]]
  $region85: #{fwd.4} parent=0
    _
  %s15 = ssub.s32 1, %s13
  %s16 = scalar_select 0, %s15, %s13
  %v17 = vstv %s8
  %18 = vst [vmem:[#allocation2] sm:$0x1] %v17
  loop: start=0, step=1, limit=5
  $region2: #{fwd.4} parent=0 // loop_pre_header
    _
  $region3: #{fwd.4} parent=0 // loop_header
    %s20 = sphi 0, %s24
    %p21 = scmp.ge.s32.totalorder %s20, 5
    %s30 = sphi 0, %s32
    %s33 = sphi 0, %s30
    %s34 = sphi 0, %s33
    %s50 = sphi 0, %s34
    %s54 = sphi 0, %s54
    %s56 = sphi 0, %s54
    %s57 = sphi 0, %s56
    %s71 = sphi 0, %s57
    %s75 = sphi 0, %s75
    %s77 = sphi 0, %s75
    %s78 = sphi 0, %s77
    %s92 = sphi 0, %s78
    %s96 = sphi 0, %s96
    %s98 = sphi 0, %s96
    %s99 = sphi 0, %s98
    %s113 = sphi 0, %s99
    %s117 = sphi 0, %s117
    %s119 = sphi 0, %s117
    %s120 = sphi 0, %s119
    %s134 = sphi 0, %s120
    %s138 = sphi 0, %s138
    %s140 = sphi 0, %s138
    %s141 = sphi 0, %s140
    %s155 = sphi 0, %s141
    %s159 = sphi 0, %s159
    %s161 = sphi 0, %s159
    %s162 = sphi 0, %s161
    %s176 = sphi 0, %s162
    %s180 = sphi 0, %s180
    %s182 = sphi 0, %s180
    %s183 = sphi 0, %s182
    %s197 = sphi 0, %s183
    %s201 = sphi 0, %s201
    %s203 = sphi 0, %s201
    %s204 = sphi 0, %s203
    %s218 = sphi 0, %s204
    %s224 = sphi 0, %s226
    %s227 = sphi 0, %s224
    %s228 = sphi 0, %s227
    %s244 = sphi 0, %s228
    %s250 = sphi 0, %s252
    %s253 = sphi 0, %s250
    %s254 = sphi 0, %s253
    %s270 = sphi 0, %s254
    %s276 = sphi 0, %s278
    %s279 = sphi 0, %s276
    %s280 = sphi 0, %s279
    %s296 = sphi 0, %s280
  $region4: #{fwd.4} parent=0 // loop_header_branch
    %23 = sbr.rel (%p21) target = $region8
  $region5: #{fwd.4} parent=0 // loop_body
    %s25 = ssub.s32 %s20, 1
    %s26 = ssub.s32 %s20, 2
    %s27 = sadd.s32 %s20, 1
    %s28 = ssub.s32 %s20, %s27
    %p29 = scmp.eq.s32.totalorder %s28, 0
    %s31 = sadd.s32 %s30, 1
    %s32 = scalar_select %p29, %s30, %s31
    %p35 = pneg %p29
    %p36 = scmp.eq.s32.totalorder %s20, 2
    %p37 = por %p35, %p36
    %p38 = scmp.ne.s32.totalorder %s30, %s33
    %p39 = scmp.eq.s32.totalorder %s20, 0
    %p40 = por %p38, %p39
    %p41 = scmp.ne.s32.totalorder %s30, %s33
    %p42 = scmp.eq.s32.totalorder %s25, 2
    %p43 = por %p41, %p42
    %p44 = scmp.ne.s32.totalorder %s33, %s34
    %p45 = scmp.eq.s32.totalorder %s25, 0
    %p46 = por %p44, %p45
    %p47 = scmp.ne.s32.totalorder %s33, %s34
    %p48 = scmp.eq.s32.totalorder %s26, 2
    %p49 = por %p47, %p48
    %p51 = scmp.ne.s32.totalorder %s34, %s50
    %p52 = scmp.eq.s32.totalorder %s26, 0
    %p53 = por %p51, %p52
    %s55 = sadd.s32 %s54, 1
    %p58 = scmp.eq.s32.totalorder %s20, 2
    %p59 = scmp.ne.s32.totalorder %s54, %s56
    %p60 = scmp.eq.s32.totalorder %s20, 0
    %p61 = por %p59, %p60
    %p62 = scmp.ne.s32.totalorder %s54, %s56
    %p63 = scmp.eq.s32.totalorder %s25, 2
    %p64 = por %p62, %p63
    %p65 = scmp.ne.s32.totalorder %s56, %s57
    %p66 = scmp.eq.s32.totalorder %s25, 0
    %p67 = por %p65, %p66
    %p68 = scmp.ne.s32.totalorder %s56, %s57
    %p69 = scmp.eq.s32.totalorder %s26, 2
    %p70 = por %p68, %p69
    %p72 = scmp.ne.s32.totalorder %s57, %s71
    %p73 = scmp.eq.s32.totalorder %s26, 0
    %p74 = por %p72, %p73
    %s76 = sadd.s32 %s75, 1
    %p79 = scmp.eq.s32.totalorder %s20, 2
    %p80 = scmp.ne.s32.totalorder %s75, %s77
    %p81 = scmp.eq.s32.totalorder %s20, 0
    %p82 = por %p80, %p81
    %p83 = scmp.ne.s32.totalorder %s75, %s77
    %p84 = scmp.eq.s32.totalorder %s25, 2
    %p85 = por %p83, %p84
    %p86 = scmp.ne.s32.totalorder %s77, %s78
    %p87 = scmp.eq.s32.totalorder %s25, 0
    %p88 = por %p86, %p87
    %p89 = scmp.ne.s32.totalorder %s77, %s78
    %p90 = scmp.eq.s32.totalorder %s26, 2
    %p91 = por %p89, %p90
    %p93 = scmp.ne.s32.totalorder %s78, %s92
    %p94 = scmp.eq.s32.totalorder %s26, 0
    %p95 = por %p93, %p94
    %s97 = sadd.s32 %s96, 1
    %p100 = scmp.eq.s32.totalorder %s20, 2
    %p101 = scmp.ne.s32.totalorder %s96, %s98
    %p102 = scmp.eq.s32.totalorder %s20, 0
    %p103 = por %p101, %p102
    %p104 = scmp.ne.s32.totalorder %s96, %s98
    %p105 = scmp.eq.s32.totalorder %s25, 2
    %p106 = por %p104, %p105
    %p107 = scmp.ne.s32.totalorder %s98, %s99
    %p108 = scmp.eq.s32.totalorder %s25, 0
    %p109 = por %p107, %p108
    %p110 = scmp.ne.s32.totalorder %s98, %s99
    %p111 = scmp.eq.s32.totalorder %s26, 2
    %p112 = por %p110, %p111
    %p114 = scmp.ne.s32.totalorder %s99, %s113
    %p115 = scmp.eq.s32.totalorder %s26, 0
    %p116 = por %p114, %p115
    %s118 = sadd.s32 %s117, 1
    %p121 = scmp.eq.s32.totalorder %s20, 2
    %p122 = scmp.ne.s32.totalorder %s117, %s119
    %p123 = scmp.eq.s32.totalorder %s20, 0
    %p124 = por %p122, %p123
    %p125 = scmp.ne.s32.totalorder %s117, %s119
    %p126 = scmp.eq.s32.totalorder %s25, 2
    %p127 = por %p125, %p126
    %p128 = scmp.ne.s32.totalorder %s119, %s120
    %p129 = scmp.eq.s32.totalorder %s25, 0
    %p130 = por %p128, %p129
    %p131 = scmp.ne.s32.totalorder %s119, %s120
    %p132 = scmp.eq.s32.totalorder %s26, 2
    %p133 = por %p131, %p132
    %p135 = scmp.ne.s32.totalorder %s120, %s134
    %p136 = scmp.eq.s32.totalorder %s26, 0
    %p137 = por %p135, %p136
    %s139 = sadd.s32 %s138, 1
    %p142 = scmp.eq.s32.totalorder %s20, 2
    %p143 = scmp.ne.s32.totalorder %s138, %s140
    %p144 = scmp.eq.s32.totalorder %s20, 0
    %p145 = por %p143, %p144
    %p146 = scmp.ne.s32.totalorder %s138, %s140
    %p147 = scmp.eq.s32.totalorder %s25, 2
    %p148 = por %p146, %p147
    %p149 = scmp.ne.s32.totalorder %s140, %s141
    %p150 = scmp.eq.s32.totalorder %s25, 0
    %p151 = por %p149, %p150
    %p152 = scmp.ne.s32.totalorder %s140, %s141
    %p153 = scmp.eq.s32.totalorder %s26, 2
    %p154 = por %p152, %p153
    %p156 = scmp.ne.s32.totalorder %s141, %s155
    %p157 = scmp.eq.s32.totalorder %s26, 0
    %p158 = por %p156, %p157
    %s160 = sadd.s32 %s159, 1
    %p163 = scmp.eq.s32.totalorder %s20, 2
    %p164 = scmp.ne.s32.totalorder %s159, %s161
    %p165 = scmp.eq.s32.totalorder %s20, 0
    %p166 = por %p164, %p165
    %p167 = scmp.ne.s32.totalorder %s159, %s161
    %p168 = scmp.eq.s32.totalorder %s25, 2
    %p169 = por %p167, %p168
    %p170 = scmp.ne.s32.totalorder %s161, %s162
    %p171 = scmp.eq.s32.totalorder %s25, 0
    %p172 = por %p170, %p171
    %p173 = scmp.ne.s32.totalorder %s161, %s162
    %p174 = scmp.eq.s32.totalorder %s26, 2
    %p175 = por %p173, %p174
    %p177 = scmp.ne.s32.totalorder %s162, %s176
    %p178 = scmp.eq.s32.totalorder %s26, 0
    %p179 = por %p177, %p178
    %s181 = sadd.s32 %s180, 1
    %p184 = scmp.eq.s32.totalorder %s20, 2
    %p185 = scmp.ne.s32.totalorder %s180, %s182
    %p186 = scmp.eq.s32.totalorder %s20, 0
    %p187 = por %p185, %p186
    %p188 = scmp.ne.s32.totalorder %s180, %s182
    %p189 = scmp.eq.s32.totalorder %s25, 2
    %p190 = por %p188, %p189
    %p191 = scmp.ne.s32.totalorder %s182, %s183
    %p192 = scmp.eq.s32.totalorder %s25, 0
    %p193 = por %p191, %p192
    %p194 = scmp.ne.s32.totalorder %s182, %s183
    %p195 = scmp.eq.s32.totalorder %s26, 2
    %p196 = por %p194, %p195
    %p198 = scmp.ne.s32.totalorder %s183, %s197
    %p199 = scmp.eq.s32.totalorder %s26, 0
    %p200 = por %p198, %p199
    %s202 = sadd.s32 %s201, 1
    %p205 = scmp.eq.s32.totalorder %s20, 2
    %p206 = scmp.ne.s32.totalorder %s201, %s203
    %p207 = scmp.eq.s32.totalorder %s20, 0
    %p208 = por %p206, %p207
    %p209 = scmp.ne.s32.totalorder %s201, %s203
    %p210 = scmp.eq.s32.totalorder %s25, 2
    %p211 = por %p209, %p210
    %p212 = scmp.ne.s32.totalorder %s203, %s204
    %p213 = scmp.eq.s32.totalorder %s25, 0
    %p214 = por %p212, %p213
    %p215 = scmp.ne.s32.totalorder %s203, %s204
    %p216 = scmp.eq.s32.totalorder %s26, 2
    %p217 = por %p215, %p216
    %p219 = scmp.ne.s32.totalorder %s204, %s218
    %p220 = scmp.eq.s32.totalorder %s26, 0
    %p221 = por %p219, %p220
    %s222 = ssub.s32 %s20, %s27
    %p223 = scmp.eq.s32.totalorder %s222, 0
    %s225 = sadd.s32 %s224, 1
    %s226 = scalar_select %p223, %s224, %s225
    %p229 = pneg %p223
    %p230 = scmp.eq.s32.totalorder %s20, 2
    %p231 = por %p229, %p230
    %p232 = scmp.ne.s32.totalorder %s224, %s227
    %p233 = scmp.eq.s32.totalorder %s20, 0
    %p234 = por %p232, %p233
    %p235 = scmp.ne.s32.totalorder %s224, %s227
    %p236 = scmp.eq.s32.totalorder %s25, 2
    %p237 = por %p235, %p236
    %p238 = scmp.ne.s32.totalorder %s227, %s228
    %p239 = scmp.eq.s32.totalorder %s25, 0
    %p240 = por %p238, %p239
    %p241 = scmp.ne.s32.totalorder %s227, %s228
    %p242 = scmp.eq.s32.totalorder %s26, 2
    %p243 = por %p241, %p242
    %p245 = scmp.ne.s32.totalorder %s228, %s244
    %p246 = scmp.eq.s32.totalorder %s26, 0
    %p247 = por %p245, %p246
    %s248 = ssub.s32 %s20, %s27
    %p249 = scmp.eq.s32.totalorder %s248, 0
    %s251 = sadd.s32 %s250, 1
    %s252 = scalar_select %p249, %s250, %s251
    %p255 = pneg %p249
    %p256 = scmp.eq.s32.totalorder %s20, 2
    %p257 = por %p255, %p256
    %p258 = scmp.ne.s32.totalorder %s250, %s253
    %p259 = scmp.eq.s32.totalorder %s20, 0
    %p260 = por %p258, %p259
    %p261 = scmp.ne.s32.totalorder %s250, %s253
    %p262 = scmp.eq.s32.totalorder %s25, 2
    %p263 = por %p261, %p262
    %p264 = scmp.ne.s32.totalorder %s253, %s254
    %p265 = scmp.eq.s32.totalorder %s25, 0
    %p266 = por %p264, %p265
    %p267 = scmp.ne.s32.totalorder %s253, %s254
    %p268 = scmp.eq.s32.totalorder %s26, 2
    %p269 = por %p267, %p268
    %p271 = scmp.ne.s32.totalorder %s254, %s270
    %p272 = scmp.eq.s32.totalorder %s26, 0
    %p273 = por %p271, %p272
    %s274 = ssub.s32 %s20, %s27
    %p275 = scmp.eq.s32.totalorder %s274, 0
    %s277 = sadd.s32 %s276, 1
    %s278 = scalar_select %p275, %s276, %s277
    %p281 = pneg %p275
    %p282 = scmp.eq.s32.totalorder %s20, 2
    %p283 = por %p281, %p282
    %p284 = scmp.ne.s32.totalorder %s276, %s279
    %p285 = scmp.eq.s32.totalorder %s20, 0
    %p286 = por %p284, %p285
    %p287 = scmp.ne.s32.totalorder %s276, %s279
    %p288 = scmp.eq.s32.totalorder %s25, 2
    %p289 = por %p287, %p288
    %p290 = scmp.ne.s32.totalorder %s279, %s280
    %p291 = scmp.eq.s32.totalorder %s25, 0
    %p292 = por %p290, %p291
    %p293 = scmp.ne.s32.totalorder %s279, %s280
    %p294 = scmp.eq.s32.totalorder %s26, 2
    %p295 = por %p293, %p294
    %p297 = scmp.ne.s32.totalorder %s280, %s296
    %p298 = scmp.eq.s32.totalorder %s26, 0
    %p299 = por %p297, %p298
    %p300 = scmp.le.s32.totalorder 1, %s20
    %p301 = scmp.lt.s32.totalorder %s20, 4
    %p302 = pnand %p300, %p301
    %p303 = pneg %p302
    // Predicated region
    $region9: #{fwd.4} parent=5 // pred_check
      _
    $region10: #{fwd.4} parent=5 // pred_check_branch
      %305 = sbr.rel (%p302) target = $region12
    $region11: #{fwd.4} parent=5 // pred_region
      %s306 = ssub.s32 %s20, 1
      // Predicated region
      $region13: #{fwd.4} parent=11 // pred_check
        %p307 = pneg %p67
      $region14: #{fwd.4} parent=11 // pred_check_branch
        %309 = sbr.rel (%p307) target = $region16
      $region15: #{fwd.4} parent=11 // pred_region
        _
      $region16: #{fwd.4} parent=11 // pred_fallthru
        _
      // Predicated region
      $region17: #{fwd.4} parent=11 // pred_check
        %p310 = pneg %p88
      $region18: #{fwd.4} parent=11 // pred_check_branch
        %312 = sbr.rel (%p310) target = $region20
      $region19: #{fwd.4} parent=11 // pred_region
        _
      $region20: #{fwd.4} parent=11 // pred_fallthru
        _
      // Predicated region
      $region21: #{fwd.4} parent=11 // pred_check
        %p313 = pneg %p109
      $region22: #{fwd.4} parent=11 // pred_check_branch
        %315 = sbr.rel (%p313) target = $region24
      $region23: #{fwd.4} parent=11 // pred_region
        _
      $region24: #{fwd.4} parent=11 // pred_fallthru
        _
      // Predicated region
      $region25: #{fwd.4} parent=11 // pred_check
        %p316 = pneg %p130
      $region26: #{fwd.4} parent=11 // pred_check_branch
        %318 = sbr.rel (%p316) target = $region28
      $region27: #{fwd.4} parent=11 // pred_region
        _
      $region28: #{fwd.4} parent=11 // pred_fallthru
        _
      // Predicated region
      $region29: #{fwd.4} parent=11 // pred_check
        %p319 = pneg %p151
      $region30: #{fwd.4} parent=11 // pred_check_branch
        %321 = sbr.rel (%p319) target = $region32
      $region31: #{fwd.4} parent=11 // pred_region
        _
      $region32: #{fwd.4} parent=11 // pred_fallthru
        _
      // Predicated region
      $region33: #{fwd.4} parent=11 // pred_check
        %p322 = pneg %p172
      $region34: #{fwd.4} parent=11 // pred_check_branch
        %324 = sbr.rel (%p322) target = $region36
      $region35: #{fwd.4} parent=11 // pred_region
        _
      $region36: #{fwd.4} parent=11 // pred_fallthru
        _
      // Predicated region
      $region37: #{fwd.4} parent=11 // pred_check
        %p325 = pneg %p193
      $region38: #{fwd.4} parent=11 // pred_check_branch
        %327 = sbr.rel (%p325) target = $region40
      $region39: #{fwd.4} parent=11 // pred_region
        _
      $region40: #{fwd.4} parent=11 // pred_fallthru
        _
      // Predicated region
      $region41: #{fwd.4} parent=11 // pred_check
        %p328 = pneg %p214
      $region42: #{fwd.4} parent=11 // pred_check_branch
        %330 = sbr.rel (%p328) target = $region44
      $region43: #{fwd.4} parent=11 // pred_region
        _
      $region44: #{fwd.4} parent=11 // pred_fallthru
        _
    $region12: #{fwd.4} parent=5 // pred_fallthru
      _
    %p331 = scmp.lt.s32.totalorder %s20, 3
    // Predicated region
    $region45: #{fwd.4} parent=5 // pred_check
      %p332 = pneg %p331
    $region46: #{fwd.4} parent=5 // pred_check_branch
      %334 = sbr.rel (%p332) target = $region48
    $region47: #{fwd.4} parent=5 // pred_region
      // Predicated region
      $region49: #{fwd.4} parent=47 // pred_check
        %p335 = pneg %p40
      $region50: #{fwd.4} parent=47 // pred_check_branch
        %337 = sbr.rel (%p335) target = $region52
      $region51: #{fwd.4} parent=47 // pred_region
        %s338 = smul.u32 16, %s20
        %p339 = scmp.lt.s32.totalorder %s338, 47
        %s340 = scalar_select %p339, %s338, 47
        %s341 = smul.addr %s340, 8
        %s342 = scalar_lea.vmem %s0, %s341
        %s343 = smul.u32 16, %s20
      $region52: #{fwd.4} parent=47 // pred_fallthru
        _
    $region48: #{fwd.4} parent=5 // pred_fallthru
      _
    %p344 = scmp.le.s32.totalorder 1, %s20
    %p345 = scmp.lt.s32.totalorder %s20, 4
    %p346 = pnand %p344, %p345
    %p347 = pneg %p346
    // Predicated region
    $region53: #{fwd.4} parent=5 // pred_check
      _
    $region54: #{fwd.4} parent=5 // pred_check_branch
      %349 = sbr.rel (%p346) target = $region56
    $region55: #{fwd.4} parent=5 // pred_region
      %s350 = ssub.s32 %s20, 1
      %s351 = smul.u32 16, %s25
      %p352 = scmp.lt.s32.totalorder %s351, 47
      %s353 = scalar_select %p352, %s351, 47
      %s354 = smul.addr %s353, 8
      %s355 = scalar_lea.vmem %s0, %s354
      %p356 = pneg %p46
      %p357 = pneg %p43
      %p358 = pneg %p67
      %p359 = pneg %p64
      %p360 = pneg %p88
      %p361 = pneg %p85
      %p362 = pneg %p109
      %p363 = pneg %p106
      %p364 = pneg %p130
      %p365 = pneg %p127
      %p366 = pneg %p151
      %p367 = pneg %p148
      %p368 = pneg %p172
      %p369 = pneg %p169
      %p370 = pneg %p193
      %p371 = pneg %p190
      %p372 = pneg %p214
      %p373 = pneg %p211
      %p374 = pneg %p240
      %p375 = pneg %p237
      %s376 = smul.u32 16, %s25
      %p377 = scmp.lt.s32.totalorder %s376, 47
      %s378 = scalar_select %p377, %s376, 47
      %s379 = smul.addr %s378, 8
      %s380 = scalar_lea.vmem %s9, %s379
      %p381 = pneg %p266
      %p382 = pneg %p263
      %s383 = smul.u32 16, %s25
      %p384 = scmp.lt.s32.totalorder %s383, 47
      %s385 = scalar_select %p384, %s383, 47
      %s386 = smul.addr %s385, 4
      %s387 = scalar_lea.vmem %s10, %s386
      %p388 = pneg %p292
      %p389 = pneg %p289
      %s390 = smul.u32 16, %s25
      %p391 = scmp.lt.s32.totalorder %s390, 47
      %s392 = scalar_select %p391, %s390, 47
      %s393 = smul.addr %s392, 8
      %s394 = scalar_lea.vmem %s11, %s393
      %s395 = smul.u32 16, %s25
      %p396 = scmp.lt.s32.totalorder %s395, 47
      %s397 = scalar_select %p396, %s395, 47
      %s398 = smul.addr %s397, 8
      %s399 = scalar_lea.vmem %s0, %s398
      %s400 = smul.u32 16, %s25
      %s401 = smul.u32 16, %s25
      %p402 = scmp.lt.s32.totalorder %s401, 47
      %s403 = scalar_select %p402, %s401, 47
      %s404 = smul.addr %s403, 8
      %s405 = scalar_lea.vmem %s9, %s404
      %s406 = smul.u32 16, %s25
      %s407 = smul.u32 16, %s25
      %p408 = scmp.lt.s32.totalorder %s407, 47
      %s409 = scalar_select %p408, %s407, 47
      %s410 = smul.addr %s409, 4
      %s411 = scalar_lea.vmem %s10, %s410
      %s412 = smul.u32 16, %s25
      %s413 = smul.u32 16, %s25
      %p414 = scmp.lt.s32.totalorder %s413, 47
      %s415 = scalar_select %p414, %s413, 47
      %s416 = smul.addr %s415, 8
      %s417 = scalar_lea.vmem %s11, %s416
      %s418 = smul.u32 16, %s25
      %v419 = vld [vmem:[%s399] sm:$0xff]
      %v420 = vld [vmem:[%s399 + $0x8] sm:$0xff]
      %v421 = vld [vmem:[%s399 + $0x10] sm:$0xff]
      %v422 = vld [vmem:[%s399 + $0x18] sm:$0xff]
      %v423 = vld [vmem:[%s399 + $0x20] sm:$0xff]
      %v424 = vld [vmem:[%s399 + $0x28] sm:$0xff]
      %v425 = vld [vmem:[%s399 + $0x30] sm:$0xff]
      %v426 = vld [vmem:[%s399 + $0x38] sm:$0xff]
      %v427 = vld [vmem:[%s399 + $0x40] sm:$0xff]
      %v428 = vld [vmem:[%s399 + $0x48] sm:$0xff]
      %v429 = vld [vmem:[%s399 + $0x50] sm:$0xff]
      %v430 = vld [vmem:[%s399 + $0x58] sm:$0xff]
      %v431 = vld [vmem:[%s399 + $0x60] sm:$0xff]
      %v432 = vld [vmem:[%s399 + $0x68] sm:$0xff]
      %v433 = vld [vmem:[%s399 + $0x70] sm:$0xff]
      %v434 = vld [vmem:[%s399 + $0x78] sm:$0xff]
      %v435 = vld [vmem:[%s1] sm:$0xf]
      %v436 = vld [vmem:[%s2] sm:$0x1]
      %v438 = vperm.slane %v436, 0
      %vm440 = vcmask 31744
      %v442 = vsel %vm440, %v419, 0
      %v445 = vsel %vm440, %v420, 0
      %v448 = vsel %vm440, %v421, 0
      %v451 = vsel %vm440, %v422, 0
      %v454 = vsel %vm440, %v423, 0
      %v457 = vsel %vm440, %v424, 0
      %v460 = vsel %vm440, %v425, 0
      %v463 = vsel %vm440, %v426, 0
      %v466 = vsel %vm440, %v427, 0
      %v469 = vsel %vm440, %v428, 0
      %v472 = vsel %vm440, %v429, 0
      %v475 = vsel %vm440, %v430, 0
      %v478 = vsel %vm440, %v431, 0
      %v481 = vsel %vm440, %v432, 0
      %v484 = vsel %vm440, %v433, 0
      %v487 = vsel %vm440, %v434, 0
      %vm489 = vcmask 1043456
      %v491 = vsel %vm489, %v435, 0
      %493 = vmatpush.msra.mxu0 0.0
      %494 = vmatpush.msra.mxu0 0.0
      %495 = vmatpush.msra.mxu0 0.0
      %496 = vmatpush.msra.mxu0 0.0
      %497 = vmatpush.msra.mxu0 0.0
      %498 = vmatpush.msra.mxu0 0.0
      %499 = vmatpush.msra.mxu0 0.0
      %500 = vmatpush.msra.mxu0 0.0
      %501 = vmatpush.msra.mxu0 0.0
      %502 = vmatpush.msra.mxu0 0.0
      %503 = vmatpush.msra.mxu0 0.0
      %504 = vmatpush.msra.mxu0 0.0
      %505 = vmatpush.msra.mxu0 0.0
      %506 = vmatpush.msra.mxu0 0.0
      %507 = vmatpush.msra.mxu0 0.0
      %508 = vmatpush.msra.mxu0 %v491
      %509 = vmatmul.f32.gmra.mxu0 %v442
      %v510 = vpop.f32.mrf.mxu0
      %v511 = vadd.f32 %v438, %v510
      %512 = vmatmul.f32.gmra.mxu0 %v445
      %v513 = vpop.f32.mrf.mxu0
      %v514 = vadd.f32 %v438, %v513
      %515 = vmatmul.f32.gmra.mxu0 %v448
      %v516 = vpop.f32.mrf.mxu0
      %v517 = vadd.f32 %v438, %v516
      %518 = vmatmul.f32.gmra.mxu0 %v451
      %v519 = vpop.f32.mrf.mxu0
      %v520 = vadd.f32 %v438, %v519
      %521 = vmatmul.f32.gmra.mxu0 %v454
      %v522 = vpop.f32.mrf.mxu0
      %v523 = vadd.f32 %v438, %v522
      %524 = vmatmul.f32.gmra.mxu0 %v457
      %v525 = vpop.f32.mrf.mxu0
      %v526 = vadd.f32 %v438, %v525
      %527 = vmatmul.f32.gmra.mxu0 %v460
      %v528 = vpop.f32.mrf.mxu0
      %v529 = vadd.f32 %v438, %v528
      %530 = vmatmul.f32.gmra.mxu0 %v463
      %v531 = vpop.f32.mrf.mxu0
      %v532 = vadd.f32 %v438, %v531
      %533 = vmatmul.f32.gmra.mxu0 %v466
      %v534 = vpop.f32.mrf.mxu0
      %v535 = vadd.f32 %v438, %v534
      %536 = vmatmul.f32.gmra.mxu0 %v469
      %v537 = vpop.f32.mrf.mxu0
      %v538 = vadd.f32 %v438, %v537
      %539 = vmatmul.f32.gmra.mxu0 %v472
      %v540 = vpop.f32.mrf.mxu0
      %v541 = vadd.f32 %v438, %v540
      %542 = vmatmul.f32.gmra.mxu0 %v475
      %v543 = vpop.f32.mrf.mxu0
      %v544 = vadd.f32 %v438, %v543
      %545 = vmatmul.f32.gmra.mxu0 %v478
      %v546 = vpop.f32.mrf.mxu0
      %v547 = vadd.f32 %v438, %v546
      %548 = vmatmul.f32.gmra.mxu0 %v481
      %v549 = vpop.f32.mrf.mxu0
      %v550 = vadd.f32 %v438, %v549
      %551 = vmatmul.f32.gmra.mxu0 %v484
      %v552 = vpop.f32.mrf.mxu0
      %v553 = vadd.f32 %v438, %v552
      %554 = vmatmul.f32.gmra.mxu0 %v487
      %v555 = vpop.f32.mrf.mxu0
      %v556 = vadd.f32 %v438, %v555
      %557 = vdwg.mxu0
      %v558 = vld [vmem:[%s3] sm:$0xff]
      %v559 = vld [vmem:[%s3 + $0x8] sm:$0xff]
      %v560 = vld [vmem:[%s3 + $0x10] sm:$0xff]
      %v561 = vld [vmem:[%s3 + $0x18] sm:$0xff]
      %v562 = vld [vmem:[%s3 + $0x20] sm:$0xff]
      %v563 = vld [vmem:[%s3 + $0x28] sm:$0xff]
      %v564 = vld [vmem:[%s3 + $0x30] sm:$0xff]
      %v565 = vld [vmem:[%s3 + $0x38] sm:$0xff]
      %v566 = vld [vmem:[%s4] sm:$0x1]
      %v568 = vperm.slane %v566, 0
      %vm570 = vcmask 523264
      %v572 = vsel %vm570, %v511, 0
      %v575 = vsel %vm570, %v514, 0
      %v578 = vsel %vm570, %v517, 0
      %v581 = vsel %vm570, %v520, 0
      %v584 = vsel %vm570, %v523, 0
      %v587 = vsel %vm570, %v526, 0
      %v590 = vsel %vm570, %v529, 0
      %v593 = vsel %vm570, %v532, 0
      %v596 = vsel %vm570, %v535, 0
      %v599 = vsel %vm570, %v538, 0
      %v602 = vsel %vm570, %v541, 0
      %v605 = vsel %vm570, %v544, 0
      %v608 = vsel %vm570, %v547, 0
      %v611 = vsel %vm570, %v550, 0
      %v614 = vsel %vm570, %v553, 0
      %v617 = vsel %vm570, %v556, 0
      %619 = vmatpush.msra.mxu0 0.0
      %620 = vmatpush.msra.mxu0 0.0
      %621 = vmatpush.msra.mxu0 0.0
      %622 = vmatpush.msra.mxu0 0.0
      %623 = vmatpush.msra.mxu0 0.0
      %624 = vmatpush.msra.mxu0 0.0
      %625 = vmatpush.msra.mxu0 0.0
      %626 = vmatpush.msra.mxu0 0.0
      %627 = vmatpush.msra.mxu0 %v565
      %628 = vmatpush.msra.mxu0 %v564
      %629 = vmatpush.msra.mxu0 %v563
      %630 = vmatpush.msra.mxu0 %v562
      %631 = vmatpush.msra.mxu0 %v561
      %632 = vmatpush.msra.mxu0 %v560
      %633 = vmatpush.msra.mxu0 %v559
      %634 = vmatpush.msra.mxu0 %v558
      %635 = vmatmul.f32.gmra.mxu0 %v572
      %v636 = vpop.f32.mrf.mxu0
      %v637 = vadd.f32 %v568, %v636
      %638 = vmatmul.f32.gmra.mxu0 %v575
      %v639 = vpop.f32.mrf.mxu0
      %v640 = vadd.f32 %v568, %v639
      %641 = vmatmul.f32.gmra.mxu0 %v578
      %v642 = vpop.f32.mrf.mxu0
      %v643 = vadd.f32 %v568, %v642
      %644 = vmatmul.f32.gmra.mxu0 %v581
      %v645 = vpop.f32.mrf.mxu0
      %v646 = vadd.f32 %v568, %v645
      %647 = vmatmul.f32.gmra.mxu0 %v584
      %v648 = vpop.f32.mrf.mxu0
      %v649 = vadd.f32 %v568, %v648
      %650 = vmatmul.f32.gmra.mxu0 %v587
      %v651 = vpop.f32.mrf.mxu0
      %v652 = vadd.f32 %v568, %v651
      %653 = vmatmul.f32.gmra.mxu0 %v590
      %v654 = vpop.f32.mrf.mxu0
      %v655 = vadd.f32 %v568, %v654
      %656 = vmatmul.f32.gmra.mxu0 %v593
      %v657 = vpop.f32.mrf.mxu0
      %v658 = vadd.f32 %v568, %v657
      %659 = vmatmul.f32.gmra.mxu0 %v596
      %v660 = vpop.f32.mrf.mxu0
      %v661 = vadd.f32 %v568, %v660
      %662 = vmatmul.f32.gmra.mxu0 %v599
      %v663 = vpop.f32.mrf.mxu0
      %v664 = vadd.f32 %v568, %v663
      %665 = vmatmul.f32.gmra.mxu0 %v602
      %v666 = vpop.f32.mrf.mxu0
      %v667 = vadd.f32 %v568, %v666
      %668 = vmatmul.f32.gmra.mxu0 %v605
      %v669 = vpop.f32.mrf.mxu0
      %v670 = vadd.f32 %v568, %v669
      %671 = vmatmul.f32.gmra.mxu0 %v608
      %v672 = vpop.f32.mrf.mxu0
      %v673 = vadd.f32 %v568, %v672
      %674 = vmatmul.f32.gmra.mxu0 %v611
      %v675 = vpop.f32.mrf.mxu0
      %v676 = vadd.f32 %v568, %v675
      %677 = vmatmul.f32.gmra.mxu0 %v614
      %v678 = vpop.f32.mrf.mxu0
      %v679 = vadd.f32 %v568, %v678
      %680 = vmatmul.f32.gmra.mxu0 %v617
      %v681 = vpop.f32.mrf.mxu0
      %v682 = vadd.f32 %v568, %v681
      %683 = vdwg.mxu0
      %v684 = vld [vmem:[%s5] sm:$0xff]
      %v685 = vld [vmem:[%s5 + $0x8] sm:$0xff]
      %v686 = vld [vmem:[%s5 + $0x10] sm:$0xff]
      %v687 = vld [vmem:[%s5 + $0x18] sm:$0xff]
      %v688 = vld [vmem:[%s6] sm:$0x1]
      %v690 = vperm.slane %v688, 0
      %vm692 = vcmask 261120
      %v694 = vsel %vm692, %v637, 0
      %v697 = vsel %vm692, %v640, 0
      %v700 = vsel %vm692, %v643, 0
      %v703 = vsel %vm692, %v646, 0
      %v706 = vsel %vm692, %v649, 0
      %v709 = vsel %vm692, %v652, 0
      %v712 = vsel %vm692, %v655, 0
      %v715 = vsel %vm692, %v658, 0
      %v718 = vsel %vm692, %v661, 0
      %v721 = vsel %vm692, %v664, 0
      %v724 = vsel %vm692, %v667, 0
      %v727 = vsel %vm692, %v670, 0
      %v730 = vsel %vm692, %v673, 0
      %v733 = vsel %vm692, %v676, 0
      %v736 = vsel %vm692, %v679, 0
      %v739 = vsel %vm692, %v682, 0
      %741 = vmatpush.msra.mxu0 0.0
      %742 = vmatpush.msra.mxu0 0.0
      %743 = vmatpush.msra.mxu0 0.0
      %744 = vmatpush.msra.mxu0 0.0
      %745 = vmatpush.msra.mxu0 0.0
      %746 = vmatpush.msra.mxu0 0.0
      %747 = vmatpush.msra.mxu0 0.0
      %748 = vmatpush.msra.mxu0 0.0
      %749 = vmatpush.msra.mxu0 0.0
      %750 = vmatpush.msra.mxu0 0.0
      %751 = vmatpush.msra.mxu0 0.0
      %752 = vmatpush.msra.mxu0 0.0
      %753 = vmatpush.msra.mxu0 %v687
      %754 = vmatpush.msra.mxu0 %v686
      %755 = vmatpush.msra.mxu0 %v685
      %756 = vmatpush.msra.mxu0 %v684
      %757 = vmatmul.f32.gmra.mxu0 %v694
      %v758 = vpop.f32.mrf.mxu0
      %v759 = vadd.f32 %v690, %v758
      %760 = vmatmul.f32.gmra.mxu0 %v697
      %v761 = vpop.f32.mrf.mxu0
      %v762 = vadd.f32 %v690, %v761
      %763 = vmatmul.f32.gmra.mxu0 %v700
      %v764 = vpop.f32.mrf.mxu0
      %v765 = vadd.f32 %v690, %v764
      %766 = vmatmul.f32.gmra.mxu0 %v703
      %v767 = vpop.f32.mrf.mxu0
      %v768 = vadd.f32 %v690, %v767
      %769 = vmatmul.f32.gmra.mxu0 %v706
      %v770 = vpop.f32.mrf.mxu0
      %v771 = vadd.f32 %v690, %v770
      %772 = vmatmul.f32.gmra.mxu0 %v709
      %v773 = vpop.f32.mrf.mxu0
      %v774 = vadd.f32 %v690, %v773
      %775 = vmatmul.f32.gmra.mxu0 %v712
      %v776 = vpop.f32.mrf.mxu0
      %v777 = vadd.f32 %v690, %v776
      %778 = vmatmul.f32.gmra.mxu0 %v715
      %v779 = vpop.f32.mrf.mxu0
      %v780 = vadd.f32 %v690, %v779
      %781 = vmatmul.f32.gmra.mxu0 %v718
      %v782 = vpop.f32.mrf.mxu0
      %v783 = vadd.f32 %v690, %v782
      %784 = vmatmul.f32.gmra.mxu0 %v721
      %v785 = vpop.f32.mrf.mxu0
      %v786 = vadd.f32 %v690, %v785
      %787 = vmatmul.f32.gmra.mxu0 %v724
      %v788 = vpop.f32.mrf.mxu0
      %v789 = vadd.f32 %v690, %v788
      %790 = vmatmul.f32.gmra.mxu0 %v727
      %v791 = vpop.f32.mrf.mxu0
      %v792 = vadd.f32 %v690, %v791
      %793 = vmatmul.f32.gmra.mxu0 %v730
      %v794 = vpop.f32.mrf.mxu0
      %v795 = vadd.f32 %v690, %v794
      %796 = vmatmul.f32.gmra.mxu0 %v733
      %v797 = vpop.f32.mrf.mxu0
      %v798 = vadd.f32 %v690, %v797
      %799 = vmatmul.f32.gmra.mxu0 %v736
      %v800 = vpop.f32.mrf.mxu0
      %v801 = vadd.f32 %v690, %v800
      %802 = vmatmul.f32.gmra.mxu0 %v739
      %v803 = vpop.f32.mrf.mxu0
      %v804 = vadd.f32 %v690, %v803
      %805 = vdwg.mxu0
      %v806 = vld [vmem:[%s7] sm:$0x1]
      %v808 = vperm.slane %v806, 0
      %v810 = vmul.f32 %v759, %v808
      %v811 = vmul.f32 %v762, %v808
      %v812 = vmul.f32 %v765, %v808
      %v813 = vmul.f32 %v768, %v808
      %v814 = vmul.f32 %v771, %v808
      %v815 = vmul.f32 %v774, %v808
      %v816 = vmul.f32 %v777, %v808
      %v817 = vmul.f32 %v780, %v808
      %v818 = vmul.f32 %v783, %v808
      %v819 = vmul.f32 %v786, %v808
      %v820 = vmul.f32 %v789, %v808
      %v821 = vmul.f32 %v792, %v808
      %v822 = vmul.f32 %v795, %v808
      %v823 = vmul.f32 %v798, %v808
      %v824 = vmul.f32 %v801, %v808
      %v825 = vmul.f32 %v804, %v808
      %v826 = vsel %vm692, %v810, 0.0
      %827 = vadd.xlane.f32.xlu0 %v826
      %v828 = vpop.xlane.xlu0 %827
      %v829 = vsel %vm692, %v811, 0.0
      %830 = vadd.xlane.f32.xlu0 %v829
      %v831 = vpop.xlane.xlu0 %830
      %v832 = vsel %vm692, %v812, 0.0
      %833 = vadd.xlane.f32.xlu0 %v832
      %v834 = vpop.xlane.xlu0 %833
      %v835 = vsel %vm692, %v813, 0.0
      %836 = vadd.xlane.f32.xlu0 %v835
      %v837 = vpop.xlane.xlu0 %836
      %v838 = vsel %vm692, %v814, 0.0
      %839 = vadd.xlane.f32.xlu0 %v838
      %v840 = vpop.xlane.xlu0 %839
      %v841 = vsel %vm692, %v815, 0.0
      %842 = vadd.xlane.f32.xlu0 %v841
      %v843 = vpop.xlane.xlu0 %842
      %v844 = vsel %vm692, %v816, 0.0
      %845 = vadd.xlane.f32.xlu0 %v844
      %v846 = vpop.xlane.xlu0 %845
      %v847 = vsel %vm692, %v817, 0.0
      %848 = vadd.xlane.f32.xlu0 %v847
      %v849 = vpop.xlane.xlu0 %848
      %v850 = vsel %vm692, %v818, 0.0
      %851 = vadd.xlane.f32.xlu0 %v850
      %v852 = vpop.xlane.xlu0 %851
      %v853 = vsel %vm692, %v819, 0.0
      %854 = vadd.xlane.f32.xlu0 %v853
      %v855 = vpop.xlane.xlu0 %854
      %v856 = vsel %vm692, %v820, 0.0
      %857 = vadd.xlane.f32.xlu0 %v856
      %v858 = vpop.xlane.xlu0 %857
      %v859 = vsel %vm692, %v821, 0.0
      %860 = vadd.xlane.f32.xlu0 %v859
      %v861 = vpop.xlane.xlu0 %860
      %v862 = vsel %vm692, %v822, 0.0
      %863 = vadd.xlane.f32.xlu0 %v862
      %v864 = vpop.xlane.xlu0 %863
      %v865 = vsel %vm692, %v823, 0.0
      %866 = vadd.xlane.f32.xlu0 %v865
      %v867 = vpop.xlane.xlu0 %866
      %v868 = vsel %vm692, %v824, 0.0
      %869 = vadd.xlane.f32.xlu0 %v868
      %v870 = vpop.xlane.xlu0 %869
      %v871 = vsel %vm692, %v825, 0.0
      %872 = vadd.xlane.f32.xlu0 %v871
      %v873 = vpop.xlane.xlu0 %872
      %v874 = vld [vmem:[#allocation2] sm:$0x1]
      %v876 = vperm.slane %v874, 0
      %v878 = vadd.f32 %v828, %v876
      %v879 = vadd.f32 %v831, %v876
      %v880 = vadd.f32 %v834, %v876
      %v881 = vadd.f32 %v837, %v876
      %v882 = vadd.f32 %v840, %v876
      %v883 = vadd.f32 %v843, %v876
      %v884 = vadd.f32 %v846, %v876
      %v885 = vadd.f32 %v849, %v876
      %v886 = vadd.f32 %v852, %v876
      %v887 = vadd.f32 %v855, %v876
      %v888 = vadd.f32 %v858, %v876
      %v889 = vadd.f32 %v861, %v876
      %v890 = vadd.f32 %v864, %v876
      %v891 = vadd.f32 %v867, %v876
      %v892 = vadd.f32 %v870, %v876
      %v893 = vadd.f32 %v873, %v876
      %v894 = vmul.f32 %v759, %v759
      %v895 = vmul.f32 %v762, %v762
      %v896 = vmul.f32 %v765, %v765
      %v897 = vmul.f32 %v768, %v768
      %v898 = vmul.f32 %v771, %v771
      %v899 = vmul.f32 %v774, %v774
      %v900 = vmul.f32 %v777, %v777
      %v901 = vmul.f32 %v780, %v780
      %v902 = vmul.f32 %v783, %v783
      %v903 = vmul.f32 %v786, %v786
      %v904 = vmul.f32 %v789, %v789
      %v905 = vmul.f32 %v792, %v792
      %v906 = vmul.f32 %v795, %v795
      %v907 = vmul.f32 %v798, %v798
      %v908 = vmul.f32 %v801, %v801
      %v909 = vmul.f32 %v804, %v804
      %v910 = vsel %vm692, %v894, 0.0
      %911 = vadd.xlane.f32.xlu0 %v910
      %v912 = vpop.xlane.xlu0 %911
      %v913 = vsel %vm692, %v895, 0.0
      %914 = vadd.xlane.f32.xlu0 %v913
      %v915 = vpop.xlane.xlu0 %914
      %v916 = vsel %vm692, %v896, 0.0
      %917 = vadd.xlane.f32.xlu0 %v916
      %v918 = vpop.xlane.xlu0 %917
      %v919 = vsel %vm692, %v897, 0.0
      %920 = vadd.xlane.f32.xlu0 %v919
      %v921 = vpop.xlane.xlu0 %920
      %v922 = vsel %vm692, %v898, 0.0
      %923 = vadd.xlane.f32.xlu0 %v922
      %v924 = vpop.xlane.xlu0 %923
      %v925 = vsel %vm692, %v899, 0.0
      %926 = vadd.xlane.f32.xlu0 %v925
      %v927 = vpop.xlane.xlu0 %926
      %v928 = vsel %vm692, %v900, 0.0
      %929 = vadd.xlane.f32.xlu0 %v928
      %v930 = vpop.xlane.xlu0 %929
      %v931 = vsel %vm692, %v901, 0.0
      %932 = vadd.xlane.f32.xlu0 %v931
      %v933 = vpop.xlane.xlu0 %932
      %v934 = vsel %vm692, %v902, 0.0
      %935 = vadd.xlane.f32.xlu0 %v934
      %v936 = vpop.xlane.xlu0 %935
      %v937 = vsel %vm692, %v903, 0.0
      %938 = vadd.xlane.f32.xlu0 %v937
      %v939 = vpop.xlane.xlu0 %938
      %v940 = vsel %vm692, %v904, 0.0
      %941 = vadd.xlane.f32.xlu0 %v940
      %v942 = vpop.xlane.xlu0 %941
      %v943 = vsel %vm692, %v905, 0.0
      %944 = vadd.xlane.f32.xlu0 %v943
      %v945 = vpop.xlane.xlu0 %944
      %v946 = vsel %vm692, %v906, 0.0
      %947 = vadd.xlane.f32.xlu0 %v946
      %v948 = vpop.xlane.xlu0 %947
      %v949 = vsel %vm692, %v907, 0.0
      %950 = vadd.xlane.f32.xlu0 %v949
      %v951 = vpop.xlane.xlu0 %950
      %v952 = vsel %vm692, %v908, 0.0
      %953 = vadd.xlane.f32.xlu0 %v952
      %v954 = vpop.xlane.xlu0 %953
      %v955 = vsel %vm692, %v909, 0.0
      %956 = vadd.xlane.f32.xlu0 %v955
      %v957 = vpop.xlane.xlu0 %956
      %v958 = vrsqrt.pop %v912
      %v959 = vmul.f32 %v958, %v912
      %v960 = vmul.f32 %v959, %v958
      %v961 = vmul.f32 0.5, %v960
      %v962 = vsub.f32 1.5, %v961
      %v963 = vmul.f32 %v958, %v962
      %v964 = vmul.f32 %v912, %v963
      %vm965 = vcmp.eq.f32.partialorder %v912, inf
      %v966 = vsel %vm965, %v912, %v964
      %vm967 = vcmp.eq.f32.partialorder %v912, 0.0
      %v968 = vand.u32 %v912, 2147483648
      %v969 = vsel %vm967, %v968, %v966
      %v970 = vrsqrt.pop %v915
      %v971 = vmul.f32 %v970, %v915
      %v972 = vmul.f32 %v971, %v970
      %v973 = vmul.f32 0.5, %v972
      %v974 = vsub.f32 1.5, %v973
      %v975 = vmul.f32 %v970, %v974
      %v976 = vmul.f32 %v915, %v975
      %vm977 = vcmp.eq.f32.partialorder %v915, inf
      %v978 = vsel %vm977, %v915, %v976
      %vm979 = vcmp.eq.f32.partialorder %v915, 0.0
      %v980 = vand.u32 %v915, 2147483648
      %v981 = vsel %vm979, %v980, %v978
      %v982 = vrsqrt.pop %v918
      %v983 = vmul.f32 %v982, %v918
      %v984 = vmul.f32 %v983, %v982
      %v985 = vmul.f32 0.5, %v984
      %v986 = vsub.f32 1.5, %v985
      %v987 = vmul.f32 %v982, %v986
      %v988 = vmul.f32 %v918, %v987
      %vm989 = vcmp.eq.f32.partialorder %v918, inf
      %v990 = vsel %vm989, %v918, %v988
      %vm991 = vcmp.eq.f32.partialorder %v918, 0.0
      %v992 = vand.u32 %v918, 2147483648
      %v993 = vsel %vm991, %v992, %v990
      %v994 = vrsqrt.pop %v921
      %v995 = vmul.f32 %v994, %v921
      %v996 = vmul.f32 %v995, %v994
      %v997 = vmul.f32 0.5, %v996
      %v998 = vsub.f32 1.5, %v997
      %v999 = vmul.f32 %v994, %v998
      %v1000 = vmul.f32 %v921, %v999
      %vm1001 = vcmp.eq.f32.partialorder %v921, inf
      %v1002 = vsel %vm1001, %v921, %v1000
      %vm1003 = vcmp.eq.f32.partialorder %v921, 0.0
      %v1004 = vand.u32 %v921, 2147483648
      %v1005 = vsel %vm1003, %v1004, %v1002
      %v1006 = vrsqrt.pop %v924
      %v1007 = vmul.f32 %v1006, %v924
      %v1008 = vmul.f32 %v1007, %v1006
      %v1009 = vmul.f32 0.5, %v1008
      %v1010 = vsub.f32 1.5, %v1009
      %v1011 = vmul.f32 %v1006, %v1010
      %v1012 = vmul.f32 %v924, %v1011
      %vm1013 = vcmp.eq.f32.partialorder %v924, inf
      %v1014 = vsel %vm1013, %v924, %v1012
      %vm1015 = vcmp.eq.f32.partialorder %v924, 0.0
      %v1016 = vand.u32 %v924, 2147483648
      %v1017 = vsel %vm1015, %v1016, %v1014
      %v1018 = vrsqrt.pop %v927
      %v1019 = vmul.f32 %v1018, %v927
      %v1020 = vmul.f32 %v1019, %v1018
      %v1021 = vmul.f32 0.5, %v1020
      %v1022 = vsub.f32 1.5, %v1021
      %v1023 = vmul.f32 %v1018, %v1022
      %v1024 = vmul.f32 %v927, %v1023
      %vm1025 = vcmp.eq.f32.partialorder %v927, inf
      %v1026 = vsel %vm1025, %v927, %v1024
      %vm1027 = vcmp.eq.f32.partialorder %v927, 0.0
      %v1028 = vand.u32 %v927, 2147483648
      %v1029 = vsel %vm1027, %v1028, %v1026
      %v1030 = vrsqrt.pop %v930
      %v1031 = vmul.f32 %v1030, %v930
      %v1032 = vmul.f32 %v1031, %v1030
      %v1033 = vmul.f32 0.5, %v1032
      %v1034 = vsub.f32 1.5, %v1033
      %v1035 = vmul.f32 %v1030, %v1034
      %v1036 = vmul.f32 %v930, %v1035
      %vm1037 = vcmp.eq.f32.partialorder %v930, inf
      %v1038 = vsel %vm1037, %v930, %v1036
      %vm1039 = vcmp.eq.f32.partialorder %v930, 0.0
      %v1040 = vand.u32 %v930, 2147483648
      %v1041 = vsel %vm1039, %v1040, %v1038
      %v1042 = vrsqrt.pop %v933
      %v1043 = vmul.f32 %v1042, %v933
      %v1044 = vmul.f32 %v1043, %v1042
      %v1045 = vmul.f32 0.5, %v1044
      %v1046 = vsub.f32 1.5, %v1045
      %v1047 = vmul.f32 %v1042, %v1046
      %v1048 = vmul.f32 %v933, %v1047
      %vm1049 = vcmp.eq.f32.partialorder %v933, inf
      %v1050 = vsel %vm1049, %v933, %v1048
      %vm1051 = vcmp.eq.f32.partialorder %v933, 0.0
      %v1052 = vand.u32 %v933, 2147483648
      %v1053 = vsel %vm1051, %v1052, %v1050
      %v1054 = vrsqrt.pop %v936
      %v1055 = vmul.f32 %v1054, %v936
      %v1056 = vmul.f32 %v1055, %v1054
      %v1057 = vmul.f32 0.5, %v1056
      %v1058 = vsub.f32 1.5, %v1057
      %v1059 = vmul.f32 %v1054, %v1058
      %v1060 = vmul.f32 %v936, %v1059
      %vm1061 = vcmp.eq.f32.partialorder %v936, inf
      %v1062 = vsel %vm1061, %v936, %v1060
      %vm1063 = vcmp.eq.f32.partialorder %v936, 0.0
      %v1064 = vand.u32 %v936, 2147483648
      %v1065 = vsel %vm1063, %v1064, %v1062
      %v1066 = vrsqrt.pop %v939
      %v1067 = vmul.f32 %v1066, %v939
      %v1068 = vmul.f32 %v1067, %v1066
      %v1069 = vmul.f32 0.5, %v1068
      %v1070 = vsub.f32 1.5, %v1069
      %v1071 = vmul.f32 %v1066, %v1070
      %v1072 = vmul.f32 %v939, %v1071
      %vm1073 = vcmp.eq.f32.partialorder %v939, inf
      %v1074 = vsel %vm1073, %v939, %v1072
      %vm1075 = vcmp.eq.f32.partialorder %v939, 0.0
      %v1076 = vand.u32 %v939, 2147483648
      %v1077 = vsel %vm1075, %v1076, %v1074
      %v1078 = vrsqrt.pop %v942
      %v1079 = vmul.f32 %v1078, %v942
      %v1080 = vmul.f32 %v1079, %v1078
      %v1081 = vmul.f32 0.5, %v1080
      %v1082 = vsub.f32 1.5, %v1081
      %v1083 = vmul.f32 %v1078, %v1082
      %v1084 = vmul.f32 %v942, %v1083
      %vm1085 = vcmp.eq.f32.partialorder %v942, inf
      %v1086 = vsel %vm1085, %v942, %v1084
      %vm1087 = vcmp.eq.f32.partialorder %v942, 0.0
      %v1088 = vand.u32 %v942, 2147483648
      %v1089 = vsel %vm1087, %v1088, %v1086
      %v1090 = vrsqrt.pop %v945
      %v1091 = vmul.f32 %v1090, %v945
      %v1092 = vmul.f32 %v1091, %v1090
      %v1093 = vmul.f32 0.5, %v1092
      %v1094 = vsub.f32 1.5, %v1093
      %v1095 = vmul.f32 %v1090, %v1094
      %v1096 = vmul.f32 %v945, %v1095
      %vm1097 = vcmp.eq.f32.partialorder %v945, inf
      %v1098 = vsel %vm1097, %v945, %v1096
      %vm1099 = vcmp.eq.f32.partialorder %v945, 0.0
      %v1100 = vand.u32 %v945, 2147483648
      %v1101 = vsel %vm1099, %v1100, %v1098
      %v1102 = vrsqrt.pop %v948
      %v1103 = vmul.f32 %v1102, %v948
      %v1104 = vmul.f32 %v1103, %v1102
      %v1105 = vmul.f32 0.5, %v1104
      %v1106 = vsub.f32 1.5, %v1105
      %v1107 = vmul.f32 %v1102, %v1106
      %v1108 = vmul.f32 %v948, %v1107
      %vm1109 = vcmp.eq.f32.partialorder %v948, inf
      %v1110 = vsel %vm1109, %v948, %v1108
      %vm1111 = vcmp.eq.f32.partialorder %v948, 0.0
      %v1112 = vand.u32 %v948, 2147483648
      %v1113 = vsel %vm1111, %v1112, %v1110
      %v1114 = vrsqrt.pop %v951
      %v1115 = vmul.f32 %v1114, %v951
      %v1116 = vmul.f32 %v1115, %v1114
      %v1117 = vmul.f32 0.5, %v1116
      %v1118 = vsub.f32 1.5, %v1117
      %v1119 = vmul.f32 %v1114, %v1118
      %v1120 = vmul.f32 %v951, %v1119
      %vm1121 = vcmp.eq.f32.partialorder %v951, inf
      %v1122 = vsel %vm1121, %v951, %v1120
      %vm1123 = vcmp.eq.f32.partialorder %v951, 0.0
      %v1124 = vand.u32 %v951, 2147483648
      %v1125 = vsel %vm1123, %v1124, %v1122
      %v1126 = vrsqrt.pop %v954
      %v1127 = vmul.f32 %v1126, %v954
      %v1128 = vmul.f32 %v1127, %v1126
      %v1129 = vmul.f32 0.5, %v1128
      %v1130 = vsub.f32 1.5, %v1129
      %v1131 = vmul.f32 %v1126, %v1130
      %v1132 = vmul.f32 %v954, %v1131
      %vm1133 = vcmp.eq.f32.partialorder %v954, inf
      %v1134 = vsel %vm1133, %v954, %v1132
      %vm1135 = vcmp.eq.f32.partialorder %v954, 0.0
      %v1136 = vand.u32 %v954, 2147483648
      %v1137 = vsel %vm1135, %v1136, %v1134
      %v1138 = vrsqrt.pop %v957
      %v1139 = vmul.f32 %v1138, %v957
      %v1140 = vmul.f32 %v1139, %v1138
      %v1141 = vmul.f32 0.5, %v1140
      %v1142 = vsub.f32 1.5, %v1141
      %v1143 = vmul.f32 %v1138, %v1142
      %v1144 = vmul.f32 %v957, %v1143
      %vm1145 = vcmp.eq.f32.partialorder %v957, inf
      %v1146 = vsel %vm1145, %v957, %v1144
      %vm1147 = vcmp.eq.f32.partialorder %v957, 0.0
      %v1148 = vand.u32 %v957, 2147483648
      %v1149 = vsel %vm1147, %v1148, %v1146
      %1150 = vst.msk [vmem:[%s405] sm:$0xff] %vm692, %v759
      %1151 = vst.msk [vmem:[%s405 + $0x8] sm:$0xff] %vm692, %v762
      %1152 = vst.msk [vmem:[%s405 + $0x10] sm:$0xff] %vm692, %v765
      %1153 = vst.msk [vmem:[%s405 + $0x18] sm:$0xff] %vm692, %v768
      %1154 = vst.msk [vmem:[%s405 + $0x20] sm:$0xff] %vm692, %v771
      %1155 = vst.msk [vmem:[%s405 + $0x28] sm:$0xff] %vm692, %v774
      %1156 = vst.msk [vmem:[%s405 + $0x30] sm:$0xff] %vm692, %v777
      %1157 = vst.msk [vmem:[%s405 + $0x38] sm:$0xff] %vm692, %v780
      %1158 = vst.msk [vmem:[%s405 + $0x40] sm:$0xff] %vm692, %v783
      %1159 = vst.msk [vmem:[%s405 + $0x48] sm:$0xff] %vm692, %v786
      %1160 = vst.msk [vmem:[%s405 + $0x50] sm:$0xff] %vm692, %v789
      %1161 = vst.msk [vmem:[%s405 + $0x58] sm:$0xff] %vm692, %v792
      %1162 = vst.msk [vmem:[%s405 + $0x60] sm:$0xff] %vm692, %v795
      %1163 = vst.msk [vmem:[%s405 + $0x68] sm:$0xff] %vm692, %v798
      %1164 = vst.msk [vmem:[%s405 + $0x70] sm:$0xff] %vm692, %v801
      %1165 = vst.msk [vmem:[%s405 + $0x78] sm:$0xff] %vm692, %v804
      %v1166 = vadd.f32 %v969, 1e-08
      %v1167 = vadd.f32 %v981, 1e-08
      %v1168 = vadd.f32 %v993, 1e-08
      %v1169 = vadd.f32 %v1005, 1e-08
      %v1170 = vadd.f32 %v1017, 1e-08
      %v1171 = vadd.f32 %v1029, 1e-08
      %v1172 = vadd.f32 %v1041, 1e-08
      %v1173 = vadd.f32 %v1053, 1e-08
      %v1174 = vadd.f32 %v1065, 1e-08
      %v1175 = vadd.f32 %v1077, 1e-08
      %v1176 = vadd.f32 %v1089, 1e-08
      %v1177 = vadd.f32 %v1101, 1e-08
      %v1178 = vadd.f32 %v1113, 1e-08
      %v1179 = vadd.f32 %v1125, 1e-08
      %v1180 = vadd.f32 %v1137, 1e-08
      %v1181 = vadd.f32 %v1149, 1e-08
      %v1182 = vrcp.pop %v1166
      %v1183 = vmul.f32 %v1166, %v1182
      %v1184 = vsub.f32 1.0, %v1183
      %v1185 = vmul.f32 %v1182, %v1184
      %v1186 = vadd.f32 %v1182, %v1185
      %vm1187 = vweird.f32 %v1166
      %vm1188 = vweird.f32 %v1182
      %vm1189 = vmor %vm1187, %vm1188
      %v1190 = vsel %vm1189, %v1182, %v1186
      %v1191 = vand.u32 2147483647, %v1166
      %vm1192 = vcmp.eq.f32.partialorder %v1191, 8.507059e+37
      %v1193 = vand.u32 %v1166, 2147483648
      %v1194 = vor.u32 1.1754944e-38, %v1193
      %v1195 = vsel %vm1192, %v1194, %v1190
      %v1196 = vmul.f32 %v759, %v1195
      %v1197 = vrcp.pop %v1167
      %v1198 = vmul.f32 %v1167, %v1197
      %v1199 = vsub.f32 1.0, %v1198
      %v1200 = vmul.f32 %v1197, %v1199
      %v1201 = vadd.f32 %v1197, %v1200
      %vm1202 = vweird.f32 %v1167
      %vm1203 = vweird.f32 %v1197
      %vm1204 = vmor %vm1202, %vm1203
      %v1205 = vsel %vm1204, %v1197, %v1201
      %v1206 = vand.u32 2147483647, %v1167
      %vm1207 = vcmp.eq.f32.partialorder %v1206, 8.507059e+37
      %v1208 = vand.u32 %v1167, 2147483648
      %v1209 = vor.u32 1.1754944e-38, %v1208
      %v1210 = vsel %vm1207, %v1209, %v1205
      %v1211 = vmul.f32 %v762, %v1210
      %v1212 = vrcp.pop %v1168
      %v1213 = vmul.f32 %v1168, %v1212
      %v1214 = vsub.f32 1.0, %v1213
      %v1215 = vmul.f32 %v1212, %v1214
      %v1216 = vadd.f32 %v1212, %v1215
      %vm1217 = vweird.f32 %v1168
      %vm1218 = vweird.f32 %v1212
      %vm1219 = vmor %vm1217, %vm1218
      %v1220 = vsel %vm1219, %v1212, %v1216
      %v1221 = vand.u32 2147483647, %v1168
      %vm1222 = vcmp.eq.f32.partialorder %v1221, 8.507059e+37
      %v1223 = vand.u32 %v1168, 2147483648
      %v1224 = vor.u32 1.1754944e-38, %v1223
      %v1225 = vsel %vm1222, %v1224, %v1220
      %v1226 = vmul.f32 %v765, %v1225
      %v1227 = vrcp.pop %v1169
      %v1228 = vmul.f32 %v1169, %v1227
      %v1229 = vsub.f32 1.0, %v1228
      %v1230 = vmul.f32 %v1227, %v1229
      %v1231 = vadd.f32 %v1227, %v1230
      %vm1232 = vweird.f32 %v1169
      %vm1233 = vweird.f32 %v1227
      %vm1234 = vmor %vm1232, %vm1233
      %v1235 = vsel %vm1234, %v1227, %v1231
      %v1236 = vand.u32 2147483647, %v1169
      %vm1237 = vcmp.eq.f32.partialorder %v1236, 8.507059e+37
      %v1238 = vand.u32 %v1169, 2147483648
      %v1239 = vor.u32 1.1754944e-38, %v1238
      %v1240 = vsel %vm1237, %v1239, %v1235
      %v1241 = vmul.f32 %v768, %v1240
      %v1242 = vrcp.pop %v1170
      %v1243 = vmul.f32 %v1170, %v1242
      %v1244 = vsub.f32 1.0, %v1243
      %v1245 = vmul.f32 %v1242, %v1244
      %v1246 = vadd.f32 %v1242, %v1245
      %vm1247 = vweird.f32 %v1170
      %vm1248 = vweird.f32 %v1242
      %vm1249 = vmor %vm1247, %vm1248
      %v1250 = vsel %vm1249, %v1242, %v1246
      %v1251 = vand.u32 2147483647, %v1170
      %vm1252 = vcmp.eq.f32.partialorder %v1251, 8.507059e+37
      %v1253 = vand.u32 %v1170, 2147483648
      %v1254 = vor.u32 1.1754944e-38, %v1253
      %v1255 = vsel %vm1252, %v1254, %v1250
      %v1256 = vmul.f32 %v771, %v1255
      %v1257 = vrcp.pop %v1171
      %v1258 = vmul.f32 %v1171, %v1257
      %v1259 = vsub.f32 1.0, %v1258
      %v1260 = vmul.f32 %v1257, %v1259
      %v1261 = vadd.f32 %v1257, %v1260
      %vm1262 = vweird.f32 %v1171
      %vm1263 = vweird.f32 %v1257
      %vm1264 = vmor %vm1262, %vm1263
      %v1265 = vsel %vm1264, %v1257, %v1261
      %v1266 = vand.u32 2147483647, %v1171
      %vm1267 = vcmp.eq.f32.partialorder %v1266, 8.507059e+37
      %v1268 = vand.u32 %v1171, 2147483648
      %v1269 = vor.u32 1.1754944e-38, %v1268
      %v1270 = vsel %vm1267, %v1269, %v1265
      %v1271 = vmul.f32 %v774, %v1270
      %v1272 = vrcp.pop %v1172
      %v1273 = vmul.f32 %v1172, %v1272
      %v1274 = vsub.f32 1.0, %v1273
      %v1275 = vmul.f32 %v1272, %v1274
      %v1276 = vadd.f32 %v1272, %v1275
      %vm1277 = vweird.f32 %v1172
      %vm1278 = vweird.f32 %v1272
      %vm1279 = vmor %vm1277, %vm1278
      %v1280 = vsel %vm1279, %v1272, %v1276
      %v1281 = vand.u32 2147483647, %v1172
      %vm1282 = vcmp.eq.f32.partialorder %v1281, 8.507059e+37
      %v1283 = vand.u32 %v1172, 2147483648
      %v1284 = vor.u32 1.1754944e-38, %v1283
      %v1285 = vsel %vm1282, %v1284, %v1280
      %v1286 = vmul.f32 %v777, %v1285
      %v1287 = vrcp.pop %v1173
      %v1288 = vmul.f32 %v1173, %v1287
      %v1289 = vsub.f32 1.0, %v1288
      %v1290 = vmul.f32 %v1287, %v1289
      %v1291 = vadd.f32 %v1287, %v1290
      %vm1292 = vweird.f32 %v1173
      %vm1293 = vweird.f32 %v1287
      %vm1294 = vmor %vm1292, %vm1293
      %v1295 = vsel %vm1294, %v1287, %v1291
      %v1296 = vand.u32 2147483647, %v1173
      %vm1297 = vcmp.eq.f32.partialorder %v1296, 8.507059e+37
      %v1298 = vand.u32 %v1173, 2147483648
      %v1299 = vor.u32 1.1754944e-38, %v1298
      %v1300 = vsel %vm1297, %v1299, %v1295
      %v1301 = vmul.f32 %v780, %v1300
      %v1302 = vrcp.pop %v1174
      %v1303 = vmul.f32 %v1174, %v1302
      %v1304 = vsub.f32 1.0, %v1303
      %v1305 = vmul.f32 %v1302, %v1304
      %v1306 = vadd.f32 %v1302, %v1305
      %vm1307 = vweird.f32 %v1174
      %vm1308 = vweird.f32 %v1302
      %vm1309 = vmor %vm1307, %vm1308
      %v1310 = vsel %vm1309, %v1302, %v1306
      %v1311 = vand.u32 2147483647, %v1174
      %vm1312 = vcmp.eq.f32.partialorder %v1311, 8.507059e+37
      %v1313 = vand.u32 %v1174, 2147483648
      %v1314 = vor.u32 1.1754944e-38, %v1313
      %v1315 = vsel %vm1312, %v1314, %v1310
      %v1316 = vmul.f32 %v783, %v1315
      %v1317 = vrcp.pop %v1175
      %v1318 = vmul.f32 %v1175, %v1317
      %v1319 = vsub.f32 1.0, %v1318
      %v1320 = vmul.f32 %v1317, %v1319
      %v1321 = vadd.f32 %v1317, %v1320
      %vm1322 = vweird.f32 %v1175
      %vm1323 = vweird.f32 %v1317
      %vm1324 = vmor %vm1322, %vm1323
      %v1325 = vsel %vm1324, %v1317, %v1321
      %v1326 = vand.u32 2147483647, %v1175
      %vm1327 = vcmp.eq.f32.partialorder %v1326, 8.507059e+37
      %v1328 = vand.u32 %v1175, 2147483648
      %v1329 = vor.u32 1.1754944e-38, %v1328
      %v1330 = vsel %vm1327, %v1329, %v1325
      %v1331 = vmul.f32 %v786, %v1330
      %v1332 = vrcp.pop %v1176
      %v1333 = vmul.f32 %v1176, %v1332
      %v1334 = vsub.f32 1.0, %v1333
      %v1335 = vmul.f32 %v1332, %v1334
      %v1336 = vadd.f32 %v1332, %v1335
      %vm1337 = vweird.f32 %v1176
      %vm1338 = vweird.f32 %v1332
      %vm1339 = vmor %vm1337, %vm1338
      %v1340 = vsel %vm1339, %v1332, %v1336
      %v1341 = vand.u32 2147483647, %v1176
      %vm1342 = vcmp.eq.f32.partialorder %v1341, 8.507059e+37
      %v1343 = vand.u32 %v1176, 2147483648
      %v1344 = vor.u32 1.1754944e-38, %v1343
      %v1345 = vsel %vm1342, %v1344, %v1340
      %v1346 = vmul.f32 %v789, %v1345
      %v1347 = vrcp.pop %v1177
      %v1348 = vmul.f32 %v1177, %v1347
      %v1349 = vsub.f32 1.0, %v1348
      %v1350 = vmul.f32 %v1347, %v1349
      %v1351 = vadd.f32 %v1347, %v1350
      %vm1352 = vweird.f32 %v1177
      %vm1353 = vweird.f32 %v1347
      %vm1354 = vmor %vm1352, %vm1353
      %v1355 = vsel %vm1354, %v1347, %v1351
      %v1356 = vand.u32 2147483647, %v1177
      %vm1357 = vcmp.eq.f32.partialorder %v1356, 8.507059e+37
      %v1358 = vand.u32 %v1177, 2147483648
      %v1359 = vor.u32 1.1754944e-38, %v1358
      %v1360 = vsel %vm1357, %v1359, %v1355
      %v1361 = vmul.f32 %v792, %v1360
      %v1362 = vrcp.pop %v1178
      %v1363 = vmul.f32 %v1178, %v1362
      %v1364 = vsub.f32 1.0, %v1363
      %v1365 = vmul.f32 %v1362, %v1364
      %v1366 = vadd.f32 %v1362, %v1365
      %vm1367 = vweird.f32 %v1178
      %vm1368 = vweird.f32 %v1362
      %vm1369 = vmor %vm1367, %vm1368
      %v1370 = vsel %vm1369, %v1362, %v1366
      %v1371 = vand.u32 2147483647, %v1178
      %vm1372 = vcmp.eq.f32.partialorder %v1371, 8.507059e+37
      %v1373 = vand.u32 %v1178, 2147483648
      %v1374 = vor.u32 1.1754944e-38, %v1373
      %v1375 = vsel %vm1372, %v1374, %v1370
      %v1376 = vmul.f32 %v795, %v1375
      %v1377 = vrcp.pop %v1179
      %v1378 = vmul.f32 %v1179, %v1377
      %v1379 = vsub.f32 1.0, %v1378
      %v1380 = vmul.f32 %v1377, %v1379
      %v1381 = vadd.f32 %v1377, %v1380
      %vm1382 = vweird.f32 %v1179
      %vm1383 = vweird.f32 %v1377
      %vm1384 = vmor %vm1382, %vm1383
      %v1385 = vsel %vm1384, %v1377, %v1381
      %v1386 = vand.u32 2147483647, %v1179
      %vm1387 = vcmp.eq.f32.partialorder %v1386, 8.507059e+37
      %v1388 = vand.u32 %v1179, 2147483648
      %v1389 = vor.u32 1.1754944e-38, %v1388
      %v1390 = vsel %vm1387, %v1389, %v1385
      %v1391 = vmul.f32 %v798, %v1390
      %v1392 = vrcp.pop %v1180
      %v1393 = vmul.f32 %v1180, %v1392
      %v1394 = vsub.f32 1.0, %v1393
      %v1395 = vmul.f32 %v1392, %v1394
      %v1396 = vadd.f32 %v1392, %v1395
      %vm1397 = vweird.f32 %v1180
      %vm1398 = vweird.f32 %v1392
      %vm1399 = vmor %vm1397, %vm1398
      %v1400 = vsel %vm1399, %v1392, %v1396
      %v1401 = vand.u32 2147483647, %v1180
      %vm1402 = vcmp.eq.f32.partialorder %v1401, 8.507059e+37
      %v1403 = vand.u32 %v1180, 2147483648
      %v1404 = vor.u32 1.1754944e-38, %v1403
      %v1405 = vsel %vm1402, %v1404, %v1400
      %v1406 = vmul.f32 %v801, %v1405
      %v1407 = vrcp.pop %v1181
      %v1408 = vmul.f32 %v1181, %v1407
      %v1409 = vsub.f32 1.0, %v1408
      %v1410 = vmul.f32 %v1407, %v1409
      %v1411 = vadd.f32 %v1407, %v1410
      %vm1412 = vweird.f32 %v1181
      %vm1413 = vweird.f32 %v1407
      %vm1414 = vmor %vm1412, %vm1413
      %v1415 = vsel %vm1414, %v1407, %v1411
      %v1416 = vand.u32 2147483647, %v1181
      %vm1417 = vcmp.eq.f32.partialorder %v1416, 8.507059e+37
      %v1418 = vand.u32 %v1181, 2147483648
      %v1419 = vor.u32 1.1754944e-38, %v1418
      %v1420 = vsel %vm1417, %v1419, %v1415
      %v1421 = vmul.f32 %v804, %v1420
      %v1422 = vpack.c.bf16 %v1196, %v1196
      %v1423 = vpack.c.bf16 %v1211, %v1211
      %v1424 = vpack.c.bf16 %v1226, %v1226
      %v1425 = vpack.c.bf16 %v1241, %v1241
      %v1426 = vpack.c.bf16 %v1256, %v1256
      %v1427 = vpack.c.bf16 %v1271, %v1271
      %v1428 = vpack.c.bf16 %v1286, %v1286
      %v1429 = vpack.c.bf16 %v1301, %v1301
      %v1430 = vpack.c.bf16 %v1316, %v1316
      %v1431 = vpack.c.bf16 %v1331, %v1331
      %v1432 = vpack.c.bf16 %v1346, %v1346
      %v1433 = vpack.c.bf16 %v1361, %v1361
      %v1434 = vpack.c.bf16 %v1376, %v1376
      %v1435 = vpack.c.bf16 %v1391, %v1391
      %v1436 = vpack.c.bf16 %v1406, %v1406
      %v1437 = vpack.c.bf16 %v1421, %v1421
      %vm1438 = vcmask 257024
      %1439 = vst.msk [vmem:[%s411] sm:$0xf] %vm1438, %v1422
      %1440 = vst.msk [vmem:[%s411 + $0x4] sm:$0xf] %vm1438, %v1423
      %1441 = vst.msk [vmem:[%s411 + $0x8] sm:$0xf] %vm1438, %v1424
      %1442 = vst.msk [vmem:[%s411 + $0xc] sm:$0xf] %vm1438, %v1425
      %1443 = vst.msk [vmem:[%s411 + $0x10] sm:$0xf] %vm1438, %v1426
      %1444 = vst.msk [vmem:[%s411 + $0x14] sm:$0xf] %vm1438, %v1427
      %1445 = vst.msk [vmem:[%s411 + $0x18] sm:$0xf] %vm1438, %v1428
      %1446 = vst.msk [vmem:[%s411 + $0x1c] sm:$0xf] %vm1438, %v1429
      %1447 = vst.msk [vmem:[%s411 + $0x20] sm:$0xf] %vm1438, %v1430
      %1448 = vst.msk [vmem:[%s411 + $0x24] sm:$0xf] %vm1438, %v1431
      %1449 = vst.msk [vmem:[%s411 + $0x28] sm:$0xf] %vm1438, %v1432
      %1450 = vst.msk [vmem:[%s411 + $0x2c] sm:$0xf] %vm1438, %v1433
      %1451 = vst.msk [vmem:[%s411 + $0x30] sm:$0xf] %vm1438, %v1434
      %1452 = vst.msk [vmem:[%s411 + $0x34] sm:$0xf] %vm1438, %v1435
      %1453 = vst.msk [vmem:[%s411 + $0x38] sm:$0xf] %vm1438, %v1436
      %1454 = vst.msk [vmem:[%s411 + $0x3c] sm:$0xf] %vm1438, %v1437
      %vm1455 = vcmask 7168
      %1456 = vst.msk [vmem:[%s417] sm:$0xff] %vm1455, %v878
      %1457 = vst.msk [vmem:[%s417 + $0x8] sm:$0xff] %vm1455, %v879
      %1458 = vst.msk [vmem:[%s417 + $0x10] sm:$0xff] %vm1455, %v880
      %1459 = vst.msk [vmem:[%s417 + $0x18] sm:$0xff] %vm1455, %v881
      %1460 = vst.msk [vmem:[%s417 + $0x20] sm:$0xff] %vm1455, %v882
      %1461 = vst.msk [vmem:[%s417 + $0x28] sm:$0xff] %vm1455, %v883
      %1462 = vst.msk [vmem:[%s417 + $0x30] sm:$0xff] %vm1455, %v884
      %1463 = vst.msk [vmem:[%s417 + $0x38] sm:$0xff] %vm1455, %v885
      %1464 = vst.msk [vmem:[%s417 + $0x40] sm:$0xff] %vm1455, %v886
      %1465 = vst.msk [vmem:[%s417 + $0x48] sm:$0xff] %vm1455, %v887
      %1466 = vst.msk [vmem:[%s417 + $0x50] sm:$0xff] %vm1455, %v888
      %1467 = vst.msk [vmem:[%s417 + $0x58] sm:$0xff] %vm1455, %v889
      %1468 = vst.msk [vmem:[%s417 + $0x60] sm:$0xff] %vm1455, %v890
      %1469 = vst.msk [vmem:[%s417 + $0x68] sm:$0xff] %vm1455, %v891
      %1470 = vst.msk [vmem:[%s417 + $0x70] sm:$0xff] %vm1455, %v892
      %1471 = vst.msk [vmem:[%s417 + $0x78] sm:$0xff] %vm1455, %v893
      %s1472 = smul.u32 16, %s25
      %p1473 = scmp.lt.s32.totalorder %s1472, 47
      %s1474 = scalar_select %p1473, %s1472, 47
      %s1475 = smul.addr %s1474, 8
      %s1476 = scalar_lea.vmem %s9, %s1475
      %s1477 = smul.u32 16, %s25
      %p1478 = scmp.lt.s32.totalorder %s1477, 47
      %s1479 = scalar_select %p1478, %s1477, 47
      %s1480 = smul.addr %s1479, 4
      %s1481 = scalar_lea.vmem %s10, %s1480
      %s1482 = smul.u32 16, %s25
      %p1483 = scmp.lt.s32.totalorder %s1482, 47
      %s1484 = scalar_select %p1483, %s1482, 47
      %s1485 = smul.addr %s1484, 8
      %s1486 = scalar_lea.vmem %s11, %s1485
      // Predicated region
      $region57: #{fwd.4} parent=55 // pred_check
        %p1487 = pneg %p237
      $region58: #{fwd.4} parent=55 // pred_check_branch
        %1489 = sbr.rel (%p1487) target = $region60
      $region59: #{fwd.4} parent=55 // pred_region
        %s1490 = smul.u32 16, %s25
      $region60: #{fwd.4} parent=55 // pred_fallthru
        _
      // Predicated region
      $region61: #{fwd.4} parent=55 // pred_check
        %p1491 = pneg %p263
      $region62: #{fwd.4} parent=55 // pred_check_branch
        %1493 = sbr.rel (%p1491) target = $region64
      $region63: #{fwd.4} parent=55 // pred_region
        %s1494 = smul.u32 16, %s25
      $region64: #{fwd.4} parent=55 // pred_fallthru
        _
      // Predicated region
      $region65: #{fwd.4} parent=55 // pred_check
        %p1495 = pneg %p289
      $region66: #{fwd.4} parent=55 // pred_check_branch
        %1497 = sbr.rel (%p1495) target = $region68
      $region67: #{fwd.4} parent=55 // pred_region
        %s1498 = smul.u32 16, %s25
      $region68: #{fwd.4} parent=55 // pred_fallthru
        _
    $region56: #{fwd.4} parent=5 // pred_fallthru
      _
    %p1499 = scmp.le.s32.totalorder 2, %s20
    // Predicated region
    $region69: #{fwd.4} parent=5 // pred_check
      %p1500 = pneg %p1499
    $region70: #{fwd.4} parent=5 // pred_check_branch
      %1502 = sbr.rel (%p1500) target = $region72
    $region71: #{fwd.4} parent=5 // pred_region
      %s1503 = ssub.s32 %s20, 2
      // Predicated region
      $region73: #{fwd.4} parent=71 // pred_check
        %p1504 = pneg %p243
      $region74: #{fwd.4} parent=71 // pred_check_branch
        %1506 = sbr.rel (%p1504) target = $region76
      $region75: #{fwd.4} parent=71 // pred_region
        %s1507 = smul.u32 16, %s26
        %p1508 = scmp.lt.s32.totalorder %s1507, 47
        %s1509 = scalar_select %p1508, %s1507, 47
        %s1510 = smul.addr %s1509, 8
        %s1511 = scalar_lea.vmem %s9, %s1510
      $region76: #{fwd.4} parent=71 // pred_fallthru
        _
      // Predicated region
      $region77: #{fwd.4} parent=71 // pred_check
        %p1512 = pneg %p269
      $region78: #{fwd.4} parent=71 // pred_check_branch
        %1514 = sbr.rel (%p1512) target = $region80
      $region79: #{fwd.4} parent=71 // pred_region
        %s1515 = smul.u32 16, %s26
        %p1516 = scmp.lt.s32.totalorder %s1515, 47
        %s1517 = scalar_select %p1516, %s1515, 47
        %s1518 = smul.addr %s1517, 4
        %s1519 = scalar_lea.vmem %s10, %s1518
      $region80: #{fwd.4} parent=71 // pred_fallthru
        _
      // Predicated region
      $region81: #{fwd.4} parent=71 // pred_check
        %p1520 = pneg %p295
      $region82: #{fwd.4} parent=71 // pred_check_branch
        %1522 = sbr.rel (%p1520) target = $region84
      $region83: #{fwd.4} parent=71 // pred_region
        %s1523 = smul.u32 16, %s26
        %p1524 = scmp.lt.s32.totalorder %s1523, 47
        %s1525 = scalar_select %p1524, %s1523, 47
        %s1526 = smul.addr %s1525, 8
        %s1527 = scalar_lea.vmem %s11, %s1526
      $region84: #{fwd.4} parent=71 // pred_fallthru
        _
    $region72: #{fwd.4} parent=5 // pred_fallthru
      _
  $region6: #{fwd.4} parent=0 // loop_footer
    %s24 = sadd.s32 1, %s20
  $region7: #{fwd.4} parent=0 // loop_footer_branch
    %19 = sbr.rel target = $region3
  $region8: #{fwd.4} parent=0 // loop_exit
    _

// kernel: fwd.7
$region0: #{fwd.7}
  #allocation0 [shape = 'u32[]', space=smem, size = 0x4, offset = 0x4, fixed_abs, tag = 'smem constant byte address 0x4 - core index']
  #allocation1 [shape = 'u32[72,128]{1,0:T(1,128)}', space=vmem, size = 0x9000, scoped, tag = 'internal scratch']
  %s0 = inlined_call_operand.vmem [shape: f32[384,32], index: 0, kind: input, shape index: {}]
  %s1 = inlined_call_operand.vmem [shape: f32[384,1], index: 1, kind: input, shape index: {}]
  %s2 = inlined_call_operand.vmem [shape: f32[384,1], index: 2, kind: input, shape index: {}]
  %s3 = inlined_call_operand.vmem [shape: f32[384,34], index: 3, kind: output, shape index: {}]
  %s4 = sld [smem:[#allocation0]]
  $region45: #{fwd.7} parent=0
    _
  %s6 = ssub.s32 1, %s4
  %s7 = scalar_select 0, %s6, %s4
  loop: start=0, step=1, limit=5
  $region2: #{fwd.7} parent=0 // loop_pre_header
    _
  $region3: #{fwd.7} parent=0 // loop_header
    %s9 = sphi 0, %s13
    %p10 = scmp.ge.s32.totalorder %s9, 5
    %s19 = sphi 0, %s21
    %s22 = sphi 0, %s19
    %s23 = sphi 0, %s22
    %s39 = sphi 0, %s23
    %s45 = sphi 0, %s47
    %s48 = sphi 0, %s45
    %s49 = sphi 0, %s48
    %s65 = sphi 0, %s49
    %s71 = sphi 0, %s73
    %s74 = sphi 0, %s71
    %s75 = sphi 0, %s74
    %s91 = sphi 0, %s75
    %s97 = sphi 0, %s99
    %s100 = sphi 0, %s97
    %s101 = sphi 0, %s100
    %s117 = sphi 0, %s101
  $region4: #{fwd.7} parent=0 // loop_header_branch
    %12 = sbr.rel (%p10) target = $region8
  $region5: #{fwd.7} parent=0 // loop_body
    %s14 = ssub.s32 %s9, 1
    %s15 = ssub.s32 %s9, 2
    %s16 = sadd.s32 %s9, 1
    %s17 = ssub.s32 %s9, %s16
    %p18 = scmp.eq.s32.totalorder %s17, 0
    %s20 = sadd.s32 %s19, 1
    %s21 = scalar_select %p18, %s19, %s20
    %p24 = pneg %p18
    %p25 = scmp.eq.s32.totalorder %s9, 2
    %p26 = por %p24, %p25
    %p27 = scmp.ne.s32.totalorder %s19, %s22
    %p28 = scmp.eq.s32.totalorder %s9, 0
    %p29 = por %p27, %p28
    %p30 = scmp.ne.s32.totalorder %s19, %s22
    %p31 = scmp.eq.s32.totalorder %s14, 2
    %p32 = por %p30, %p31
    %p33 = scmp.ne.s32.totalorder %s22, %s23
    %p34 = scmp.eq.s32.totalorder %s14, 0
    %p35 = por %p33, %p34
    %p36 = scmp.ne.s32.totalorder %s22, %s23
    %p37 = scmp.eq.s32.totalorder %s15, 2
    %p38 = por %p36, %p37
    %p40 = scmp.ne.s32.totalorder %s23, %s39
    %p41 = scmp.eq.s32.totalorder %s15, 0
    %p42 = por %p40, %p41
    %s43 = ssub.s32 %s9, %s16
    %p44 = scmp.eq.s32.totalorder %s43, 0
    %s46 = sadd.s32 %s45, 1
    %s47 = scalar_select %p44, %s45, %s46
    %p50 = pneg %p44
    %p51 = scmp.eq.s32.totalorder %s9, 2
    %p52 = por %p50, %p51
    %p53 = scmp.ne.s32.totalorder %s45, %s48
    %p54 = scmp.eq.s32.totalorder %s9, 0
    %p55 = por %p53, %p54
    %p56 = scmp.ne.s32.totalorder %s45, %s48
    %p57 = scmp.eq.s32.totalorder %s14, 2
    %p58 = por %p56, %p57
    %p59 = scmp.ne.s32.totalorder %s48, %s49
    %p60 = scmp.eq.s32.totalorder %s14, 0
    %p61 = por %p59, %p60
    %p62 = scmp.ne.s32.totalorder %s48, %s49
    %p63 = scmp.eq.s32.totalorder %s15, 2
    %p64 = por %p62, %p63
    %p66 = scmp.ne.s32.totalorder %s49, %s65
    %p67 = scmp.eq.s32.totalorder %s15, 0
    %p68 = por %p66, %p67
    %s69 = ssub.s32 %s9, %s16
    %p70 = scmp.eq.s32.totalorder %s69, 0
    %s72 = sadd.s32 %s71, 1
    %s73 = scalar_select %p70, %s71, %s72
    %p76 = pneg %p70
    %p77 = scmp.eq.s32.totalorder %s9, 2
    %p78 = por %p76, %p77
    %p79 = scmp.ne.s32.totalorder %s71, %s74
    %p80 = scmp.eq.s32.totalorder %s9, 0
    %p81 = por %p79, %p80
    %p82 = scmp.ne.s32.totalorder %s71, %s74
    %p83 = scmp.eq.s32.totalorder %s14, 2
    %p84 = por %p82, %p83
    %p85 = scmp.ne.s32.totalorder %s74, %s75
    %p86 = scmp.eq.s32.totalorder %s14, 0
    %p87 = por %p85, %p86
    %p88 = scmp.ne.s32.totalorder %s74, %s75
    %p89 = scmp.eq.s32.totalorder %s15, 2
    %p90 = por %p88, %p89
    %p92 = scmp.ne.s32.totalorder %s75, %s91
    %p93 = scmp.eq.s32.totalorder %s15, 0
    %p94 = por %p92, %p93
    %s95 = ssub.s32 %s9, %s16
    %p96 = scmp.eq.s32.totalorder %s95, 0
    %s98 = sadd.s32 %s97, 1
    %s99 = scalar_select %p96, %s97, %s98
    %p102 = pneg %p96
    %p103 = scmp.eq.s32.totalorder %s9, 2
    %p104 = por %p102, %p103
    %p105 = scmp.ne.s32.totalorder %s97, %s100
    %p106 = scmp.eq.s32.totalorder %s9, 0
    %p107 = por %p105, %p106
    %p108 = scmp.ne.s32.totalorder %s97, %s100
    %p109 = scmp.eq.s32.totalorder %s14, 2
    %p110 = por %p108, %p109
    %p111 = scmp.ne.s32.totalorder %s100, %s101
    %p112 = scmp.eq.s32.totalorder %s14, 0
    %p113 = por %p111, %p112
    %p114 = scmp.ne.s32.totalorder %s100, %s101
    %p115 = scmp.eq.s32.totalorder %s15, 2
    %p116 = por %p114, %p115
    %p118 = scmp.ne.s32.totalorder %s101, %s117
    %p119 = scmp.eq.s32.totalorder %s15, 0
    %p120 = por %p118, %p119
    %p121 = scmp.le.s32.totalorder 1, %s9
    %p122 = scmp.lt.s32.totalorder %s9, 4
    %p123 = pnand %p121, %p122
    %p124 = pneg %p123
    // Predicated region
    $region9: #{fwd.7} parent=5 // pred_check
      _
    $region10: #{fwd.7} parent=5 // pred_check_branch
      %126 = sbr.rel (%p123) target = $region12
    $region11: #{fwd.7} parent=5 // pred_region
      %s127 = ssub.s32 %s9, 1
    $region12: #{fwd.7} parent=5 // pred_fallthru
      _
    %p128 = scmp.lt.s32.totalorder %s9, 3
    // Predicated region
    $region13: #{fwd.7} parent=5 // pred_check
      %p129 = pneg %p128
    $region14: #{fwd.7} parent=5 // pred_check_branch
      %131 = sbr.rel (%p129) target = $region16
    $region15: #{fwd.7} parent=5 // pred_region
      // Predicated region
      $region17: #{fwd.7} parent=15 // pred_check
        %p132 = pneg %p29
      $region18: #{fwd.7} parent=15 // pred_check_branch
        %134 = sbr.rel (%p132) target = $region20
      $region19: #{fwd.7} parent=15 // pred_region
        %s135 = smul.u32 16, %s9
        %p136 = scmp.lt.s32.totalorder %s135, 47
        %s137 = scalar_select %p136, %s135, 47
        %s138 = smul.addr %s137, 8
        %s139 = scalar_lea.vmem %s0, %s138
        %s140 = smul.u32 16, %s9
      $region20: #{fwd.7} parent=15 // pred_fallthru
        _
      // Predicated region
      $region21: #{fwd.7} parent=15 // pred_check
        %p141 = pneg %p55
      $region22: #{fwd.7} parent=15 // pred_check_branch
        %143 = sbr.rel (%p141) target = $region24
      $region23: #{fwd.7} parent=15 // pred_region
        %s144 = smul.u32 16, %s9
        %p145 = scmp.lt.s32.totalorder %s144, 47
        %s146 = scalar_select %p145, %s144, 47
        %s147 = smul.addr %s146, 8
        %s148 = scalar_lea.vmem %s1, %s147
        %s149 = smul.u32 16, %s9
      $region24: #{fwd.7} parent=15 // pred_fallthru
        _
      // Predicated region
      $region25: #{fwd.7} parent=15 // pred_check
        %p150 = pneg %p81
      $region26: #{fwd.7} parent=15 // pred_check_branch
        %152 = sbr.rel (%p150) target = $region28
      $region27: #{fwd.7} parent=15 // pred_region
        %s153 = smul.u32 16, %s9
        %p154 = scmp.lt.s32.totalorder %s153, 47
        %s155 = scalar_select %p154, %s153, 47
        %s156 = smul.addr %s155, 8
        %s157 = scalar_lea.vmem %s2, %s156
        %s158 = smul.u32 16, %s9
      $region28: #{fwd.7} parent=15 // pred_fallthru
        _
    $region16: #{fwd.7} parent=5 // pred_fallthru
      _
    %p159 = scmp.le.s32.totalorder 1, %s9
    %p160 = scmp.lt.s32.totalorder %s9, 4
    %p161 = pnand %p159, %p160
    %p162 = pneg %p161
    // Predicated region
    $region29: #{fwd.7} parent=5 // pred_check
      _
    $region30: #{fwd.7} parent=5 // pred_check_branch
      %164 = sbr.rel (%p161) target = $region32
    $region31: #{fwd.7} parent=5 // pred_region
      %s165 = ssub.s32 %s9, 1
      %s166 = smul.u32 16, %s14
      %p167 = scmp.lt.s32.totalorder %s166, 47
      %s168 = scalar_select %p167, %s166, 47
      %s169 = smul.addr %s168, 8
      %s170 = scalar_lea.vmem %s0, %s169
      %p171 = pneg %p35
      %p172 = pneg %p32
      %s173 = smul.u32 16, %s14
      %p174 = scmp.lt.s32.totalorder %s173, 47
      %s175 = scalar_select %p174, %s173, 47
      %s176 = smul.addr %s175, 8
      %s177 = scalar_lea.vmem %s1, %s176
      %p178 = pneg %p61
      %p179 = pneg %p58
      %s180 = smul.u32 16, %s14
      %p181 = scmp.lt.s32.totalorder %s180, 47
      %s182 = scalar_select %p181, %s180, 47
      %s183 = smul.addr %s182, 8
      %s184 = scalar_lea.vmem %s2, %s183
      %p185 = pneg %p87
      %p186 = pneg %p84
      %p187 = pneg %p113
      %p188 = pneg %p110
      %s189 = smul.u32 16, %s14
      %p190 = scmp.lt.s32.totalorder %s189, 47
      %s191 = scalar_select %p190, %s189, 47
      %s192 = smul.addr %s191, 8
      %s193 = scalar_lea.vmem %s3, %s192
      %s194 = smul.u32 16, %s14
      %p195 = scmp.lt.s32.totalorder %s194, 47
      %s196 = scalar_select %p195, %s194, 47
      %s197 = smul.addr %s196, 8
      %s198 = scalar_lea.vmem %s0, %s197
      %s199 = smul.u32 16, %s14
      %s200 = smul.u32 16, %s14
      %p201 = scmp.lt.s32.totalorder %s200, 47
      %s202 = scalar_select %p201, %s200, 47
      %s203 = smul.addr %s202, 8
      %s204 = scalar_lea.vmem %s1, %s203
      %s205 = smul.u32 16, %s14
      %s206 = smul.u32 16, %s14
      %p207 = scmp.lt.s32.totalorder %s206, 47
      %s208 = scalar_select %p207, %s206, 47
      %s209 = smul.addr %s208, 8
      %s210 = scalar_lea.vmem %s2, %s209
      %s211 = smul.u32 16, %s14
      %s212 = smul.u32 16, %s14
      %p213 = scmp.lt.s32.totalorder %s212, 47
      %s214 = scalar_select %p213, %s212, 47
      %s215 = smul.addr %s214, 8
      %s216 = scalar_lea.vmem %s3, %s215
      %s217 = smul.u32 16, %s14
      %v218 = vld [vmem:[%s198] sm:$0xff]
      %v219 = vld [vmem:[%s198 + $0x8] sm:$0xff]
      %v220 = vld [vmem:[%s198 + $0x10] sm:$0xff]
      %v221 = vld [vmem:[%s198 + $0x18] sm:$0xff]
      %v222 = vld [vmem:[%s198 + $0x20] sm:$0xff]
      %v223 = vld [vmem:[%s198 + $0x28] sm:$0xff]
      %v224 = vld [vmem:[%s198 + $0x30] sm:$0xff]
      %v225 = vld [vmem:[%s198 + $0x38] sm:$0xff]
      %v226 = vld [vmem:[%s198 + $0x40] sm:$0xff]
      %v227 = vld [vmem:[%s198 + $0x48] sm:$0xff]
      %v228 = vld [vmem:[%s198 + $0x50] sm:$0xff]
      %v229 = vld [vmem:[%s198 + $0x58] sm:$0xff]
      %v230 = vld [vmem:[%s198 + $0x60] sm:$0xff]
      %v231 = vld [vmem:[%s198 + $0x68] sm:$0xff]
      %v232 = vld [vmem:[%s198 + $0x70] sm:$0xff]
      %v233 = vld [vmem:[%s198 + $0x78] sm:$0xff]
      %v234 = vmul.f32 %v218, %v218
      %v235 = vmul.f32 %v219, %v219
      %v236 = vmul.f32 %v220, %v220
      %v237 = vmul.f32 %v221, %v221
      %v238 = vmul.f32 %v222, %v222
      %v239 = vmul.f32 %v223, %v223
      %v240 = vmul.f32 %v224, %v224
      %v241 = vmul.f32 %v225, %v225
      %v242 = vmul.f32 %v226, %v226
      %v243 = vmul.f32 %v227, %v227
      %v244 = vmul.f32 %v228, %v228
      %v245 = vmul.f32 %v229, %v229
      %v246 = vmul.f32 %v230, %v230
      %v247 = vmul.f32 %v231, %v231
      %v248 = vmul.f32 %v232, %v232
      %v249 = vmul.f32 %v233, %v233
      %vm250 = vcmask 261120
      %v251 = vsel %vm250, %v234, 0.0
      %252 = vadd.xlane.f32.xlu0 %v251
      %v253 = vpop.xlane.xlu0 %252
      %v254 = vsel %vm250, %v235, 0.0
      %255 = vadd.xlane.f32.xlu0 %v254
      %v256 = vpop.xlane.xlu0 %255
      %v257 = vsel %vm250, %v236, 0.0
      %258 = vadd.xlane.f32.xlu0 %v257
      %v259 = vpop.xlane.xlu0 %258
      %v260 = vsel %vm250, %v237, 0.0
      %261 = vadd.xlane.f32.xlu0 %v260
      %v262 = vpop.xlane.xlu0 %261
      %v263 = vsel %vm250, %v238, 0.0
      %264 = vadd.xlane.f32.xlu0 %v263
      %v265 = vpop.xlane.xlu0 %264
      %v266 = vsel %vm250, %v239, 0.0
      %267 = vadd.xlane.f32.xlu0 %v266
      %v268 = vpop.xlane.xlu0 %267
      %v269 = vsel %vm250, %v240, 0.0
      %270 = vadd.xlane.f32.xlu0 %v269
      %v271 = vpop.xlane.xlu0 %270
      %v272 = vsel %vm250, %v241, 0.0
      %273 = vadd.xlane.f32.xlu0 %v272
      %v274 = vpop.xlane.xlu0 %273
      %v275 = vsel %vm250, %v242, 0.0
      %276 = vadd.xlane.f32.xlu0 %v275
      %v277 = vpop.xlane.xlu0 %276
      %v278 = vsel %vm250, %v243, 0.0
      %279 = vadd.xlane.f32.xlu0 %v278
      %v280 = vpop.xlane.xlu0 %279
      %v281 = vsel %vm250, %v244, 0.0
      %282 = vadd.xlane.f32.xlu0 %v281
      %v283 = vpop.xlane.xlu0 %282
      %v284 = vsel %vm250, %v245, 0.0
      %285 = vadd.xlane.f32.xlu0 %v284
      %v286 = vpop.xlane.xlu0 %285
      %v287 = vsel %vm250, %v246, 0.0
      %288 = vadd.xlane.f32.xlu0 %v287
      %v289 = vpop.xlane.xlu0 %288
      %v290 = vsel %vm250, %v247, 0.0
      %291 = vadd.xlane.f32.xlu0 %v290
      %v292 = vpop.xlane.xlu0 %291
      %v293 = vsel %vm250, %v248, 0.0
      %294 = vadd.xlane.f32.xlu0 %v293
      %v295 = vpop.xlane.xlu0 %294
      %v296 = vsel %vm250, %v249, 0.0
      %297 = vadd.xlane.f32.xlu0 %v296
      %v298 = vpop.xlane.xlu0 %297
      %v299 = vrsqrt.pop %v253
      %v300 = vmul.f32 %v299, %v253
      %v301 = vmul.f32 %v300, %v299
      %v302 = vmul.f32 0.5, %v301
      %v303 = vsub.f32 1.5, %v302
      %v304 = vmul.f32 %v299, %v303
      %v305 = vmul.f32 %v253, %v304
      %vm306 = vcmp.eq.f32.partialorder %v253, inf
      %v307 = vsel %vm306, %v253, %v305
      %vm308 = vcmp.eq.f32.partialorder %v253, 0.0
      %v309 = vand.u32 %v253, 2147483648
      %v310 = vsel %vm308, %v309, %v307
      %v311 = vrsqrt.pop %v256
      %v312 = vmul.f32 %v311, %v256
      %v313 = vmul.f32 %v312, %v311
      %v314 = vmul.f32 0.5, %v313
      %v315 = vsub.f32 1.5, %v314
      %v316 = vmul.f32 %v311, %v315
      %v317 = vmul.f32 %v256, %v316
      %vm318 = vcmp.eq.f32.partialorder %v256, inf
      %v319 = vsel %vm318, %v256, %v317
      %vm320 = vcmp.eq.f32.partialorder %v256, 0.0
      %v321 = vand.u32 %v256, 2147483648
      %v322 = vsel %vm320, %v321, %v319
      %v323 = vrsqrt.pop %v259
      %v324 = vmul.f32 %v323, %v259
      %v325 = vmul.f32 %v324, %v323
      %v326 = vmul.f32 0.5, %v325
      %v327 = vsub.f32 1.5, %v326
      %v328 = vmul.f32 %v323, %v327
      %v329 = vmul.f32 %v259, %v328
      %vm330 = vcmp.eq.f32.partialorder %v259, inf
      %v331 = vsel %vm330, %v259, %v329
      %vm332 = vcmp.eq.f32.partialorder %v259, 0.0
      %v333 = vand.u32 %v259, 2147483648
      %v334 = vsel %vm332, %v333, %v331
      %v335 = vrsqrt.pop %v262
      %v336 = vmul.f32 %v335, %v262
      %v337 = vmul.f32 %v336, %v335
      %v338 = vmul.f32 0.5, %v337
      %v339 = vsub.f32 1.5, %v338
      %v340 = vmul.f32 %v335, %v339
      %v341 = vmul.f32 %v262, %v340
      %vm342 = vcmp.eq.f32.partialorder %v262, inf
      %v343 = vsel %vm342, %v262, %v341
      %vm344 = vcmp.eq.f32.partialorder %v262, 0.0
      %v345 = vand.u32 %v262, 2147483648
      %v346 = vsel %vm344, %v345, %v343
      %v347 = vrsqrt.pop %v265
      %v348 = vmul.f32 %v347, %v265
      %v349 = vmul.f32 %v348, %v347
      %v350 = vmul.f32 0.5, %v349
      %v351 = vsub.f32 1.5, %v350
      %v352 = vmul.f32 %v347, %v351
      %v353 = vmul.f32 %v265, %v352
      %vm354 = vcmp.eq.f32.partialorder %v265, inf
      %v355 = vsel %vm354, %v265, %v353
      %vm356 = vcmp.eq.f32.partialorder %v265, 0.0
      %v357 = vand.u32 %v265, 2147483648
      %v358 = vsel %vm356, %v357, %v355
      %v359 = vrsqrt.pop %v268
      %v360 = vmul.f32 %v359, %v268
      %v361 = vmul.f32 %v360, %v359
      %v362 = vmul.f32 0.5, %v361
      %v363 = vsub.f32 1.5, %v362
      %v364 = vmul.f32 %v359, %v363
      %v365 = vmul.f32 %v268, %v364
      %vm366 = vcmp.eq.f32.partialorder %v268, inf
      %v367 = vsel %vm366, %v268, %v365
      %vm368 = vcmp.eq.f32.partialorder %v268, 0.0
      %v369 = vand.u32 %v268, 2147483648
      %v370 = vsel %vm368, %v369, %v367
      %v371 = vrsqrt.pop %v271
      %v372 = vmul.f32 %v371, %v271
      %v373 = vmul.f32 %v372, %v371
      %v374 = vmul.f32 0.5, %v373
      %v375 = vsub.f32 1.5, %v374
      %v376 = vmul.f32 %v371, %v375
      %v377 = vmul.f32 %v271, %v376
      %vm378 = vcmp.eq.f32.partialorder %v271, inf
      %v379 = vsel %vm378, %v271, %v377
      %vm380 = vcmp.eq.f32.partialorder %v271, 0.0
      %v381 = vand.u32 %v271, 2147483648
      %v382 = vsel %vm380, %v381, %v379
      %v383 = vrsqrt.pop %v274
      %v384 = vmul.f32 %v383, %v274
      %v385 = vmul.f32 %v384, %v383
      %v386 = vmul.f32 0.5, %v385
      %v387 = vsub.f32 1.5, %v386
      %v388 = vmul.f32 %v383, %v387
      %v389 = vmul.f32 %v274, %v388
      %vm390 = vcmp.eq.f32.partialorder %v274, inf
      %v391 = vsel %vm390, %v274, %v389
      %vm392 = vcmp.eq.f32.partialorder %v274, 0.0
      %v393 = vand.u32 %v274, 2147483648
      %v394 = vsel %vm392, %v393, %v391
      %v395 = vrsqrt.pop %v277
      %v396 = vmul.f32 %v395, %v277
      %v397 = vmul.f32 %v396, %v395
      %v398 = vmul.f32 0.5, %v397
      %v399 = vsub.f32 1.5, %v398
      %v400 = vmul.f32 %v395, %v399
      %v401 = vmul.f32 %v277, %v400
      %vm402 = vcmp.eq.f32.partialorder %v277, inf
      %v403 = vsel %vm402, %v277, %v401
      %vm404 = vcmp.eq.f32.partialorder %v277, 0.0
      %v405 = vand.u32 %v277, 2147483648
      %v406 = vsel %vm404, %v405, %v403
      %v407 = vrsqrt.pop %v280
      %v408 = vmul.f32 %v407, %v280
      %v409 = vmul.f32 %v408, %v407
      %v410 = vmul.f32 0.5, %v409
      %v411 = vsub.f32 1.5, %v410
      %v412 = vmul.f32 %v407, %v411
      %v413 = vmul.f32 %v280, %v412
      %vm414 = vcmp.eq.f32.partialorder %v280, inf
      %v415 = vsel %vm414, %v280, %v413
      %vm416 = vcmp.eq.f32.partialorder %v280, 0.0
      %v417 = vand.u32 %v280, 2147483648
      %v418 = vsel %vm416, %v417, %v415
      %v419 = vrsqrt.pop %v283
      %v420 = vmul.f32 %v419, %v283
      %v421 = vmul.f32 %v420, %v419
      %v422 = vmul.f32 0.5, %v421
      %v423 = vsub.f32 1.5, %v422
      %v424 = vmul.f32 %v419, %v423
      %v425 = vmul.f32 %v283, %v424
      %vm426 = vcmp.eq.f32.partialorder %v283, inf
      %v427 = vsel %vm426, %v283, %v425
      %vm428 = vcmp.eq.f32.partialorder %v283, 0.0
      %v429 = vand.u32 %v283, 2147483648
      %v430 = vsel %vm428, %v429, %v427
      %v431 = vrsqrt.pop %v286
      %v432 = vmul.f32 %v431, %v286
      %v433 = vmul.f32 %v432, %v431
      %v434 = vmul.f32 0.5, %v433
      %v435 = vsub.f32 1.5, %v434
      %v436 = vmul.f32 %v431, %v435
      %v437 = vmul.f32 %v286, %v436
      %vm438 = vcmp.eq.f32.partialorder %v286, inf
      %v439 = vsel %vm438, %v286, %v437
      %vm440 = vcmp.eq.f32.partialorder %v286, 0.0
      %v441 = vand.u32 %v286, 2147483648
      %v442 = vsel %vm440, %v441, %v439
      %v443 = vrsqrt.pop %v289
      %v444 = vmul.f32 %v443, %v289
      %v445 = vmul.f32 %v444, %v443
      %v446 = vmul.f32 0.5, %v445
      %v447 = vsub.f32 1.5, %v446
      %v448 = vmul.f32 %v443, %v447
      %v449 = vmul.f32 %v289, %v448
      %vm450 = vcmp.eq.f32.partialorder %v289, inf
      %v451 = vsel %vm450, %v289, %v449
      %vm452 = vcmp.eq.f32.partialorder %v289, 0.0
      %v453 = vand.u32 %v289, 2147483648
      %v454 = vsel %vm452, %v453, %v451
      %v455 = vrsqrt.pop %v292
      %v456 = vmul.f32 %v455, %v292
      %v457 = vmul.f32 %v456, %v455
      %v458 = vmul.f32 0.5, %v457
      %v459 = vsub.f32 1.5, %v458
      %v460 = vmul.f32 %v455, %v459
      %v461 = vmul.f32 %v292, %v460
      %vm462 = vcmp.eq.f32.partialorder %v292, inf
      %v463 = vsel %vm462, %v292, %v461
      %vm464 = vcmp.eq.f32.partialorder %v292, 0.0
      %v465 = vand.u32 %v292, 2147483648
      %v466 = vsel %vm464, %v465, %v463
      %v467 = vrsqrt.pop %v295
      %v468 = vmul.f32 %v467, %v295
      %v469 = vmul.f32 %v468, %v467
      %v470 = vmul.f32 0.5, %v469
      %v471 = vsub.f32 1.5, %v470
      %v472 = vmul.f32 %v467, %v471
      %v473 = vmul.f32 %v295, %v472
      %vm474 = vcmp.eq.f32.partialorder %v295, inf
      %v475 = vsel %vm474, %v295, %v473
      %vm476 = vcmp.eq.f32.partialorder %v295, 0.0
      %v477 = vand.u32 %v295, 2147483648
      %v478 = vsel %vm476, %v477, %v475
      %v479 = vrsqrt.pop %v298
      %v480 = vmul.f32 %v479, %v298
      %v481 = vmul.f32 %v480, %v479
      %v482 = vmul.f32 0.5, %v481
      %v483 = vsub.f32 1.5, %v482
      %v484 = vmul.f32 %v479, %v483
      %v485 = vmul.f32 %v298, %v484
      %vm486 = vcmp.eq.f32.partialorder %v298, inf
      %v487 = vsel %vm486, %v298, %v485
      %vm488 = vcmp.eq.f32.partialorder %v298, 0.0
      %v489 = vand.u32 %v298, 2147483648
      %v490 = vsel %vm488, %v489, %v487
      %v491 = vmax.f32 %v310, 1e-12
      %v492 = vmax.f32 %v322, 1e-12
      %v493 = vmax.f32 %v334, 1e-12
      %v494 = vmax.f32 %v346, 1e-12
      %v495 = vmax.f32 %v358, 1e-12
      %v496 = vmax.f32 %v370, 1e-12
      %v497 = vmax.f32 %v382, 1e-12
      %v498 = vmax.f32 %v394, 1e-12
      %v499 = vmax.f32 %v406, 1e-12
      %v500 = vmax.f32 %v418, 1e-12
      %v501 = vmax.f32 %v430, 1e-12
      %v502 = vmax.f32 %v442, 1e-12
      %v503 = vmax.f32 %v454, 1e-12
      %v504 = vmax.f32 %v466, 1e-12
      %v505 = vmax.f32 %v478, 1e-12
      %v506 = vmax.f32 %v490, 1e-12
      %v507 = vrcp.pop %v491
      %v508 = vmul.f32 %v491, %v507
      %v509 = vsub.f32 1.0, %v508
      %v510 = vmul.f32 %v507, %v509
      %v511 = vadd.f32 %v507, %v510
      %vm512 = vweird.f32 %v491
      %vm513 = vweird.f32 %v507
      %vm514 = vmor %vm512, %vm513
      %v515 = vsel %vm514, %v507, %v511
      %v516 = vand.u32 2147483647, %v491
      %vm517 = vcmp.eq.f32.partialorder %v516, 8.507059e+37
      %v518 = vand.u32 %v491, 2147483648
      %v519 = vor.u32 1.1754944e-38, %v518
      %v520 = vsel %vm517, %v519, %v515
      %v521 = vmul.f32 %v218, %v520
      %v522 = vrcp.pop %v492
      %v523 = vmul.f32 %v492, %v522
      %v524 = vsub.f32 1.0, %v523
      %v525 = vmul.f32 %v522, %v524
      %v526 = vadd.f32 %v522, %v525
      %vm527 = vweird.f32 %v492
      %vm528 = vweird.f32 %v522
      %vm529 = vmor %vm527, %vm528
      %v530 = vsel %vm529, %v522, %v526
      %v531 = vand.u32 2147483647, %v492
      %vm532 = vcmp.eq.f32.partialorder %v531, 8.507059e+37
      %v533 = vand.u32 %v492, 2147483648
      %v534 = vor.u32 1.1754944e-38, %v533
      %v535 = vsel %vm532, %v534, %v530
      %v536 = vmul.f32 %v219, %v535
      %v537 = vrcp.pop %v493
      %v538 = vmul.f32 %v493, %v537
      %v539 = vsub.f32 1.0, %v538
      %v540 = vmul.f32 %v537, %v539
      %v541 = vadd.f32 %v537, %v540
      %vm542 = vweird.f32 %v493
      %vm543 = vweird.f32 %v537
      %vm544 = vmor %vm542, %vm543
      %v545 = vsel %vm544, %v537, %v541
      %v546 = vand.u32 2147483647, %v493
      %vm547 = vcmp.eq.f32.partialorder %v546, 8.507059e+37
      %v548 = vand.u32 %v493, 2147483648
      %v549 = vor.u32 1.1754944e-38, %v548
      %v550 = vsel %vm547, %v549, %v545
      %v551 = vmul.f32 %v220, %v550
      %v552 = vrcp.pop %v494
      %v553 = vmul.f32 %v494, %v552
      %v554 = vsub.f32 1.0, %v553
      %v555 = vmul.f32 %v552, %v554
      %v556 = vadd.f32 %v552, %v555
      %vm557 = vweird.f32 %v494
      %vm558 = vweird.f32 %v552
      %vm559 = vmor %vm557, %vm558
      %v560 = vsel %vm559, %v552, %v556
      %v561 = vand.u32 2147483647, %v494
      %vm562 = vcmp.eq.f32.partialorder %v561, 8.507059e+37
      %v563 = vand.u32 %v494, 2147483648
      %v564 = vor.u32 1.1754944e-38, %v563
      %v565 = vsel %vm562, %v564, %v560
      %v566 = vmul.f32 %v221, %v565
      %v567 = vrcp.pop %v495
      %v568 = vmul.f32 %v495, %v567
      %v569 = vsub.f32 1.0, %v568
      %v570 = vmul.f32 %v567, %v569
      %v571 = vadd.f32 %v567, %v570
      %vm572 = vweird.f32 %v495
      %vm573 = vweird.f32 %v567
      %vm574 = vmor %vm572, %vm573
      %v575 = vsel %vm574, %v567, %v571
      %v576 = vand.u32 2147483647, %v495
      %vm577 = vcmp.eq.f32.partialorder %v576, 8.507059e+37
      %v578 = vand.u32 %v495, 2147483648
      %v579 = vor.u32 1.1754944e-38, %v578
      %v580 = vsel %vm577, %v579, %v575
      %v581 = vmul.f32 %v222, %v580
      %v582 = vrcp.pop %v496
      %v583 = vmul.f32 %v496, %v582
      %v584 = vsub.f32 1.0, %v583
      %v585 = vmul.f32 %v582, %v584
      %v586 = vadd.f32 %v582, %v585
      %vm587 = vweird.f32 %v496
      %vm588 = vweird.f32 %v582
      %vm589 = vmor %vm587, %vm588
      %v590 = vsel %vm589, %v582, %v586
      %v591 = vand.u32 2147483647, %v496
      %vm592 = vcmp.eq.f32.partialorder %v591, 8.507059e+37
      %v593 = vand.u32 %v496, 2147483648
      %v594 = vor.u32 1.1754944e-38, %v593
      %v595 = vsel %vm592, %v594, %v590
      %v596 = vmul.f32 %v223, %v595
      %v597 = vrcp.pop %v497
      %v598 = vmul.f32 %v497, %v597
      %v599 = vsub.f32 1.0, %v598
      %v600 = vmul.f32 %v597, %v599
      %v601 = vadd.f32 %v597, %v600
      %vm602 = vweird.f32 %v497
      %vm603 = vweird.f32 %v597
      %vm604 = vmor %vm602, %vm603
      %v605 = vsel %vm604, %v597, %v601
      %v606 = vand.u32 2147483647, %v497
      %vm607 = vcmp.eq.f32.partialorder %v606, 8.507059e+37
      %v608 = vand.u32 %v497, 2147483648
      %v609 = vor.u32 1.1754944e-38, %v608
      %v610 = vsel %vm607, %v609, %v605
      %v611 = vmul.f32 %v224, %v610
      %v612 = vrcp.pop %v498
      %v613 = vmul.f32 %v498, %v612
      %v614 = vsub.f32 1.0, %v613
      %v615 = vmul.f32 %v612, %v614
      %v616 = vadd.f32 %v612, %v615
      %vm617 = vweird.f32 %v498
      %vm618 = vweird.f32 %v612
      %vm619 = vmor %vm617, %vm618
      %v620 = vsel %vm619, %v612, %v616
      %v621 = vand.u32 2147483647, %v498
      %vm622 = vcmp.eq.f32.partialorder %v621, 8.507059e+37
      %v623 = vand.u32 %v498, 2147483648
      %v624 = vor.u32 1.1754944e-38, %v623
      %v625 = vsel %vm622, %v624, %v620
      %v626 = vmul.f32 %v225, %v625
      %v627 = vrcp.pop %v499
      %v628 = vmul.f32 %v499, %v627
      %v629 = vsub.f32 1.0, %v628
      %v630 = vmul.f32 %v627, %v629
      %v631 = vadd.f32 %v627, %v630
      %vm632 = vweird.f32 %v499
      %vm633 = vweird.f32 %v627
      %vm634 = vmor %vm632, %vm633
      %v635 = vsel %vm634, %v627, %v631
      %v636 = vand.u32 2147483647, %v499
      %vm637 = vcmp.eq.f32.partialorder %v636, 8.507059e+37
      %v638 = vand.u32 %v499, 2147483648
      %v639 = vor.u32 1.1754944e-38, %v638
      %v640 = vsel %vm637, %v639, %v635
      %v641 = vmul.f32 %v226, %v640
      %v642 = vrcp.pop %v500
      %v643 = vmul.f32 %v500, %v642
      %v644 = vsub.f32 1.0, %v643
      %v645 = vmul.f32 %v642, %v644
      %v646 = vadd.f32 %v642, %v645
      %vm647 = vweird.f32 %v500
      %vm648 = vweird.f32 %v642
      %vm649 = vmor %vm647, %vm648
      %v650 = vsel %vm649, %v642, %v646
      %v651 = vand.u32 2147483647, %v500
      %vm652 = vcmp.eq.f32.partialorder %v651, 8.507059e+37
      %v653 = vand.u32 %v500, 2147483648
      %v654 = vor.u32 1.1754944e-38, %v653
      %v655 = vsel %vm652, %v654, %v650
      %v656 = vmul.f32 %v227, %v655
      %v657 = vrcp.pop %v501
      %v658 = vmul.f32 %v501, %v657
      %v659 = vsub.f32 1.0, %v658
      %v660 = vmul.f32 %v657, %v659
      %v661 = vadd.f32 %v657, %v660
      %vm662 = vweird.f32 %v501
      %vm663 = vweird.f32 %v657
      %vm664 = vmor %vm662, %vm663
      %v665 = vsel %vm664, %v657, %v661
      %v666 = vand.u32 2147483647, %v501
      %vm667 = vcmp.eq.f32.partialorder %v666, 8.507059e+37
      %v668 = vand.u32 %v501, 2147483648
      %v669 = vor.u32 1.1754944e-38, %v668
      %v670 = vsel %vm667, %v669, %v665
      %v671 = vmul.f32 %v228, %v670
      %v672 = vrcp.pop %v502
      %v673 = vmul.f32 %v502, %v672
      %v674 = vsub.f32 1.0, %v673
      %v675 = vmul.f32 %v672, %v674
      %v676 = vadd.f32 %v672, %v675
      %vm677 = vweird.f32 %v502
      %vm678 = vweird.f32 %v672
      %vm679 = vmor %vm677, %vm678
      %v680 = vsel %vm679, %v672, %v676
      %v681 = vand.u32 2147483647, %v502
      %vm682 = vcmp.eq.f32.partialorder %v681, 8.507059e+37
      %v683 = vand.u32 %v502, 2147483648
      %v684 = vor.u32 1.1754944e-38, %v683
      %v685 = vsel %vm682, %v684, %v680
      %v686 = vmul.f32 %v229, %v685
      %v687 = vrcp.pop %v503
      %v688 = vmul.f32 %v503, %v687
      %v689 = vsub.f32 1.0, %v688
      %v690 = vmul.f32 %v687, %v689
      %v691 = vadd.f32 %v687, %v690
      %vm692 = vweird.f32 %v503
      %vm693 = vweird.f32 %v687
      %vm694 = vmor %vm692, %vm693
      %v695 = vsel %vm694, %v687, %v691
      %v696 = vand.u32 2147483647, %v503
      %vm697 = vcmp.eq.f32.partialorder %v696, 8.507059e+37
      %v698 = vand.u32 %v503, 2147483648
      %v699 = vor.u32 1.1754944e-38, %v698
      %v700 = vsel %vm697, %v699, %v695
      %v701 = vmul.f32 %v230, %v700
      %v702 = vrcp.pop %v504
      %v703 = vmul.f32 %v504, %v702
      %v704 = vsub.f32 1.0, %v703
      %v705 = vmul.f32 %v702, %v704
      %v706 = vadd.f32 %v702, %v705
      %vm707 = vweird.f32 %v504
      %vm708 = vweird.f32 %v702
      %vm709 = vmor %vm707, %vm708
      %v710 = vsel %vm709, %v702, %v706
      %v711 = vand.u32 2147483647, %v504
      %vm712 = vcmp.eq.f32.partialorder %v711, 8.507059e+37
      %v713 = vand.u32 %v504, 2147483648
      %v714 = vor.u32 1.1754944e-38, %v713
      %v715 = vsel %vm712, %v714, %v710
      %v716 = vmul.f32 %v231, %v715
      %v717 = vrcp.pop %v505
      %v718 = vmul.f32 %v505, %v717
      %v719 = vsub.f32 1.0, %v718
      %v720 = vmul.f32 %v717, %v719
      %v721 = vadd.f32 %v717, %v720
      %vm722 = vweird.f32 %v505
      %vm723 = vweird.f32 %v717
      %vm724 = vmor %vm722, %vm723
      %v725 = vsel %vm724, %v717, %v721
      %v726 = vand.u32 2147483647, %v505
      %vm727 = vcmp.eq.f32.partialorder %v726, 8.507059e+37
      %v728 = vand.u32 %v505, 2147483648
      %v729 = vor.u32 1.1754944e-38, %v728
      %v730 = vsel %vm727, %v729, %v725
      %v731 = vmul.f32 %v232, %v730
      %v732 = vrcp.pop %v506
      %v733 = vmul.f32 %v506, %v732
      %v734 = vsub.f32 1.0, %v733
      %v735 = vmul.f32 %v732, %v734
      %v736 = vadd.f32 %v732, %v735
      %vm737 = vweird.f32 %v506
      %vm738 = vweird.f32 %v732
      %vm739 = vmor %vm737, %vm738
      %v740 = vsel %vm739, %v732, %v736
      %v741 = vand.u32 2147483647, %v506
      %vm742 = vcmp.eq.f32.partialorder %v741, 8.507059e+37
      %v743 = vand.u32 %v506, 2147483648
      %v744 = vor.u32 1.1754944e-38, %v743
      %v745 = vsel %vm742, %v744, %v740
      %v746 = vmul.f32 %v233, %v745
      %747 = vst.msk [vmem:[%s216] sm:$0xff] %vm250, %v521
      %748 = vst.msk [vmem:[%s216 + $0x8] sm:$0xff] %vm250, %v536
      %749 = vst.msk [vmem:[%s216 + $0x10] sm:$0xff] %vm250, %v551
      %750 = vst.msk [vmem:[%s216 + $0x18] sm:$0xff] %vm250, %v566
      %751 = vst.msk [vmem:[%s216 + $0x20] sm:$0xff] %vm250, %v581
      %752 = vst.msk [vmem:[%s216 + $0x28] sm:$0xff] %vm250, %v596
      %753 = vst.msk [vmem:[%s216 + $0x30] sm:$0xff] %vm250, %v611
      %754 = vst.msk [vmem:[%s216 + $0x38] sm:$0xff] %vm250, %v626
      %755 = vst.msk [vmem:[%s216 + $0x40] sm:$0xff] %vm250, %v641
      %756 = vst.msk [vmem:[%s216 + $0x48] sm:$0xff] %vm250, %v656
      %757 = vst.msk [vmem:[%s216 + $0x50] sm:$0xff] %vm250, %v671
      %758 = vst.msk [vmem:[%s216 + $0x58] sm:$0xff] %vm250, %v686
      %759 = vst.msk [vmem:[%s216 + $0x60] sm:$0xff] %vm250, %v701
      %760 = vst.msk [vmem:[%s216 + $0x68] sm:$0xff] %vm250, %v716
      %761 = vst.msk [vmem:[%s216 + $0x70] sm:$0xff] %vm250, %v731
      %762 = vst.msk [vmem:[%s216 + $0x78] sm:$0xff] %vm250, %v746
      %v763 = vld [vmem:[%s204] sm:$0xff]
      %v764 = vld [vmem:[%s204 + $0x8] sm:$0xff]
      %v765 = vld [vmem:[%s204 + $0x10] sm:$0xff]
      %v766 = vld [vmem:[%s204 + $0x18] sm:$0xff]
      %v767 = vld [vmem:[%s204 + $0x20] sm:$0xff]
      %v768 = vld [vmem:[%s204 + $0x28] sm:$0xff]
      %v769 = vld [vmem:[%s204 + $0x30] sm:$0xff]
      %v770 = vld [vmem:[%s204 + $0x38] sm:$0xff]
      %v771 = vld [vmem:[%s204 + $0x40] sm:$0xff]
      %v772 = vld [vmem:[%s204 + $0x48] sm:$0xff]
      %v773 = vld [vmem:[%s204 + $0x50] sm:$0xff]
      %v774 = vld [vmem:[%s204 + $0x58] sm:$0xff]
      %v775 = vld [vmem:[%s204 + $0x60] sm:$0xff]
      %v776 = vld [vmem:[%s204 + $0x68] sm:$0xff]
      %v777 = vld [vmem:[%s204 + $0x70] sm:$0xff]
      %v778 = vld [vmem:[%s204 + $0x78] sm:$0xff]
      %v779 = vxor.u32 %v763, 2147483648
      %v780 = vxor.u32 %v764, 2147483648
      %v781 = vxor.u32 %v765, 2147483648
      %v782 = vxor.u32 %v766, 2147483648
      %v783 = vxor.u32 %v767, 2147483648
      %v784 = vxor.u32 %v768, 2147483648
      %v785 = vxor.u32 %v769, 2147483648
      %v786 = vxor.u32 %v770, 2147483648
      %v787 = vxor.u32 %v771, 2147483648
      %v788 = vxor.u32 %v772, 2147483648
      %v789 = vxor.u32 %v773, 2147483648
      %v790 = vxor.u32 %v774, 2147483648
      %v791 = vxor.u32 %v775, 2147483648
      %v792 = vxor.u32 %v776, 2147483648
      %v793 = vxor.u32 %v777, 2147483648
      %v794 = vxor.u32 %v778, 2147483648
      %v795 = vmul.f32 %v779, 1.442695
      %v796 = vpow.pop %v795
      %v797 = vmul.f32 %v780, 1.442695
      %v798 = vpow.pop %v797
      %v799 = vmul.f32 %v781, 1.442695
      %v800 = vpow.pop %v799
      %v801 = vmul.f32 %v782, 1.442695
      %v802 = vpow.pop %v801
      %v803 = vmul.f32 %v783, 1.442695
      %v804 = vpow.pop %v803
      %v805 = vmul.f32 %v784, 1.442695
      %v806 = vpow.pop %v805
      %v807 = vmul.f32 %v785, 1.442695
      %v808 = vpow.pop %v807
      %v809 = vmul.f32 %v786, 1.442695
      %v810 = vpow.pop %v809
      %v811 = vmul.f32 %v787, 1.442695
      %v812 = vpow.pop %v811
      %v813 = vmul.f32 %v788, 1.442695
      %v814 = vpow.pop %v813
      %v815 = vmul.f32 %v789, 1.442695
      %v816 = vpow.pop %v815
      %v817 = vmul.f32 %v790, 1.442695
      %v818 = vpow.pop %v817
      %v819 = vmul.f32 %v791, 1.442695
      %v820 = vpow.pop %v819
      %v821 = vmul.f32 %v792, 1.442695
      %v822 = vpow.pop %v821
      %v823 = vmul.f32 %v793, 1.442695
      %v824 = vpow.pop %v823
      %v825 = vmul.f32 %v794, 1.442695
      %v826 = vpow.pop %v825
      %v827 = vadd.f32 %v796, 1.0
      %v828 = vadd.f32 %v798, 1.0
      %v829 = vadd.f32 %v800, 1.0
      %v830 = vadd.f32 %v802, 1.0
      %v831 = vadd.f32 %v804, 1.0
      %v832 = vadd.f32 %v806, 1.0
      %v833 = vadd.f32 %v808, 1.0
      %v834 = vadd.f32 %v810, 1.0
      %v835 = vadd.f32 %v812, 1.0
      %v836 = vadd.f32 %v814, 1.0
      %v837 = vadd.f32 %v816, 1.0
      %v838 = vadd.f32 %v818, 1.0
      %v839 = vadd.f32 %v820, 1.0
      %v840 = vadd.f32 %v822, 1.0
      %v841 = vadd.f32 %v824, 1.0
      %v842 = vadd.f32 %v826, 1.0
      %v843 = vrcp.pop %v827
      %v844 = vmul.f32 %v827, %v843
      %v845 = vsub.f32 1.0, %v844
      %v846 = vmul.f32 %v843, %v845
      %v847 = vadd.f32 %v843, %v846
      %vm848 = vweird.f32 %v827
      %vm849 = vweird.f32 %v843
      %vm850 = vmor %vm848, %vm849
      %v851 = vsel %vm850, %v843, %v847
      %v852 = vand.u32 2147483647, %v827
      %vm853 = vcmp.eq.f32.partialorder %v852, 8.507059e+37
      %v854 = vand.u32 %v827, 2147483648
      %v855 = vor.u32 1.1754944e-38, %v854
      %v856 = vsel %vm853, %v855, %v851
      %v857 = vmul.f32 1.0, %v856
      %v858 = vrcp.pop %v828
      %v859 = vmul.f32 %v828, %v858
      %v860 = vsub.f32 1.0, %v859
      %v861 = vmul.f32 %v858, %v860
      %v862 = vadd.f32 %v858, %v861
      %vm863 = vweird.f32 %v828
      %vm864 = vweird.f32 %v858
      %vm865 = vmor %vm863, %vm864
      %v866 = vsel %vm865, %v858, %v862
      %v867 = vand.u32 2147483647, %v828
      %vm868 = vcmp.eq.f32.partialorder %v867, 8.507059e+37
      %v869 = vand.u32 %v828, 2147483648
      %v870 = vor.u32 1.1754944e-38, %v869
      %v871 = vsel %vm868, %v870, %v866
      %v872 = vmul.f32 1.0, %v871
      %v873 = vrcp.pop %v829
      %v874 = vmul.f32 %v829, %v873
      %v875 = vsub.f32 1.0, %v874
      %v876 = vmul.f32 %v873, %v875
      %v877 = vadd.f32 %v873, %v876
      %vm878 = vweird.f32 %v829
      %vm879 = vweird.f32 %v873
      %vm880 = vmor %vm878, %vm879
      %v881 = vsel %vm880, %v873, %v877
      %v882 = vand.u32 2147483647, %v829
      %vm883 = vcmp.eq.f32.partialorder %v882, 8.507059e+37
      %v884 = vand.u32 %v829, 2147483648
      %v885 = vor.u32 1.1754944e-38, %v884
      %v886 = vsel %vm883, %v885, %v881
      %v887 = vmul.f32 1.0, %v886
      %v888 = vrcp.pop %v830
      %v889 = vmul.f32 %v830, %v888
      %v890 = vsub.f32 1.0, %v889
      %v891 = vmul.f32 %v888, %v890
      %v892 = vadd.f32 %v888, %v891
      %vm893 = vweird.f32 %v830
      %vm894 = vweird.f32 %v888
      %vm895 = vmor %vm893, %vm894
      %v896 = vsel %vm895, %v888, %v892
      %v897 = vand.u32 2147483647, %v830
      %vm898 = vcmp.eq.f32.partialorder %v897, 8.507059e+37
      %v899 = vand.u32 %v830, 2147483648
      %v900 = vor.u32 1.1754944e-38, %v899
      %v901 = vsel %vm898, %v900, %v896
      %v902 = vmul.f32 1.0, %v901
      %v903 = vrcp.pop %v831
      %v904 = vmul.f32 %v831, %v903
      %v905 = vsub.f32 1.0, %v904
      %v906 = vmul.f32 %v903, %v905
      %v907 = vadd.f32 %v903, %v906
      %vm908 = vweird.f32 %v831
      %vm909 = vweird.f32 %v903
      %vm910 = vmor %vm908, %vm909
      %v911 = vsel %vm910, %v903, %v907
      %v912 = vand.u32 2147483647, %v831
      %vm913 = vcmp.eq.f32.partialorder %v912, 8.507059e+37
      %v914 = vand.u32 %v831, 2147483648
      %v915 = vor.u32 1.1754944e-38, %v914
      %v916 = vsel %vm913, %v915, %v911
      %v917 = vmul.f32 1.0, %v916
      %v918 = vrcp.pop %v832
      %v919 = vmul.f32 %v832, %v918
      %v920 = vsub.f32 1.0, %v919
      %v921 = vmul.f32 %v918, %v920
      %v922 = vadd.f32 %v918, %v921
      %vm923 = vweird.f32 %v832
      %vm924 = vweird.f32 %v918
      %vm925 = vmor %vm923, %vm924
      %v926 = vsel %vm925, %v918, %v922
      %v927 = vand.u32 2147483647, %v832
      %vm928 = vcmp.eq.f32.partialorder %v927, 8.507059e+37
      %v929 = vand.u32 %v832, 2147483648
      %v930 = vor.u32 1.1754944e-38, %v929
      %v931 = vsel %vm928, %v930, %v926
      %v932 = vmul.f32 1.0, %v931
      %v933 = vrcp.pop %v833
      %v934 = vmul.f32 %v833, %v933
      %v935 = vsub.f32 1.0, %v934
      %v936 = vmul.f32 %v933, %v935
      %v937 = vadd.f32 %v933, %v936
      %vm938 = vweird.f32 %v833
      %vm939 = vweird.f32 %v933
      %vm940 = vmor %vm938, %vm939
      %v941 = vsel %vm940, %v933, %v937
      %v942 = vand.u32 2147483647, %v833
      %vm943 = vcmp.eq.f32.partialorder %v942, 8.507059e+37
      %v944 = vand.u32 %v833, 2147483648
      %v945 = vor.u32 1.1754944e-38, %v944
      %v946 = vsel %vm943, %v945, %v941
      %v947 = vmul.f32 1.0, %v946
      %v948 = vrcp.pop %v834
      %v949 = vmul.f32 %v834, %v948
      %v950 = vsub.f32 1.0, %v949
      %v951 = vmul.f32 %v948, %v950
      %v952 = vadd.f32 %v948, %v951
      %vm953 = vweird.f32 %v834
      %vm954 = vweird.f32 %v948
      %vm955 = vmor %vm953, %vm954
      %v956 = vsel %vm955, %v948, %v952
      %v957 = vand.u32 2147483647, %v834
      %vm958 = vcmp.eq.f32.partialorder %v957, 8.507059e+37
      %v959 = vand.u32 %v834, 2147483648
      %v960 = vor.u32 1.1754944e-38, %v959
      %v961 = vsel %vm958, %v960, %v956
      %v962 = vmul.f32 1.0, %v961
      %v963 = vrcp.pop %v835
      %v964 = vmul.f32 %v835, %v963
      %v965 = vsub.f32 1.0, %v964
      %v966 = vmul.f32 %v963, %v965
      %v967 = vadd.f32 %v963, %v966
      %vm968 = vweird.f32 %v835
      %vm969 = vweird.f32 %v963
      %vm970 = vmor %vm968, %vm969
      %v971 = vsel %vm970, %v963, %v967
      %v972 = vand.u32 2147483647, %v835
      %vm973 = vcmp.eq.f32.partialorder %v972, 8.507059e+37
      %v974 = vand.u32 %v835, 2147483648
      %v975 = vor.u32 1.1754944e-38, %v974
      %v976 = vsel %vm973, %v975, %v971
      %v977 = vmul.f32 1.0, %v976
      %v978 = vrcp.pop %v836
      %v979 = vmul.f32 %v836, %v978
      %v980 = vsub.f32 1.0, %v979
      %v981 = vmul.f32 %v978, %v980
      %v982 = vadd.f32 %v978, %v981
      %vm983 = vweird.f32 %v836
      %vm984 = vweird.f32 %v978
      %vm985 = vmor %vm983, %vm984
      %v986 = vsel %vm985, %v978, %v982
      %v987 = vand.u32 2147483647, %v836
      %vm988 = vcmp.eq.f32.partialorder %v987, 8.507059e+37
      %v989 = vand.u32 %v836, 2147483648
      %v990 = vor.u32 1.1754944e-38, %v989
      %v991 = vsel %vm988, %v990, %v986
      %v992 = vmul.f32 1.0, %v991
      %v993 = vrcp.pop %v837
      %v994 = vmul.f32 %v837, %v993
      %v995 = vsub.f32 1.0, %v994
      %v996 = vmul.f32 %v993, %v995
      %v997 = vadd.f32 %v993, %v996
      %vm998 = vweird.f32 %v837
      %vm999 = vweird.f32 %v993
      %vm1000 = vmor %vm998, %vm999
      %v1001 = vsel %vm1000, %v993, %v997
      %v1002 = vand.u32 2147483647, %v837
      %vm1003 = vcmp.eq.f32.partialorder %v1002, 8.507059e+37
      %v1004 = vand.u32 %v837, 2147483648
      %v1005 = vor.u32 1.1754944e-38, %v1004
      %v1006 = vsel %vm1003, %v1005, %v1001
      %v1007 = vmul.f32 1.0, %v1006
      %v1008 = vrcp.pop %v838
      %v1009 = vmul.f32 %v838, %v1008
      %v1010 = vsub.f32 1.0, %v1009
      %v1011 = vmul.f32 %v1008, %v1010
      %v1012 = vadd.f32 %v1008, %v1011
      %vm1013 = vweird.f32 %v838
      %vm1014 = vweird.f32 %v1008
      %vm1015 = vmor %vm1013, %vm1014
      %v1016 = vsel %vm1015, %v1008, %v1012
      %v1017 = vand.u32 2147483647, %v838
      %vm1018 = vcmp.eq.f32.partialorder %v1017, 8.507059e+37
      %v1019 = vand.u32 %v838, 2147483648
      %v1020 = vor.u32 1.1754944e-38, %v1019
      %v1021 = vsel %vm1018, %v1020, %v1016
      %v1022 = vmul.f32 1.0, %v1021
      %v1023 = vrcp.pop %v839
      %v1024 = vmul.f32 %v839, %v1023
      %v1025 = vsub.f32 1.0, %v1024
      %v1026 = vmul.f32 %v1023, %v1025
      %v1027 = vadd.f32 %v1023, %v1026
      %vm1028 = vweird.f32 %v839
      %vm1029 = vweird.f32 %v1023
      %vm1030 = vmor %vm1028, %vm1029
      %v1031 = vsel %vm1030, %v1023, %v1027
      %v1032 = vand.u32 2147483647, %v839
      %vm1033 = vcmp.eq.f32.partialorder %v1032, 8.507059e+37
      %v1034 = vand.u32 %v839, 2147483648
      %v1035 = vor.u32 1.1754944e-38, %v1034
      %v1036 = vsel %vm1033, %v1035, %v1031
      %v1037 = vmul.f32 1.0, %v1036
      %v1038 = vrcp.pop %v840
      %v1039 = vmul.f32 %v840, %v1038
      %v1040 = vsub.f32 1.0, %v1039
      %v1041 = vmul.f32 %v1038, %v1040
      %v1042 = vadd.f32 %v1038, %v1041
      %vm1043 = vweird.f32 %v840
      %vm1044 = vweird.f32 %v1038
      %vm1045 = vmor %vm1043, %vm1044
      %v1046 = vsel %vm1045, %v1038, %v1042
      %v1047 = vand.u32 2147483647, %v840
      %vm1048 = vcmp.eq.f32.partialorder %v1047, 8.507059e+37
      %v1049 = vand.u32 %v840, 2147483648
      %v1050 = vor.u32 1.1754944e-38, %v1049
      %v1051 = vsel %vm1048, %v1050, %v1046
      %v1052 = vmul.f32 1.0, %v1051
      %v1053 = vrcp.pop %v841
      %v1054 = vmul.f32 %v841, %v1053
      %v1055 = vsub.f32 1.0, %v1054
      %v1056 = vmul.f32 %v1053, %v1055
      %v1057 = vadd.f32 %v1053, %v1056
      %vm1058 = vweird.f32 %v841
      %vm1059 = vweird.f32 %v1053
      %vm1060 = vmor %vm1058, %vm1059
      %v1061 = vsel %vm1060, %v1053, %v1057
      %v1062 = vand.u32 2147483647, %v841
      %vm1063 = vcmp.eq.f32.partialorder %v1062, 8.507059e+37
      %v1064 = vand.u32 %v841, 2147483648
      %v1065 = vor.u32 1.1754944e-38, %v1064
      %v1066 = vsel %vm1063, %v1065, %v1061
      %v1067 = vmul.f32 1.0, %v1066
      %v1068 = vrcp.pop %v842
      %v1069 = vmul.f32 %v842, %v1068
      %v1070 = vsub.f32 1.0, %v1069
      %v1071 = vmul.f32 %v1068, %v1070
      %v1072 = vadd.f32 %v1068, %v1071
      %vm1073 = vweird.f32 %v842
      %vm1074 = vweird.f32 %v1068
      %vm1075 = vmor %vm1073, %vm1074
      %v1076 = vsel %vm1075, %v1068, %v1072
      %v1077 = vand.u32 2147483647, %v842
      %vm1078 = vcmp.eq.f32.partialorder %v1077, 8.507059e+37
      %v1079 = vand.u32 %v842, 2147483648
      %v1080 = vor.u32 1.1754944e-38, %v1079
      %v1081 = vsel %vm1078, %v1080, %v1076
      %v1082 = vmul.f32 1.0, %v1081
      %1099 = vrot.lane.b32.xlu0 %v857, 32
      %v1100 = vpop.permute.xlu0 %1099
      %1101 = vrot.lane.b32.xlu0 %v872, 32
      %v1102 = vpop.permute.xlu0 %1101
      %1103 = vrot.lane.b32.xlu0 %v887, 32
      %v1104 = vpop.permute.xlu0 %1103
      %1105 = vrot.lane.b32.xlu0 %v902, 32
      %v1106 = vpop.permute.xlu0 %1105
      %1107 = vrot.lane.b32.xlu0 %v917, 32
      %v1108 = vpop.permute.xlu0 %1107
      %1109 = vrot.lane.b32.xlu0 %v932, 32
      %v1110 = vpop.permute.xlu0 %1109
      %1111 = vrot.lane.b32.xlu0 %v947, 32
      %v1112 = vpop.permute.xlu0 %1111
      %1113 = vrot.lane.b32.xlu0 %v962, 32
      %v1114 = vpop.permute.xlu0 %1113
      %1115 = vrot.lane.b32.xlu0 %v977, 32
      %v1116 = vpop.permute.xlu0 %1115
      %1117 = vrot.lane.b32.xlu0 %v992, 32
      %v1118 = vpop.permute.xlu0 %1117
      %1119 = vrot.lane.b32.xlu0 %v1007, 32
      %v1120 = vpop.permute.xlu0 %1119
      %1121 = vrot.lane.b32.xlu0 %v1022, 32
      %v1122 = vpop.permute.xlu0 %1121
      %1123 = vrot.lane.b32.xlu0 %v1037, 32
      %v1124 = vpop.permute.xlu0 %1123
      %1125 = vrot.lane.b32.xlu0 %v1052, 32
      %v1126 = vpop.permute.xlu0 %1125
      %1127 = vrot.lane.b32.xlu0 %v1067, 32
      %v1128 = vpop.permute.xlu0 %1127
      %1129 = vrot.lane.b32.xlu0 %v1082, 32
      %v1130 = vpop.permute.xlu0 %1129
      %vm1147 = vcmask 269568
      %1148 = vst.msk [vmem:[%s216] sm:$0xff] %vm1147, %v1100
      %1149 = vst.msk [vmem:[%s216 + $0x8] sm:$0xff] %vm1147, %v1102
      %1150 = vst.msk [vmem:[%s216 + $0x10] sm:$0xff] %vm1147, %v1104
      %1151 = vst.msk [vmem:[%s216 + $0x18] sm:$0xff] %vm1147, %v1106
      %1152 = vst.msk [vmem:[%s216 + $0x20] sm:$0xff] %vm1147, %v1108
      %1153 = vst.msk [vmem:[%s216 + $0x28] sm:$0xff] %vm1147, %v1110
      %1154 = vst.msk [vmem:[%s216 + $0x30] sm:$0xff] %vm1147, %v1112
      %1155 = vst.msk [vmem:[%s216 + $0x38] sm:$0xff] %vm1147, %v1114
      %1156 = vst.msk [vmem:[%s216 + $0x40] sm:$0xff] %vm1147, %v1116
      %1157 = vst.msk [vmem:[%s216 + $0x48] sm:$0xff] %vm1147, %v1118
      %1158 = vst.msk [vmem:[%s216 + $0x50] sm:$0xff] %vm1147, %v1120
      %1159 = vst.msk [vmem:[%s216 + $0x58] sm:$0xff] %vm1147, %v1122
      %1160 = vst.msk [vmem:[%s216 + $0x60] sm:$0xff] %vm1147, %v1124
      %1161 = vst.msk [vmem:[%s216 + $0x68] sm:$0xff] %vm1147, %v1126
      %1162 = vst.msk [vmem:[%s216 + $0x70] sm:$0xff] %vm1147, %v1128
      %1163 = vst.msk [vmem:[%s216 + $0x78] sm:$0xff] %vm1147, %v1130
      %v1164 = vld [vmem:[%s210] sm:$0xff]
      %v1165 = vld [vmem:[%s210 + $0x8] sm:$0xff]
      %v1166 = vld [vmem:[%s210 + $0x10] sm:$0xff]
      %v1167 = vld [vmem:[%s210 + $0x18] sm:$0xff]
      %v1168 = vld [vmem:[%s210 + $0x20] sm:$0xff]
      %v1169 = vld [vmem:[%s210 + $0x28] sm:$0xff]
      %v1170 = vld [vmem:[%s210 + $0x30] sm:$0xff]
      %v1171 = vld [vmem:[%s210 + $0x38] sm:$0xff]
      %v1172 = vld [vmem:[%s210 + $0x40] sm:$0xff]
      %v1173 = vld [vmem:[%s210 + $0x48] sm:$0xff]
      %v1174 = vld [vmem:[%s210 + $0x50] sm:$0xff]
      %v1175 = vld [vmem:[%s210 + $0x58] sm:$0xff]
      %v1176 = vld [vmem:[%s210 + $0x60] sm:$0xff]
      %v1177 = vld [vmem:[%s210 + $0x68] sm:$0xff]
      %v1178 = vld [vmem:[%s210 + $0x70] sm:$0xff]
      %v1179 = vld [vmem:[%s210 + $0x78] sm:$0xff]
      %v1180 = vxor.u32 %v1164, 2147483648
      %v1181 = vxor.u32 %v1165, 2147483648
      %v1182 = vxor.u32 %v1166, 2147483648
      %v1183 = vxor.u32 %v1167, 2147483648
      %v1184 = vxor.u32 %v1168, 2147483648
      %v1185 = vxor.u32 %v1169, 2147483648
      %v1186 = vxor.u32 %v1170, 2147483648
      %v1187 = vxor.u32 %v1171, 2147483648
      %v1188 = vxor.u32 %v1172, 2147483648
      %v1189 = vxor.u32 %v1173, 2147483648
      %v1190 = vxor.u32 %v1174, 2147483648
      %v1191 = vxor.u32 %v1175, 2147483648
      %v1192 = vxor.u32 %v1176, 2147483648
      %v1193 = vxor.u32 %v1177, 2147483648
      %v1194 = vxor.u32 %v1178, 2147483648
      %v1195 = vxor.u32 %v1179, 2147483648
      %v1196 = vmul.f32 %v1180, 1.442695
      %v1197 = vpow.pop %v1196
      %v1198 = vmul.f32 %v1181, 1.442695
      %v1199 = vpow.pop %v1198
      %v1200 = vmul.f32 %v1182, 1.442695
      %v1201 = vpow.pop %v1200
      %v1202 = vmul.f32 %v1183, 1.442695
      %v1203 = vpow.pop %v1202
      %v1204 = vmul.f32 %v1184, 1.442695
      %v1205 = vpow.pop %v1204
      %v1206 = vmul.f32 %v1185, 1.442695
      %v1207 = vpow.pop %v1206
      %v1208 = vmul.f32 %v1186, 1.442695
      %v1209 = vpow.pop %v1208
      %v1210 = vmul.f32 %v1187, 1.442695
      %v1211 = vpow.pop %v1210
      %v1212 = vmul.f32 %v1188, 1.442695
      %v1213 = vpow.pop %v1212
      %v1214 = vmul.f32 %v1189, 1.442695
      %v1215 = vpow.pop %v1214
      %v1216 = vmul.f32 %v1190, 1.442695
      %v1217 = vpow.pop %v1216
      %v1218 = vmul.f32 %v1191, 1.442695
      %v1219 = vpow.pop %v1218
      %v1220 = vmul.f32 %v1192, 1.442695
      %v1221 = vpow.pop %v1220
      %v1222 = vmul.f32 %v1193, 1.442695
      %v1223 = vpow.pop %v1222
      %v1224 = vmul.f32 %v1194, 1.442695
      %v1225 = vpow.pop %v1224
      %v1226 = vmul.f32 %v1195, 1.442695
      %v1227 = vpow.pop %v1226
      %v1228 = vadd.f32 %v1197, 1.0
      %v1229 = vadd.f32 %v1199, 1.0
      %v1230 = vadd.f32 %v1201, 1.0
      %v1231 = vadd.f32 %v1203, 1.0
      %v1232 = vadd.f32 %v1205, 1.0
      %v1233 = vadd.f32 %v1207, 1.0
      %v1234 = vadd.f32 %v1209, 1.0
      %v1235 = vadd.f32 %v1211, 1.0
      %v1236 = vadd.f32 %v1213, 1.0
      %v1237 = vadd.f32 %v1215, 1.0
      %v1238 = vadd.f32 %v1217, 1.0
      %v1239 = vadd.f32 %v1219, 1.0
      %v1240 = vadd.f32 %v1221, 1.0
      %v1241 = vadd.f32 %v1223, 1.0
      %v1242 = vadd.f32 %v1225, 1.0
      %v1243 = vadd.f32 %v1227, 1.0
      %v1244 = vrcp.pop %v1228
      %v1245 = vmul.f32 %v1228, %v1244
      %v1246 = vsub.f32 1.0, %v1245
      %v1247 = vmul.f32 %v1244, %v1246
      %v1248 = vadd.f32 %v1244, %v1247
      %vm1249 = vweird.f32 %v1228
      %vm1250 = vweird.f32 %v1244
      %vm1251 = vmor %vm1249, %vm1250
      %v1252 = vsel %vm1251, %v1244, %v1248
      %v1253 = vand.u32 2147483647, %v1228
      %vm1254 = vcmp.eq.f32.partialorder %v1253, 8.507059e+37
      %v1255 = vand.u32 %v1228, 2147483648
      %v1256 = vor.u32 1.1754944e-38, %v1255
      %v1257 = vsel %vm1254, %v1256, %v1252
      %v1258 = vmul.f32 1.0, %v1257
      %v1259 = vrcp.pop %v1229
      %v1260 = vmul.f32 %v1229, %v1259
      %v1261 = vsub.f32 1.0, %v1260
      %v1262 = vmul.f32 %v1259, %v1261
      %v1263 = vadd.f32 %v1259, %v1262
      %vm1264 = vweird.f32 %v1229
      %vm1265 = vweird.f32 %v1259
      %vm1266 = vmor %vm1264, %vm1265
      %v1267 = vsel %vm1266, %v1259, %v1263
      %v1268 = vand.u32 2147483647, %v1229
      %vm1269 = vcmp.eq.f32.partialorder %v1268, 8.507059e+37
      %v1270 = vand.u32 %v1229, 2147483648
      %v1271 = vor.u32 1.1754944e-38, %v1270
      %v1272 = vsel %vm1269, %v1271, %v1267
      %v1273 = vmul.f32 1.0, %v1272
      %v1274 = vrcp.pop %v1230
      %v1275 = vmul.f32 %v1230, %v1274
      %v1276 = vsub.f32 1.0, %v1275
      %v1277 = vmul.f32 %v1274, %v1276
      %v1278 = vadd.f32 %v1274, %v1277
      %vm1279 = vweird.f32 %v1230
      %vm1280 = vweird.f32 %v1274
      %vm1281 = vmor %vm1279, %vm1280
      %v1282 = vsel %vm1281, %v1274, %v1278
      %v1283 = vand.u32 2147483647, %v1230
      %vm1284 = vcmp.eq.f32.partialorder %v1283, 8.507059e+37
      %v1285 = vand.u32 %v1230, 2147483648
      %v1286 = vor.u32 1.1754944e-38, %v1285
      %v1287 = vsel %vm1284, %v1286, %v1282
      %v1288 = vmul.f32 1.0, %v1287
      %v1289 = vrcp.pop %v1231
      %v1290 = vmul.f32 %v1231, %v1289
      %v1291 = vsub.f32 1.0, %v1290
      %v1292 = vmul.f32 %v1289, %v1291
      %v1293 = vadd.f32 %v1289, %v1292
      %vm1294 = vweird.f32 %v1231
      %vm1295 = vweird.f32 %v1289
      %vm1296 = vmor %vm1294, %vm1295
      %v1297 = vsel %vm1296, %v1289, %v1293
      %v1298 = vand.u32 2147483647, %v1231
      %vm1299 = vcmp.eq.f32.partialorder %v1298, 8.507059e+37
      %v1300 = vand.u32 %v1231, 2147483648
      %v1301 = vor.u32 1.1754944e-38, %v1300
      %v1302 = vsel %vm1299, %v1301, %v1297
      %v1303 = vmul.f32 1.0, %v1302
      %v1304 = vrcp.pop %v1232
      %v1305 = vmul.f32 %v1232, %v1304
      %v1306 = vsub.f32 1.0, %v1305
      %v1307 = vmul.f32 %v1304, %v1306
      %v1308 = vadd.f32 %v1304, %v1307
      %vm1309 = vweird.f32 %v1232
      %vm1310 = vweird.f32 %v1304
      %vm1311 = vmor %vm1309, %vm1310
      %v1312 = vsel %vm1311, %v1304, %v1308
      %v1313 = vand.u32 2147483647, %v1232
      %vm1314 = vcmp.eq.f32.partialorder %v1313, 8.507059e+37
      %v1315 = vand.u32 %v1232, 2147483648
      %v1316 = vor.u32 1.1754944e-38, %v1315
      %v1317 = vsel %vm1314, %v1316, %v1312
      %v1318 = vmul.f32 1.0, %v1317
      %v1319 = vrcp.pop %v1233
      %v1320 = vmul.f32 %v1233, %v1319
      %v1321 = vsub.f32 1.0, %v1320
      %v1322 = vmul.f32 %v1319, %v1321
      %v1323 = vadd.f32 %v1319, %v1322
      %vm1324 = vweird.f32 %v1233
      %vm1325 = vweird.f32 %v1319
      %vm1326 = vmor %vm1324, %vm1325
      %v1327 = vsel %vm1326, %v1319, %v1323
      %v1328 = vand.u32 2147483647, %v1233
      %vm1329 = vcmp.eq.f32.partialorder %v1328, 8.507059e+37
      %v1330 = vand.u32 %v1233, 2147483648
      %v1331 = vor.u32 1.1754944e-38, %v1330
      %v1332 = vsel %vm1329, %v1331, %v1327
      %v1333 = vmul.f32 1.0, %v1332
      %v1334 = vrcp.pop %v1234
      %v1335 = vmul.f32 %v1234, %v1334
      %v1336 = vsub.f32 1.0, %v1335
      %v1337 = vmul.f32 %v1334, %v1336
      %v1338 = vadd.f32 %v1334, %v1337
      %vm1339 = vweird.f32 %v1234
      %vm1340 = vweird.f32 %v1334
      %vm1341 = vmor %vm1339, %vm1340
      %v1342 = vsel %vm1341, %v1334, %v1338
      %v1343 = vand.u32 2147483647, %v1234
      %vm1344 = vcmp.eq.f32.partialorder %v1343, 8.507059e+37
      %v1345 = vand.u32 %v1234, 2147483648
      %v1346 = vor.u32 1.1754944e-38, %v1345
      %v1347 = vsel %vm1344, %v1346, %v1342
      %v1348 = vmul.f32 1.0, %v1347
      %v1349 = vrcp.pop %v1235
      %v1350 = vmul.f32 %v1235, %v1349
      %v1351 = vsub.f32 1.0, %v1350
      %v1352 = vmul.f32 %v1349, %v1351
      %v1353 = vadd.f32 %v1349, %v1352
      %vm1354 = vweird.f32 %v1235
      %vm1355 = vweird.f32 %v1349
      %vm1356 = vmor %vm1354, %vm1355
      %v1357 = vsel %vm1356, %v1349, %v1353
      %v1358 = vand.u32 2147483647, %v1235
      %vm1359 = vcmp.eq.f32.partialorder %v1358, 8.507059e+37
      %v1360 = vand.u32 %v1235, 2147483648
      %v1361 = vor.u32 1.1754944e-38, %v1360
      %v1362 = vsel %vm1359, %v1361, %v1357
      %v1363 = vmul.f32 1.0, %v1362
      %v1364 = vrcp.pop %v1236
      %v1365 = vmul.f32 %v1236, %v1364
      %v1366 = vsub.f32 1.0, %v1365
      %v1367 = vmul.f32 %v1364, %v1366
      %v1368 = vadd.f32 %v1364, %v1367
      %vm1369 = vweird.f32 %v1236
      %vm1370 = vweird.f32 %v1364
      %vm1371 = vmor %vm1369, %vm1370
      %v1372 = vsel %vm1371, %v1364, %v1368
      %v1373 = vand.u32 2147483647, %v1236
      %vm1374 = vcmp.eq.f32.partialorder %v1373, 8.507059e+37
      %v1375 = vand.u32 %v1236, 2147483648
      %v1376 = vor.u32 1.1754944e-38, %v1375
      %v1377 = vsel %vm1374, %v1376, %v1372
      %v1378 = vmul.f32 1.0, %v1377
      %v1379 = vrcp.pop %v1237
      %v1380 = vmul.f32 %v1237, %v1379
      %v1381 = vsub.f32 1.0, %v1380
      %v1382 = vmul.f32 %v1379, %v1381
      %v1383 = vadd.f32 %v1379, %v1382
      %vm1384 = vweird.f32 %v1237
      %vm1385 = vweird.f32 %v1379
      %vm1386 = vmor %vm1384, %vm1385
      %v1387 = vsel %vm1386, %v1379, %v1383
      %v1388 = vand.u32 2147483647, %v1237
      %vm1389 = vcmp.eq.f32.partialorder %v1388, 8.507059e+37
      %v1390 = vand.u32 %v1237, 2147483648
      %v1391 = vor.u32 1.1754944e-38, %v1390
      %v1392 = vsel %vm1389, %v1391, %v1387
      %v1393 = vmul.f32 1.0, %v1392
      %v1394 = vrcp.pop %v1238
      %v1395 = vmul.f32 %v1238, %v1394
      %v1396 = vsub.f32 1.0, %v1395
      %v1397 = vmul.f32 %v1394, %v1396
      %v1398 = vadd.f32 %v1394, %v1397
      %vm1399 = vweird.f32 %v1238
      %vm1400 = vweird.f32 %v1394
      %vm1401 = vmor %vm1399, %vm1400
      %v1402 = vsel %vm1401, %v1394, %v1398
      %v1403 = vand.u32 2147483647, %v1238
      %vm1404 = vcmp.eq.f32.partialorder %v1403, 8.507059e+37
      %v1405 = vand.u32 %v1238, 2147483648
      %v1406 = vor.u32 1.1754944e-38, %v1405
      %v1407 = vsel %vm1404, %v1406, %v1402
      %v1408 = vmul.f32 1.0, %v1407
      %v1409 = vrcp.pop %v1239
      %v1410 = vmul.f32 %v1239, %v1409
      %v1411 = vsub.f32 1.0, %v1410
      %v1412 = vmul.f32 %v1409, %v1411
      %v1413 = vadd.f32 %v1409, %v1412
      %vm1414 = vweird.f32 %v1239
      %vm1415 = vweird.f32 %v1409
      %vm1416 = vmor %vm1414, %vm1415
      %v1417 = vsel %vm1416, %v1409, %v1413
      %v1418 = vand.u32 2147483647, %v1239
      %vm1419 = vcmp.eq.f32.partialorder %v1418, 8.507059e+37
      %v1420 = vand.u32 %v1239, 2147483648
      %v1421 = vor.u32 1.1754944e-38, %v1420
      %v1422 = vsel %vm1419, %v1421, %v1417
      %v1423 = vmul.f32 1.0, %v1422
      %v1424 = vrcp.pop %v1240
      %v1425 = vmul.f32 %v1240, %v1424
      %v1426 = vsub.f32 1.0, %v1425
      %v1427 = vmul.f32 %v1424, %v1426
      %v1428 = vadd.f32 %v1424, %v1427
      %vm1429 = vweird.f32 %v1240
      %vm1430 = vweird.f32 %v1424
      %vm1431 = vmor %vm1429, %vm1430
      %v1432 = vsel %vm1431, %v1424, %v1428
      %v1433 = vand.u32 2147483647, %v1240
      %vm1434 = vcmp.eq.f32.partialorder %v1433, 8.507059e+37
      %v1435 = vand.u32 %v1240, 2147483648
      %v1436 = vor.u32 1.1754944e-38, %v1435
      %v1437 = vsel %vm1434, %v1436, %v1432
      %v1438 = vmul.f32 1.0, %v1437
      %v1439 = vrcp.pop %v1241
      %v1440 = vmul.f32 %v1241, %v1439
      %v1441 = vsub.f32 1.0, %v1440
      %v1442 = vmul.f32 %v1439, %v1441
      %v1443 = vadd.f32 %v1439, %v1442
      %vm1444 = vweird.f32 %v1241
      %vm1445 = vweird.f32 %v1439
      %vm1446 = vmor %vm1444, %vm1445
      %v1447 = vsel %vm1446, %v1439, %v1443
      %v1448 = vand.u32 2147483647, %v1241
      %vm1449 = vcmp.eq.f32.partialorder %v1448, 8.507059e+37
      %v1450 = vand.u32 %v1241, 2147483648
      %v1451 = vor.u32 1.1754944e-38, %v1450
      %v1452 = vsel %vm1449, %v1451, %v1447
      %v1453 = vmul.f32 1.0, %v1452
      %v1454 = vrcp.pop %v1242
      %v1455 = vmul.f32 %v1242, %v1454
      %v1456 = vsub.f32 1.0, %v1455
      %v1457 = vmul.f32 %v1454, %v1456
      %v1458 = vadd.f32 %v1454, %v1457
      %vm1459 = vweird.f32 %v1242
      %vm1460 = vweird.f32 %v1454
      %vm1461 = vmor %vm1459, %vm1460
      %v1462 = vsel %vm1461, %v1454, %v1458
      %v1463 = vand.u32 2147483647, %v1242
      %vm1464 = vcmp.eq.f32.partialorder %v1463, 8.507059e+37
      %v1465 = vand.u32 %v1242, 2147483648
      %v1466 = vor.u32 1.1754944e-38, %v1465
      %v1467 = vsel %vm1464, %v1466, %v1462
      %v1468 = vmul.f32 1.0, %v1467
      %v1469 = vrcp.pop %v1243
      %v1470 = vmul.f32 %v1243, %v1469
      %v1471 = vsub.f32 1.0, %v1470
      %v1472 = vmul.f32 %v1469, %v1471
      %v1473 = vadd.f32 %v1469, %v1472
      %vm1474 = vweird.f32 %v1243
      %vm1475 = vweird.f32 %v1469
      %vm1476 = vmor %vm1474, %vm1475
      %v1477 = vsel %vm1476, %v1469, %v1473
      %v1478 = vand.u32 2147483647, %v1243
      %vm1479 = vcmp.eq.f32.partialorder %v1478, 8.507059e+37
      %v1480 = vand.u32 %v1243, 2147483648
      %v1481 = vor.u32 1.1754944e-38, %v1480
      %v1482 = vsel %vm1479, %v1481, %v1477
      %v1483 = vmul.f32 1.0, %v1482
      %1500 = vrot.lane.b32.xlu0 %v1258, 33
      %v1501 = vpop.permute.xlu0 %1500
      %1502 = vrot.lane.b32.xlu0 %v1273, 33
      %v1503 = vpop.permute.xlu0 %1502
      %1504 = vrot.lane.b32.xlu0 %v1288, 33
      %v1505 = vpop.permute.xlu0 %1504
      %1506 = vrot.lane.b32.xlu0 %v1303, 33
      %v1507 = vpop.permute.xlu0 %1506
      %1508 = vrot.lane.b32.xlu0 %v1318, 33
      %v1509 = vpop.permute.xlu0 %1508
      %1510 = vrot.lane.b32.xlu0 %v1333, 33
      %v1511 = vpop.permute.xlu0 %1510
      %1512 = vrot.lane.b32.xlu0 %v1348, 33
      %v1513 = vpop.permute.xlu0 %1512
      %1514 = vrot.lane.b32.xlu0 %v1363, 33
      %v1515 = vpop.permute.xlu0 %1514
      %1516 = vrot.lane.b32.xlu0 %v1378, 33
      %v1517 = vpop.permute.xlu0 %1516
      %1518 = vrot.lane.b32.xlu0 %v1393, 33
      %v1519 = vpop.permute.xlu0 %1518
      %1520 = vrot.lane.b32.xlu0 %v1408, 33
      %v1521 = vpop.permute.xlu0 %1520
      %1522 = vrot.lane.b32.xlu0 %v1423, 33
      %v1523 = vpop.permute.xlu0 %1522
      %1524 = vrot.lane.b32.xlu0 %v1438, 33
      %v1525 = vpop.permute.xlu0 %1524
      %1526 = vrot.lane.b32.xlu0 %v1453, 33
      %v1527 = vpop.permute.xlu0 %1526
      %1528 = vrot.lane.b32.xlu0 %v1468, 33
      %v1529 = vpop.permute.xlu0 %1528
      %1530 = vrot.lane.b32.xlu0 %v1483, 33
      %v1531 = vpop.permute.xlu0 %1530
      %vm1548 = vcmask 277768
      %1549 = vst.msk [vmem:[%s216] sm:$0xff] %vm1548, %v1501
      %1550 = vst.msk [vmem:[%s216 + $0x8] sm:$0xff] %vm1548, %v1503
      %1551 = vst.msk [vmem:[%s216 + $0x10] sm:$0xff] %vm1548, %v1505
      %1552 = vst.msk [vmem:[%s216 + $0x18] sm:$0xff] %vm1548, %v1507
      %1553 = vst.msk [vmem:[%s216 + $0x20] sm:$0xff] %vm1548, %v1509
      %1554 = vst.msk [vmem:[%s216 + $0x28] sm:$0xff] %vm1548, %v1511
      %1555 = vst.msk [vmem:[%s216 + $0x30] sm:$0xff] %vm1548, %v1513
      %1556 = vst.msk [vmem:[%s216 + $0x38] sm:$0xff] %vm1548, %v1515
      %1557 = vst.msk [vmem:[%s216 + $0x40] sm:$0xff] %vm1548, %v1517
      %1558 = vst.msk [vmem:[%s216 + $0x48] sm:$0xff] %vm1548, %v1519
      %1559 = vst.msk [vmem:[%s216 + $0x50] sm:$0xff] %vm1548, %v1521
      %1560 = vst.msk [vmem:[%s216 + $0x58] sm:$0xff] %vm1548, %v1523
      %1561 = vst.msk [vmem:[%s216 + $0x60] sm:$0xff] %vm1548, %v1525
      %1562 = vst.msk [vmem:[%s216 + $0x68] sm:$0xff] %vm1548, %v1527
      %1563 = vst.msk [vmem:[%s216 + $0x70] sm:$0xff] %vm1548, %v1529
      %1564 = vst.msk [vmem:[%s216 + $0x78] sm:$0xff] %vm1548, %v1531
      %s1565 = smul.u32 16, %s14
      %p1566 = scmp.lt.s32.totalorder %s1565, 47
      %s1567 = scalar_select %p1566, %s1565, 47
      %s1568 = smul.addr %s1567, 8
      %s1569 = scalar_lea.vmem %s3, %s1568
      // Predicated region
      $region33: #{fwd.7} parent=31 // pred_check
        %p1570 = pneg %p110
      $region34: #{fwd.7} parent=31 // pred_check_branch
        %1572 = sbr.rel (%p1570) target = $region36
      $region35: #{fwd.7} parent=31 // pred_region
        %s1573 = smul.u32 16, %s14
      $region36: #{fwd.7} parent=31 // pred_fallthru
        _
    $region32: #{fwd.7} parent=5 // pred_fallthru
      _
    %p1574 = scmp.le.s32.totalorder 2, %s9
    // Predicated region
    $region37: #{fwd.7} parent=5 // pred_check
      %p1575 = pneg %p1574
    $region38: #{fwd.7} parent=5 // pred_check_branch
      %1577 = sbr.rel (%p1575) target = $region40
    $region39: #{fwd.7} parent=5 // pred_region
      %s1578 = ssub.s32 %s9, 2
      // Predicated region
      $region41: #{fwd.7} parent=39 // pred_check
        %p1579 = pneg %p116
      $region42: #{fwd.7} parent=39 // pred_check_branch
        %1581 = sbr.rel (%p1579) target = $region44
      $region43: #{fwd.7} parent=39 // pred_region
        %s1582 = smul.u32 16, %s15
        %p1583 = scmp.lt.s32.totalorder %s1582, 47
        %s1584 = scalar_select %p1583, %s1582, 47
        %s1585 = smul.addr %s1584, 8
        %s1586 = scalar_lea.vmem %s3, %s1585
      $region44: #{fwd.7} parent=39 // pred_fallthru
        _
    $region40: #{fwd.7} parent=5 // pred_fallthru
      _
  $region6: #{fwd.7} parent=0 // loop_footer
    %s13 = sadd.s32 1, %s9
  $region7: #{fwd.7} parent=0 // loop_footer_branch
    %8 = sbr.rel target = $region3
  $region8: #{fwd.7} parent=0 // loop_exit
    _

// kernel: fwd.5
$region0: #{fwd.5}
  #allocation0 [shape = 'u32[]', space=smem, size = 0x4, offset = 0x4, fixed_abs, tag = 'smem constant byte address 0x4 - core index']
  #allocation1 [shape = 'u32[72,128]{1,0:T(1,128)}', space=vmem, size = 0x9000, scoped, tag = 'internal scratch']
  #allocation2 [shape = 'f32[128,1]{1,0:T(8,128)}', space=vmem, size = 0x10000, scoped, tag = 'scratch operand']
  #allocation3 [shape = 'f32[128,1]{1,0:T(8,128)}', space=vmem, size = 0x10000, scoped, tag = 'scratch operand']
  #allocation4 [shape = 'f32[128,1]{1,0:T(8,128)}', space=vmem, size = 0x10000, scoped, tag = 'scratch operand']
  #allocation5 [shape = 's32[1]{0}', space=sflag, size = 0x4, scoped, tag = 'scoped memory for fwd.5']
  #allocation6 [shape = 's32[1]{0:T(128)S(6)}', space=smem, size = 0x200, scoped, tag = 'prefetched SMEM operand 0']
  #allocation7 [shape = 'f32[1]{0:T(128)S(6)}', space=smem, size = 0x200, scoped, tag = 'prefetched SMEM operand 1']
  %s0 = inlined_call_operand.<no memory space> [shape: s32[1], index: 0, kind: input, shape index: {}]
  %s1 = inlined_call_operand.<no memory space> [shape: f32[1], index: 1, kind: input, shape index: {}]
  %s2 = inlined_call_operand.vmem [shape: bf16[256,32], index: 2, kind: input, shape index: {}]
  %s3 = inlined_call_operand.vmem [shape: bf16[256,32], index: 3, kind: input, shape index: {}]
  %s4 = inlined_call_operand.vmem [shape: f32[1,256], index: 4, kind: input, shape index: {}]
  %s5 = inlined_call_operand.vmem [shape: f32[256,1], index: 5, kind: output, shape index: {}]
  %s6 = sld [smem:[#allocation0]]
  $region53: #{fwd.5} parent=0
    _
  %s8 = ssub.s32 1, %s6
  %s9 = scalar_select 0, %s8, %s6
  %10 = sst [smem:[#allocation6]] %s0
  %11 = sst [smem:[#allocation7]] %s1
  loop: start=0, step=1, limit=6
  $region2: #{fwd.5} parent=0 // loop_pre_header
    _
  $region3: #{fwd.5} parent=0 // loop_header
    %s13 = sphi 0, %s17
    %p14 = scmp.ge.s32.totalorder %s13, 6
    %s20 = sphi 0, %s32
    %s21 = sphi 0, %s28
    %s22 = sphi 0, %s20
    %s23 = sphi 0, %s21
    %s24 = sphi 0, %s22
    %s25 = sphi 0, %s23
    %s35 = sphi 0, %s37
    %s38 = sphi 0, %s35
    %s39 = sphi 0, %s38
    %s55 = sphi 0, %s39
    %s61 = sphi 0, %s63
    %s64 = sphi 0, %s61
    %s65 = sphi 0, %s64
    %s81 = sphi 0, %s65
    %s87 = sphi 0, %s89
    %s90 = sphi 0, %s87
    %s91 = sphi 0, %s90
    %s107 = sphi 0, %s91
    %s113 = sphi 0, %s115
    %s116 = sphi 0, %s113
    %s117 = sphi 0, %s116
    %s133 = sphi 0, %s117
  $region4: #{fwd.5} parent=0 // loop_header_branch
    %16 = sbr.rel (%p14) target = $region8
  $region5: #{fwd.5} parent=0 // loop_body
    %s18 = ssub.s32 %s13, 1
    %s19 = ssub.s32 %s13, 2
    %s26 = sadd.s32 1, %s21
    %p27 = scmp.ge.s32.totalorder %s26, 2
    %s28 = scalar_select %p27, 0, %s26
    %s29 = sadd.s32 1, %s20
    %s30 = scalar_select %p27, %s29, %s20
    %p31 = scmp.ge.s32.totalorder %s30, 2
    %s32 = scalar_select %p31, 0, %s30
    %s33 = ssub.s32 %s20, %s32
    %p34 = scmp.eq.s32.totalorder %s33, 0
    %s36 = sadd.s32 %s35, 1
    %s37 = scalar_select %p34, %s35, %s36
    %p40 = pneg %p34
    %p41 = scmp.eq.s32.totalorder %s13, 3
    %p42 = por %p40, %p41
    %p43 = scmp.ne.s32.totalorder %s35, %s38
    %p44 = scmp.eq.s32.totalorder %s13, 0
    %p45 = por %p43, %p44
    %p46 = scmp.ne.s32.totalorder %s35, %s38
    %p47 = scmp.eq.s32.totalorder %s18, 3
    %p48 = por %p46, %p47
    %p49 = scmp.ne.s32.totalorder %s38, %s39
    %p50 = scmp.eq.s32.totalorder %s18, 0
    %p51 = por %p49, %p50
    %p52 = scmp.ne.s32.totalorder %s38, %s39
    %p53 = scmp.eq.s32.totalorder %s19, 3
    %p54 = por %p52, %p53
    %p56 = scmp.ne.s32.totalorder %s39, %s55
    %p57 = scmp.eq.s32.totalorder %s19, 0
    %p58 = por %p56, %p57
    %s59 = ssub.s32 %s21, %s28
    %p60 = scmp.eq.s32.totalorder %s59, 0
    %s62 = sadd.s32 %s61, 1
    %s63 = scalar_select %p60, %s61, %s62
    %p66 = pneg %p60
    %p67 = scmp.eq.s32.totalorder %s13, 3
    %p68 = por %p66, %p67
    %p69 = scmp.ne.s32.totalorder %s61, %s64
    %p70 = scmp.eq.s32.totalorder %s13, 0
    %p71 = por %p69, %p70
    %p72 = scmp.ne.s32.totalorder %s61, %s64
    %p73 = scmp.eq.s32.totalorder %s18, 3
    %p74 = por %p72, %p73
    %p75 = scmp.ne.s32.totalorder %s64, %s65
    %p76 = scmp.eq.s32.totalorder %s18, 0
    %p77 = por %p75, %p76
    %p78 = scmp.ne.s32.totalorder %s64, %s65
    %p79 = scmp.eq.s32.totalorder %s19, 3
    %p80 = por %p78, %p79
    %p82 = scmp.ne.s32.totalorder %s65, %s81
    %p83 = scmp.eq.s32.totalorder %s19, 0
    %p84 = por %p82, %p83
    %s85 = ssub.s32 %s21, %s28
    %p86 = scmp.eq.s32.totalorder %s85, 0
    %s88 = sadd.s32 %s87, 1
    %s89 = scalar_select %p86, %s87, %s88
    %p92 = pneg %p86
    %p93 = scmp.eq.s32.totalorder %s13, 3
    %p94 = por %p92, %p93
    %p95 = scmp.ne.s32.totalorder %s87, %s90
    %p96 = scmp.eq.s32.totalorder %s13, 0
    %p97 = por %p95, %p96
    %p98 = scmp.ne.s32.totalorder %s87, %s90
    %p99 = scmp.eq.s32.totalorder %s18, 3
    %p100 = por %p98, %p99
    %p101 = scmp.ne.s32.totalorder %s90, %s91
    %p102 = scmp.eq.s32.totalorder %s18, 0
    %p103 = por %p101, %p102
    %p104 = scmp.ne.s32.totalorder %s90, %s91
    %p105 = scmp.eq.s32.totalorder %s19, 3
    %p106 = por %p104, %p105
    %p108 = scmp.ne.s32.totalorder %s91, %s107
    %p109 = scmp.eq.s32.totalorder %s19, 0
    %p110 = por %p108, %p109
    %s111 = ssub.s32 %s20, %s32
    %p112 = scmp.eq.s32.totalorder %s111, 0
    %s114 = sadd.s32 %s113, 1
    %s115 = scalar_select %p112, %s113, %s114
    %p118 = pneg %p112
    %p119 = scmp.eq.s32.totalorder %s13, 3
    %p120 = por %p118, %p119
    %p121 = scmp.ne.s32.totalorder %s113, %s116
    %p122 = scmp.eq.s32.totalorder %s13, 0
    %p123 = por %p121, %p122
    %p124 = scmp.ne.s32.totalorder %s113, %s116
    %p125 = scmp.eq.s32.totalorder %s18, 3
    %p126 = por %p124, %p125
    %p127 = scmp.ne.s32.totalorder %s116, %s117
    %p128 = scmp.eq.s32.totalorder %s18, 0
    %p129 = por %p127, %p128
    %p130 = scmp.ne.s32.totalorder %s116, %s117
    %p131 = scmp.eq.s32.totalorder %s19, 3
    %p132 = por %p130, %p131
    %p134 = scmp.ne.s32.totalorder %s117, %s133
    %p135 = scmp.eq.s32.totalorder %s19, 0
    %p136 = por %p134, %p135
    %p137 = scmp.le.s32.totalorder 1, %s13
    %p138 = scmp.lt.s32.totalorder %s13, 5
    %p139 = pnand %p137, %p138
    %p140 = pneg %p139
    // Predicated region
    $region9: #{fwd.5} parent=5 // pred_check
      _
    $region10: #{fwd.5} parent=5 // pred_check_branch
      %142 = sbr.rel (%p139) target = $region12
    $region11: #{fwd.5} parent=5 // pred_region
      %s143 = ssub.s32 %s13, 1
    $region12: #{fwd.5} parent=5 // pred_fallthru
      _
    %p144 = scmp.lt.s32.totalorder %s13, 4
    // Predicated region
    $region13: #{fwd.5} parent=5 // pred_check
      %p145 = pneg %p144
    $region14: #{fwd.5} parent=5 // pred_check_branch
      %147 = sbr.rel (%p145) target = $region16
    $region15: #{fwd.5} parent=5 // pred_region
      // Predicated region
      $region17: #{fwd.5} parent=15 // pred_check
        %p148 = pneg %p45
      $region18: #{fwd.5} parent=15 // pred_check_branch
        %150 = sbr.rel (%p148) target = $region20
      $region19: #{fwd.5} parent=15 // pred_region
        %s151 = smul.u32 16, %s20
        %p152 = scmp.lt.s32.totalorder %s151, 31
        %s153 = scalar_select %p152, %s151, 31
        %s154 = smul.addr %s153, 4
        %s155 = scalar_lea.vmem %s2, %s154
        %s156 = smul.u32 16, %s20
      $region20: #{fwd.5} parent=15 // pred_fallthru
        _
      // Predicated region
      $region21: #{fwd.5} parent=15 // pred_check
        %p157 = pneg %p71
      $region22: #{fwd.5} parent=15 // pred_check_branch
        %159 = sbr.rel (%p157) target = $region24
      $region23: #{fwd.5} parent=15 // pred_region
        %s160 = smul.u32 16, %s21
        %p161 = scmp.lt.s32.totalorder %s160, 31
        %s162 = scalar_select %p161, %s160, 31
        %s163 = smul.addr %s162, 4
        %s164 = scalar_lea.vmem %s3, %s163
        %s165 = smul.u32 16, %s21
      $region24: #{fwd.5} parent=15 // pred_fallthru
        _
      // Predicated region
      $region25: #{fwd.5} parent=15 // pred_check
        %p166 = pneg %p97
      $region26: #{fwd.5} parent=15 // pred_check_branch
        %168 = sbr.rel (%p166) target = $region28
      $region27: #{fwd.5} parent=15 // pred_region
        %p169 = scmp.lt.s32.totalorder %s21, 1
        %s170 = scalar_select %p169, %s21, 1
        %s171 = scalar_lea.vmem %s4, %s170
      $region28: #{fwd.5} parent=15 // pred_fallthru
        _
    $region16: #{fwd.5} parent=5 // pred_fallthru
      _
    %p172 = scmp.le.s32.totalorder 1, %s13
    %p173 = scmp.lt.s32.totalorder %s13, 5
    %p174 = pnand %p172, %p173
    %p175 = pneg %p174
    // Predicated region
    $region29: #{fwd.5} parent=5 // pred_check
      _
    $region30: #{fwd.5} parent=5 // pred_check_branch
      %177 = sbr.rel (%p174) target = $region32
    $region31: #{fwd.5} parent=5 // pred_region
      %s178 = ssub.s32 %s13, 1
      %s179 = smul.u32 16, %s22
      %p180 = scmp.lt.s32.totalorder %s179, 31
      %s181 = scalar_select %p180, %s179, 31
      %s182 = smul.addr %s181, 4
      %s183 = scalar_lea.vmem %s2, %s182
      %p184 = pneg %p51
      %p185 = pneg %p48
      %s186 = smul.u32 16, %s23
      %p187 = scmp.lt.s32.totalorder %s186, 31
      %s188 = scalar_select %p187, %s186, 31
      %s189 = smul.addr %s188, 4
      %s190 = scalar_lea.vmem %s3, %s189
      %p191 = pneg %p77
      %p192 = pneg %p74
      %p193 = scmp.lt.s32.totalorder %s23, 1
      %s194 = scalar_select %p193, %s23, 1
      %s195 = scalar_lea.vmem %s4, %s194
      %p196 = pneg %p103
      %p197 = pneg %p100
      %p198 = pneg %p129
      %p199 = pneg %p126
      %s200 = smul.u32 16, %s22
      %p201 = scmp.lt.s32.totalorder %s200, 31
      %s202 = scalar_select %p201, %s200, 31
      %s203 = smul.addr %s202, 8
      %s204 = scalar_lea.vmem %s5, %s203
      %s205 = smul.u32 16, %s22
      %p206 = scmp.lt.s32.totalorder %s205, 31
      %s207 = scalar_select %p206, %s205, 31
      %s208 = smul.addr %s207, 4
      %s209 = scalar_lea.vmem %s2, %s208
      %s210 = smul.u32 16, %s22
      %s211 = smul.u32 16, %s23
      %p212 = scmp.lt.s32.totalorder %s211, 31
      %s213 = scalar_select %p212, %s211, 31
      %s214 = smul.addr %s213, 4
      %s215 = scalar_lea.vmem %s3, %s214
      %s216 = smul.u32 16, %s23
      %p217 = scmp.lt.s32.totalorder %s23, 1
      %s218 = scalar_select %p217, %s23, 1
      %s219 = scalar_lea.vmem %s4, %s218
      %s220 = smul.u32 16, %s22
      %p221 = scmp.lt.s32.totalorder %s220, 31
      %s222 = scalar_select %p221, %s220, 31
      %s223 = smul.addr %s222, 8
      %s224 = scalar_lea.vmem %s5, %s223
      %s225 = smul.u32 16, %s22
      %p226 = scmp.eq.s32.totalorder %s23, 0
      // Predicated region
      $region33: #{fwd.5} parent=31 // pred_check
        %p227 = pneg %p226
      $region34: #{fwd.5} parent=31 // pred_check_branch
        %229 = sbr.rel (%p227) target = $region36
      $region35: #{fwd.5} parent=31 // pred_region
        %vm230 = vcmask 7168
        %231 = vst.msk [vmem:[#allocation2] sm:$0xff] %vm230, -1e+30
        %232 = vst.msk [vmem:[#allocation2 + $0x8] sm:$0xff] %vm230, -1e+30
        %233 = vst.msk [vmem:[#allocation2 + $0x10] sm:$0xff] %vm230, -1e+30
        %234 = vst.msk [vmem:[#allocation2 + $0x18] sm:$0xff] %vm230, -1e+30
        %235 = vst.msk [vmem:[#allocation2 + $0x20] sm:$0xff] %vm230, -1e+30
        %236 = vst.msk [vmem:[#allocation2 + $0x28] sm:$0xff] %vm230, -1e+30
        %237 = vst.msk [vmem:[#allocation2 + $0x30] sm:$0xff] %vm230, -1e+30
        %238 = vst.msk [vmem:[#allocation2 + $0x38] sm:$0xff] %vm230, -1e+30
        %239 = vst.msk [vmem:[#allocation2 + $0x40] sm:$0xff] %vm230, -1e+30
        %240 = vst.msk [vmem:[#allocation2 + $0x48] sm:$0xff] %vm230, -1e+30
        %241 = vst.msk [vmem:[#allocation2 + $0x50] sm:$0xff] %vm230, -1e+30
        %242 = vst.msk [vmem:[#allocation2 + $0x58] sm:$0xff] %vm230, -1e+30
        %243 = vst.msk [vmem:[#allocation2 + $0x60] sm:$0xff] %vm230, -1e+30
        %244 = vst.msk [vmem:[#allocation2 + $0x68] sm:$0xff] %vm230, -1e+30
        %245 = vst.msk [vmem:[#allocation2 + $0x70] sm:$0xff] %vm230, -1e+30
        %246 = vst.msk [vmem:[#allocation2 + $0x78] sm:$0xff] %vm230, -1e+30
        %247 = vst.msk [vmem:[#allocation3] sm:$0xff] %vm230, 0.0
        %248 = vst.msk [vmem:[#allocation3 + $0x8] sm:$0xff] %vm230, 0.0
        %249 = vst.msk [vmem:[#allocation3 + $0x10] sm:$0xff] %vm230, 0.0
        %250 = vst.msk [vmem:[#allocation3 + $0x18] sm:$0xff] %vm230, 0.0
        %251 = vst.msk [vmem:[#allocation3 + $0x20] sm:$0xff] %vm230, 0.0
        %252 = vst.msk [vmem:[#allocation3 + $0x28] sm:$0xff] %vm230, 0.0
        %253 = vst.msk [vmem:[#allocation3 + $0x30] sm:$0xff] %vm230, 0.0
        %254 = vst.msk [vmem:[#allocation3 + $0x38] sm:$0xff] %vm230, 0.0
        %255 = vst.msk [vmem:[#allocation3 + $0x40] sm:$0xff] %vm230, 0.0
        %256 = vst.msk [vmem:[#allocation3 + $0x48] sm:$0xff] %vm230, 0.0
        %257 = vst.msk [vmem:[#allocation3 + $0x50] sm:$0xff] %vm230, 0.0
        %258 = vst.msk [vmem:[#allocation3 + $0x58] sm:$0xff] %vm230, 0.0
        %259 = vst.msk [vmem:[#allocation3 + $0x60] sm:$0xff] %vm230, 0.0
        %260 = vst.msk [vmem:[#allocation3 + $0x68] sm:$0xff] %vm230, 0.0
        %261 = vst.msk [vmem:[#allocation3 + $0x70] sm:$0xff] %vm230, 0.0
        %262 = vst.msk [vmem:[#allocation3 + $0x78] sm:$0xff] %vm230, 0.0
        %263 = vst.msk [vmem:[#allocation4] sm:$0xff] %vm230, 0.0
        %264 = vst.msk [vmem:[#allocation4 + $0x8] sm:$0xff] %vm230, 0.0
        %265 = vst.msk [vmem:[#allocation4 + $0x10] sm:$0xff] %vm230, 0.0
        %266 = vst.msk [vmem:[#allocation4 + $0x18] sm:$0xff] %vm230, 0.0
        %267 = vst.msk [vmem:[#allocation4 + $0x20] sm:$0xff] %vm230, 0.0
        %268 = vst.msk [vmem:[#allocation4 + $0x28] sm:$0xff] %vm230, 0.0
        %269 = vst.msk [vmem:[#allocation4 + $0x30] sm:$0xff] %vm230, 0.0
        %270 = vst.msk [vmem:[#allocation4 + $0x38] sm:$0xff] %vm230, 0.0
        %271 = vst.msk [vmem:[#allocation4 + $0x40] sm:$0xff] %vm230, 0.0
        %272 = vst.msk [vmem:[#allocation4 + $0x48] sm:$0xff] %vm230, 0.0
        %273 = vst.msk [vmem:[#allocation4 + $0x50] sm:$0xff] %vm230, 0.0
        %274 = vst.msk [vmem:[#allocation4 + $0x58] sm:$0xff] %vm230, 0.0
        %275 = vst.msk [vmem:[#allocation4 + $0x60] sm:$0xff] %vm230, 0.0
        %276 = vst.msk [vmem:[#allocation4 + $0x68] sm:$0xff] %vm230, 0.0
        %277 = vst.msk [vmem:[#allocation4 + $0x70] sm:$0xff] %vm230, 0.0
        %278 = vst.msk [vmem:[#allocation4 + $0x78] sm:$0xff] %vm230, 0.0
      $region36: #{fwd.5} parent=31 // pred_fallthru
        _
      %v279 = vld [vmem:[%s209] sm:$0xf]
      %v280 = vld [vmem:[%s209 + $0x4] sm:$0xf]
      %v281 = vld [vmem:[%s209 + $0x8] sm:$0xf]
      %v282 = vld [vmem:[%s209 + $0xc] sm:$0xf]
      %v283 = vld [vmem:[%s209 + $0x10] sm:$0xf]
      %v284 = vld [vmem:[%s209 + $0x14] sm:$0xf]
      %v285 = vld [vmem:[%s209 + $0x18] sm:$0xf]
      %v286 = vld [vmem:[%s209 + $0x1c] sm:$0xf]
      %v287 = vld [vmem:[%s209 + $0x20] sm:$0xf]
      %v288 = vld [vmem:[%s209 + $0x24] sm:$0xf]
      %v289 = vld [vmem:[%s209 + $0x28] sm:$0xf]
      %v290 = vld [vmem:[%s209 + $0x2c] sm:$0xf]
      %v291 = vld [vmem:[%s209 + $0x30] sm:$0xf]
      %v292 = vld [vmem:[%s209 + $0x34] sm:$0xf]
      %v293 = vld [vmem:[%s209 + $0x38] sm:$0xf]
      %v294 = vld [vmem:[%s209 + $0x3c] sm:$0xf]
      %v295 = vld [vmem:[%s215] sm:$0xf]
      %v296 = vld [vmem:[%s215 + $0x4] sm:$0xf]
      %v297 = vld [vmem:[%s215 + $0x8] sm:$0xf]
      %v298 = vld [vmem:[%s215 + $0xc] sm:$0xf]
      %v299 = vld [vmem:[%s215 + $0x10] sm:$0xf]
      %v300 = vld [vmem:[%s215 + $0x14] sm:$0xf]
      %v301 = vld [vmem:[%s215 + $0x18] sm:$0xf]
      %v302 = vld [vmem:[%s215 + $0x1c] sm:$0xf]
      %v303 = vld [vmem:[%s215 + $0x20] sm:$0xf]
      %v304 = vld [vmem:[%s215 + $0x24] sm:$0xf]
      %v305 = vld [vmem:[%s215 + $0x28] sm:$0xf]
      %v306 = vld [vmem:[%s215 + $0x2c] sm:$0xf]
      %v307 = vld [vmem:[%s215 + $0x30] sm:$0xf]
      %v308 = vld [vmem:[%s215 + $0x34] sm:$0xf]
      %v309 = vld [vmem:[%s215 + $0x38] sm:$0xf]
      %v310 = vld [vmem:[%s215 + $0x3c] sm:$0xf]
      %v327 = vunpack.c.l.b16 %v279
      %v328 = vunpack.c.l.b16 %v280
      %v329 = vunpack.c.l.b16 %v281
      %v330 = vunpack.c.l.b16 %v282
      %v331 = vunpack.c.l.b16 %v283
      %v332 = vunpack.c.l.b16 %v284
      %v333 = vunpack.c.l.b16 %v285
      %v334 = vunpack.c.l.b16 %v286
      %v335 = vunpack.c.l.b16 %v287
      %v336 = vunpack.c.l.b16 %v288
      %v337 = vunpack.c.l.b16 %v289
      %v338 = vunpack.c.l.b16 %v290
      %v339 = vunpack.c.l.b16 %v291
      %v340 = vunpack.c.l.b16 %v292
      %v341 = vunpack.c.l.b16 %v293
      %v342 = vunpack.c.l.b16 %v294
      %v343 = vpack.c.b16 %v328, %v327
      %v344 = vpack.c.b16 %v330, %v329
      %v345 = vpack.c.b16 %v332, %v331
      %v346 = vpack.c.b16 %v334, %v333
      %v347 = vpack.c.b16 %v336, %v335
      %v348 = vpack.c.b16 %v338, %v337
      %v349 = vpack.c.b16 %v340, %v339
      %v350 = vpack.c.b16 %v342, %v341
      %v367 = vunpack.c.l.b16 %v295
      %v368 = vunpack.c.l.b16 %v296
      %v369 = vunpack.c.l.b16 %v297
      %v370 = vunpack.c.l.b16 %v298
      %v371 = vunpack.c.l.b16 %v299
      %v372 = vunpack.c.l.b16 %v300
      %v373 = vunpack.c.l.b16 %v301
      %v374 = vunpack.c.l.b16 %v302
      %v375 = vunpack.c.l.b16 %v303
      %v376 = vunpack.c.l.b16 %v304
      %v377 = vunpack.c.l.b16 %v305
      %v378 = vunpack.c.l.b16 %v306
      %v379 = vunpack.c.l.b16 %v307
      %v380 = vunpack.c.l.b16 %v308
      %v381 = vunpack.c.l.b16 %v309
      %v382 = vunpack.c.l.b16 %v310
      %v383 = vpack.c.b16 %v368, %v367
      %v384 = vpack.c.b16 %v370, %v369
      %v385 = vpack.c.b16 %v372, %v371
      %v386 = vpack.c.b16 %v374, %v373
      %v387 = vpack.c.b16 %v376, %v375
      %v388 = vpack.c.b16 %v378, %v377
      %v389 = vpack.c.b16 %v380, %v379
      %v390 = vpack.c.b16 %v382, %v381
      %vm391 = vcmask 261120
      %v393 = vsel %vm391, %v343, 0
      %v396 = vsel %vm391, %v344, 0
      %v399 = vsel %vm391, %v345, 0
      %v402 = vsel %vm391, %v346, 0
      %v405 = vsel %vm391, %v347, 0
      %v408 = vsel %vm391, %v348, 0
      %v411 = vsel %vm391, %v349, 0
      %v414 = vsel %vm391, %v350, 0
      %v417 = vsel %vm391, %v383, 0
      %v420 = vsel %vm391, %v384, 0
      %v423 = vsel %vm391, %v385, 0
      %v426 = vsel %vm391, %v386, 0
      %v429 = vsel %vm391, %v387, 0
      %v432 = vsel %vm391, %v388, 0
      %v435 = vsel %vm391, %v389, 0
      %v438 = vsel %vm391, %v390, 0
      %440 = vmatpush.bf16.xpose.msra.mxu0 %v438
      %441 = vmatpush.bf16.xpose.msra.mxu0 %v435
      %442 = vmatpush.bf16.xpose.msra.mxu0 %v432
      %443 = vmatpush.bf16.xpose.msra.mxu0 %v429
      %444 = vmatpush.bf16.xpose.msra.mxu0 %v426
      %445 = vmatpush.bf16.xpose.msra.mxu0 %v423
      %446 = vmatpush.bf16.xpose.msra.mxu0 %v420
      %447 = vmatpush.bf16.xpose.msra.mxu0 %v417
      %448 = vmatmul.bf16.gmra.mxu0 %v393
      %v449 = vpop.f32.mrf.mxu0
      %v450 = vadd.f32 0.0, %v449
      %v451 = vpop.f32.mrf.mxu0
      %v452 = vadd.f32 0.0, %v451
      %453 = vmatmul.bf16.gmra.mxu0 %v396
      %v454 = vpop.f32.mrf.mxu0
      %v455 = vadd.f32 0.0, %v454
      %v456 = vpop.f32.mrf.mxu0
      %v457 = vadd.f32 0.0, %v456
      %458 = vmatmul.bf16.gmra.mxu0 %v399
      %v459 = vpop.f32.mrf.mxu0
      %v460 = vadd.f32 0.0, %v459
      %v461 = vpop.f32.mrf.mxu0
      %v462 = vadd.f32 0.0, %v461
      %463 = vmatmul.bf16.gmra.mxu0 %v402
      %v464 = vpop.f32.mrf.mxu0
      %v465 = vadd.f32 0.0, %v464
      %v466 = vpop.f32.mrf.mxu0
      %v467 = vadd.f32 0.0, %v466
      %468 = vmatmul.bf16.gmra.mxu0 %v405
      %v469 = vpop.f32.mrf.mxu0
      %v470 = vadd.f32 0.0, %v469
      %v471 = vpop.f32.mrf.mxu0
      %v472 = vadd.f32 0.0, %v471
      %473 = vmatmul.bf16.gmra.mxu0 %v408
      %v474 = vpop.f32.mrf.mxu0
      %v475 = vadd.f32 0.0, %v474
      %v476 = vpop.f32.mrf.mxu0
      %v477 = vadd.f32 0.0, %v476
      %478 = vmatmul.bf16.gmra.mxu0 %v411
      %v479 = vpop.f32.mrf.mxu0
      %v480 = vadd.f32 0.0, %v479
      %v481 = vpop.f32.mrf.mxu0
      %v482 = vadd.f32 0.0, %v481
      %483 = vmatmul.bf16.gmra.mxu0 %v414
      %v484 = vpop.f32.mrf.mxu0
      %v485 = vadd.f32 0.0, %v484
      %v486 = vpop.f32.mrf.mxu0
      %v487 = vadd.f32 0.0, %v486
      %488 = vdwg.mxu0
      %s489 = sld [smem:[#allocation7]]
      %v490 = vstv %s489
      %v491 = vmul.f32 %v450, %v490
      %v492 = vmul.f32 %v452, %v490
      %v493 = vmul.f32 %v455, %v490
      %v494 = vmul.f32 %v457, %v490
      %v495 = vmul.f32 %v460, %v490
      %v496 = vmul.f32 %v462, %v490
      %v497 = vmul.f32 %v465, %v490
      %v498 = vmul.f32 %v467, %v490
      %v499 = vmul.f32 %v470, %v490
      %v500 = vmul.f32 %v472, %v490
      %v501 = vmul.f32 %v475, %v490
      %v502 = vmul.f32 %v477, %v490
      %v503 = vmul.f32 %v480, %v490
      %v504 = vmul.f32 %v482, %v490
      %v505 = vmul.f32 %v485, %v490
      %v506 = vmul.f32 %v487, %v490
      %v507 = vlaneseq
      %v508 = vand.u32 %v507, 127
      %s509 = smul.u32 %s23, 128
      %v510 = vstv %s509
      %v511 = vadd.s32 %v508, %v510
      %s512 = sld [smem:[#allocation6]]
      %v513 = vstv %s512
      %vm514 = vcmp.lt.s32.totalorder %v511, %v513
      %v515 = vsel %vm514, %v491, -1e+30
      %v516 = vsel %vm514, %v492, -1e+30
      %v517 = vsel %vm514, %v493, -1e+30
      %v518 = vsel %vm514, %v494, -1e+30
      %v519 = vsel %vm514, %v495, -1e+30
      %v520 = vsel %vm514, %v496, -1e+30
      %v521 = vsel %vm514, %v497, -1e+30
      %v522 = vsel %vm514, %v498, -1e+30
      %v523 = vsel %vm514, %v499, -1e+30
      %v524 = vsel %vm514, %v500, -1e+30
      %v525 = vsel %vm514, %v501, -1e+30
      %v526 = vsel %vm514, %v502, -1e+30
      %v527 = vsel %vm514, %v503, -1e+30
      %v528 = vsel %vm514, %v504, -1e+30
      %v529 = vsel %vm514, %v505, -1e+30
      %v530 = vsel %vm514, %v506, -1e+30
      %v531 = vld [vmem:[#allocation2] sm:$0xff]
      %v532 = vld [vmem:[#allocation2 + $0x8] sm:$0xff]
      %v533 = vld [vmem:[#allocation2 + $0x10] sm:$0xff]
      %v534 = vld [vmem:[#allocation2 + $0x18] sm:$0xff]
      %v535 = vld [vmem:[#allocation2 + $0x20] sm:$0xff]
      %v536 = vld [vmem:[#allocation2 + $0x28] sm:$0xff]
      %v537 = vld [vmem:[#allocation2 + $0x30] sm:$0xff]
      %v538 = vld [vmem:[#allocation2 + $0x38] sm:$0xff]
      %v539 = vld [vmem:[#allocation2 + $0x40] sm:$0xff]
      %v540 = vld [vmem:[#allocation2 + $0x48] sm:$0xff]
      %v541 = vld [vmem:[#allocation2 + $0x50] sm:$0xff]
      %v542 = vld [vmem:[#allocation2 + $0x58] sm:$0xff]
      %v543 = vld [vmem:[#allocation2 + $0x60] sm:$0xff]
      %v544 = vld [vmem:[#allocation2 + $0x68] sm:$0xff]
      %v545 = vld [vmem:[#allocation2 + $0x70] sm:$0xff]
      %v546 = vld [vmem:[#allocation2 + $0x78] sm:$0xff]
      %547 = vmax.xlane.f32.xlu0 %v515
      %v548 = vpop.xlane.xlu0 %547
      %549 = vmax.xlane.f32.xlu0 %v516
      %v550 = vpop.xlane.xlu0 %549
      %551 = vmax.xlane.f32.xlu0 %v517
      %v552 = vpop.xlane.xlu0 %551
      %553 = vmax.xlane.f32.xlu0 %v518
      %v554 = vpop.xlane.xlu0 %553
      %555 = vmax.xlane.f32.xlu0 %v519
      %v556 = vpop.xlane.xlu0 %555
      %557 = vmax.xlane.f32.xlu0 %v520
      %v558 = vpop.xlane.xlu0 %557
      %559 = vmax.xlane.f32.xlu0 %v521
      %v560 = vpop.xlane.xlu0 %559
      %561 = vmax.xlane.f32.xlu0 %v522
      %v562 = vpop.xlane.xlu0 %561
      %563 = vmax.xlane.f32.xlu0 %v523
      %v564 = vpop.xlane.xlu0 %563
      %565 = vmax.xlane.f32.xlu0 %v524
      %v566 = vpop.xlane.xlu0 %565
      %567 = vmax.xlane.f32.xlu0 %v525
      %v568 = vpop.xlane.xlu0 %567
      %569 = vmax.xlane.f32.xlu0 %v526
      %v570 = vpop.xlane.xlu0 %569
      %571 = vmax.xlane.f32.xlu0 %v527
      %v572 = vpop.xlane.xlu0 %571
      %573 = vmax.xlane.f32.xlu0 %v528
      %v574 = vpop.xlane.xlu0 %573
      %575 = vmax.xlane.f32.xlu0 %v529
      %v576 = vpop.xlane.xlu0 %575
      %577 = vmax.xlane.f32.xlu0 %v530
      %v578 = vpop.xlane.xlu0 %577
      %v579 = vmax.f32 %v531, %v548
      %v580 = vmax.f32 %v532, %v550
      %v581 = vmax.f32 %v533, %v552
      %v582 = vmax.f32 %v534, %v554
      %v583 = vmax.f32 %v535, %v556
      %v584 = vmax.f32 %v536, %v558
      %v585 = vmax.f32 %v537, %v560
      %v586 = vmax.f32 %v538, %v562
      %v587 = vmax.f32 %v539, %v564
      %v588 = vmax.f32 %v540, %v566
      %v589 = vmax.f32 %v541, %v568
      %v590 = vmax.f32 %v542, %v570
      %v591 = vmax.f32 %v543, %v572
      %v592 = vmax.f32 %v544, %v574
      %v593 = vmax.f32 %v545, %v576
      %v594 = vmax.f32 %v546, %v578
      %v595 = vsub.f32 %v531, %v579
      %v596 = vsub.f32 %v532, %v580
      %v597 = vsub.f32 %v533, %v581
      %v598 = vsub.f32 %v534, %v582
      %v599 = vsub.f32 %v535, %v583
      %v600 = vsub.f32 %v536, %v584
      %v601 = vsub.f32 %v537, %v585
      %v602 = vsub.f32 %v538, %v586
      %v603 = vsub.f32 %v539, %v587
      %v604 = vsub.f32 %v540, %v588
      %v605 = vsub.f32 %v541, %v589
      %v606 = vsub.f32 %v542, %v590
      %v607 = vsub.f32 %v543, %v591
      %v608 = vsub.f32 %v544, %v592
      %v609 = vsub.f32 %v545, %v593
      %v610 = vsub.f32 %v546, %v594
      %v611 = vmul.f32 %v595, 1.442695
      %v612 = vpow.pop %v611
      %v613 = vmul.f32 %v596, 1.442695
      %v614 = vpow.pop %v613
      %v615 = vmul.f32 %v597, 1.442695
      %v616 = vpow.pop %v615
      %v617 = vmul.f32 %v598, 1.442695
      %v618 = vpow.pop %v617
      %v619 = vmul.f32 %v599, 1.442695
      %v620 = vpow.pop %v619
      %v621 = vmul.f32 %v600, 1.442695
      %v622 = vpow.pop %v621
      %v623 = vmul.f32 %v601, 1.442695
      %v624 = vpow.pop %v623
      %v625 = vmul.f32 %v602, 1.442695
      %v626 = vpow.pop %v625
      %v627 = vmul.f32 %v603, 1.442695
      %v628 = vpow.pop %v627
      %v629 = vmul.f32 %v604, 1.442695
      %v630 = vpow.pop %v629
      %v631 = vmul.f32 %v605, 1.442695
      %v632 = vpow.pop %v631
      %v633 = vmul.f32 %v606, 1.442695
      %v634 = vpow.pop %v633
      %v635 = vmul.f32 %v607, 1.442695
      %v636 = vpow.pop %v635
      %v637 = vmul.f32 %v608, 1.442695
      %v638 = vpow.pop %v637
      %v639 = vmul.f32 %v609, 1.442695
      %v640 = vpow.pop %v639
      %v641 = vmul.f32 %v610, 1.442695
      %v642 = vpow.pop %v641
      %644 = vset.pattern.permute.xlu0 0
      %645 = vperm.xlu0 %644, %v579
      %v646 = vpop.permute.xlu0 %645
      %649 = vset.pattern.permute.xlu0 0
      %650 = vperm.xlu0 %649, %v580
      %v651 = vpop.permute.xlu0 %650
      %654 = vset.pattern.permute.xlu0 0
      %655 = vperm.xlu0 %654, %v581
      %v656 = vpop.permute.xlu0 %655
      %659 = vset.pattern.permute.xlu0 0
      %660 = vperm.xlu0 %659, %v582
      %v661 = vpop.permute.xlu0 %660
      %664 = vset.pattern.permute.xlu0 0
      %665 = vperm.xlu0 %664, %v583
      %v666 = vpop.permute.xlu0 %665
      %669 = vset.pattern.permute.xlu0 0
      %670 = vperm.xlu0 %669, %v584
      %v671 = vpop.permute.xlu0 %670
      %674 = vset.pattern.permute.xlu0 0
      %675 = vperm.xlu0 %674, %v585
      %v676 = vpop.permute.xlu0 %675
      %679 = vset.pattern.permute.xlu0 0
      %680 = vperm.xlu0 %679, %v586
      %v681 = vpop.permute.xlu0 %680
      %684 = vset.pattern.permute.xlu0 0
      %685 = vperm.xlu0 %684, %v587
      %v686 = vpop.permute.xlu0 %685
      %689 = vset.pattern.permute.xlu0 0
      %690 = vperm.xlu0 %689, %v588
      %v691 = vpop.permute.xlu0 %690
      %694 = vset.pattern.permute.xlu0 0
      %695 = vperm.xlu0 %694, %v589
      %v696 = vpop.permute.xlu0 %695
      %699 = vset.pattern.permute.xlu0 0
      %700 = vperm.xlu0 %699, %v590
      %v701 = vpop.permute.xlu0 %700
      %704 = vset.pattern.permute.xlu0 0
      %705 = vperm.xlu0 %704, %v591
      %v706 = vpop.permute.xlu0 %705
      %709 = vset.pattern.permute.xlu0 0
      %710 = vperm.xlu0 %709, %v592
      %v711 = vpop.permute.xlu0 %710
      %714 = vset.pattern.permute.xlu0 0
      %715 = vperm.xlu0 %714, %v593
      %v716 = vpop.permute.xlu0 %715
      %719 = vset.pattern.permute.xlu0 0
      %720 = vperm.xlu0 %719, %v594
      %v721 = vpop.permute.xlu0 %720
      %v723 = vsub.f32 %v515, %v646
      %v724 = vsub.f32 %v516, %v651
      %v725 = vsub.f32 %v517, %v656
      %v726 = vsub.f32 %v518, %v661
      %v727 = vsub.f32 %v519, %v666
      %v728 = vsub.f32 %v520, %v671
      %v729 = vsub.f32 %v521, %v676
      %v730 = vsub.f32 %v522, %v681
      %v731 = vsub.f32 %v523, %v686
      %v732 = vsub.f32 %v524, %v691
      %v733 = vsub.f32 %v525, %v696
      %v734 = vsub.f32 %v526, %v701
      %v735 = vsub.f32 %v527, %v706
      %v736 = vsub.f32 %v528, %v711
      %v737 = vsub.f32 %v529, %v716
      %v738 = vsub.f32 %v530, %v721
      %v739 = vmul.f32 %v723, 1.442695
      %v740 = vpow.pop %v739
      %v741 = vmul.f32 %v724, 1.442695
      %v742 = vpow.pop %v741
      %v743 = vmul.f32 %v725, 1.442695
      %v744 = vpow.pop %v743
      %v745 = vmul.f32 %v726, 1.442695
      %v746 = vpow.pop %v745
      %v747 = vmul.f32 %v727, 1.442695
      %v748 = vpow.pop %v747
      %v749 = vmul.f32 %v728, 1.442695
      %v750 = vpow.pop %v749
      %v751 = vmul.f32 %v729, 1.442695
      %v752 = vpow.pop %v751
      %v753 = vmul.f32 %v730, 1.442695
      %v754 = vpow.pop %v753
      %v755 = vmul.f32 %v731, 1.442695
      %v756 = vpow.pop %v755
      %v757 = vmul.f32 %v732, 1.442695
      %v758 = vpow.pop %v757
      %v759 = vmul.f32 %v733, 1.442695
      %v760 = vpow.pop %v759
      %v761 = vmul.f32 %v734, 1.442695
      %v762 = vpow.pop %v761
      %v763 = vmul.f32 %v735, 1.442695
      %v764 = vpow.pop %v763
      %v765 = vmul.f32 %v736, 1.442695
      %v766 = vpow.pop %v765
      %v767 = vmul.f32 %v737, 1.442695
      %v768 = vpow.pop %v767
      %v769 = vmul.f32 %v738, 1.442695
      %v770 = vpow.pop %v769
      %v771 = vld [vmem:[#allocation3] sm:$0xff]
      %v772 = vld [vmem:[#allocation3 + $0x8] sm:$0xff]
      %v773 = vld [vmem:[#allocation3 + $0x10] sm:$0xff]
      %v774 = vld [vmem:[#allocation3 + $0x18] sm:$0xff]
      %v775 = vld [vmem:[#allocation3 + $0x20] sm:$0xff]
      %v776 = vld [vmem:[#allocation3 + $0x28] sm:$0xff]
      %v777 = vld [vmem:[#allocation3 + $0x30] sm:$0xff]
      %v778 = vld [vmem:[#allocation3 + $0x38] sm:$0xff]
      %v779 = vld [vmem:[#allocation3 + $0x40] sm:$0xff]
      %v780 = vld [vmem:[#allocation3 + $0x48] sm:$0xff]
      %v781 = vld [vmem:[#allocation3 + $0x50] sm:$0xff]
      %v782 = vld [vmem:[#allocation3 + $0x58] sm:$0xff]
      %v783 = vld [vmem:[#allocation3 + $0x60] sm:$0xff]
      %v784 = vld [vmem:[#allocation3 + $0x68] sm:$0xff]
      %v785 = vld [vmem:[#allocation3 + $0x70] sm:$0xff]
      %v786 = vld [vmem:[#allocation3 + $0x78] sm:$0xff]
      %v787 = vmul.f32 %v612, %v771
      %v788 = vmul.f32 %v614, %v772
      %v789 = vmul.f32 %v616, %v773
      %v790 = vmul.f32 %v618, %v774
      %v791 = vmul.f32 %v620, %v775
      %v792 = vmul.f32 %v622, %v776
      %v793 = vmul.f32 %v624, %v777
      %v794 = vmul.f32 %v626, %v778
      %v795 = vmul.f32 %v628, %v779
      %v796 = vmul.f32 %v630, %v780
      %v797 = vmul.f32 %v632, %v781
      %v798 = vmul.f32 %v634, %v782
      %v799 = vmul.f32 %v636, %v783
      %v800 = vmul.f32 %v638, %v784
      %v801 = vmul.f32 %v640, %v785
      %v802 = vmul.f32 %v642, %v786
      %803 = vadd.xlane.f32.xlu0 %v740
      %v804 = vpop.xlane.xlu0 %803
      %805 = vadd.xlane.f32.xlu0 %v742
      %v806 = vpop.xlane.xlu0 %805
      %807 = vadd.xlane.f32.xlu0 %v744
      %v808 = vpop.xlane.xlu0 %807
      %809 = vadd.xlane.f32.xlu0 %v746
      %v810 = vpop.xlane.xlu0 %809
      %811 = vadd.xlane.f32.xlu0 %v748
      %v812 = vpop.xlane.xlu0 %811
      %813 = vadd.xlane.f32.xlu0 %v750
      %v814 = vpop.xlane.xlu0 %813
      %815 = vadd.xlane.f32.xlu0 %v752
      %v816 = vpop.xlane.xlu0 %815
      %817 = vadd.xlane.f32.xlu0 %v754
      %v818 = vpop.xlane.xlu0 %817
      %819 = vadd.xlane.f32.xlu0 %v756
      %v820 = vpop.xlane.xlu0 %819
      %821 = vadd.xlane.f32.xlu0 %v758
      %v822 = vpop.xlane.xlu0 %821
      %823 = vadd.xlane.f32.xlu0 %v760
      %v824 = vpop.xlane.xlu0 %823
      %825 = vadd.xlane.f32.xlu0 %v762
      %v826 = vpop.xlane.xlu0 %825
      %827 = vadd.xlane.f32.xlu0 %v764
      %v828 = vpop.xlane.xlu0 %827
      %829 = vadd.xlane.f32.xlu0 %v766
      %v830 = vpop.xlane.xlu0 %829
      %831 = vadd.xlane.f32.xlu0 %v768
      %v832 = vpop.xlane.xlu0 %831
      %833 = vadd.xlane.f32.xlu0 %v770
      %v834 = vpop.xlane.xlu0 %833
      %v835 = vadd.f32 %v787, %v804
      %v836 = vadd.f32 %v788, %v806
      %v837 = vadd.f32 %v789, %v808
      %v838 = vadd.f32 %v790, %v810
      %v839 = vadd.f32 %v791, %v812
      %v840 = vadd.f32 %v792, %v814
      %v841 = vadd.f32 %v793, %v816
      %v842 = vadd.f32 %v794, %v818
      %v843 = vadd.f32 %v795, %v820
      %v844 = vadd.f32 %v796, %v822
      %v845 = vadd.f32 %v797, %v824
      %v846 = vadd.f32 %v798, %v826
      %v847 = vadd.f32 %v799, %v828
      %v848 = vadd.f32 %v800, %v830
      %v849 = vadd.f32 %v801, %v832
      %v850 = vadd.f32 %v802, %v834
      %vm851 = vcmask 7168
      %852 = vst.msk [vmem:[#allocation3] sm:$0xff] %vm851, %v835
      %853 = vst.msk [vmem:[#allocation3 + $0x8] sm:$0xff] %vm851, %v836
      %854 = vst.msk [vmem:[#allocation3 + $0x10] sm:$0xff] %vm851, %v837
      %855 = vst.msk [vmem:[#allocation3 + $0x18] sm:$0xff] %vm851, %v838
      %856 = vst.msk [vmem:[#allocation3 + $0x20] sm:$0xff] %vm851, %v839
      %857 = vst.msk [vmem:[#allocation3 + $0x28] sm:$0xff] %vm851, %v840
      %858 = vst.msk [vmem:[#allocation3 + $0x30] sm:$0xff] %vm851, %v841
      %859 = vst.msk [vmem:[#allocation3 + $0x38] sm:$0xff] %vm851, %v842
      %860 = vst.msk [vmem:[#allocation3 + $0x40] sm:$0xff] %vm851, %v843
      %861 = vst.msk [vmem:[#allocation3 + $0x48] sm:$0xff] %vm851, %v844
      %862 = vst.msk [vmem:[#allocation3 + $0x50] sm:$0xff] %vm851, %v845
      %863 = vst.msk [vmem:[#allocation3 + $0x58] sm:$0xff] %vm851, %v846
      %864 = vst.msk [vmem:[#allocation3 + $0x60] sm:$0xff] %vm851, %v847
      %865 = vst.msk [vmem:[#allocation3 + $0x68] sm:$0xff] %vm851, %v848
      %866 = vst.msk [vmem:[#allocation3 + $0x70] sm:$0xff] %vm851, %v849
      %867 = vst.msk [vmem:[#allocation3 + $0x78] sm:$0xff] %vm851, %v850
      %v868 = vld [vmem:[#allocation4] sm:$0xff]
      %v869 = vld [vmem:[#allocation4 + $0x8] sm:$0xff]
      %v870 = vld [vmem:[#allocation4 + $0x10] sm:$0xff]
      %v871 = vld [vmem:[#allocation4 + $0x18] sm:$0xff]
      %v872 = vld [vmem:[#allocation4 + $0x20] sm:$0xff]
      %v873 = vld [vmem:[#allocation4 + $0x28] sm:$0xff]
      %v874 = vld [vmem:[#allocation4 + $0x30] sm:$0xff]
      %v875 = vld [vmem:[#allocation4 + $0x38] sm:$0xff]
      %v876 = vld [vmem:[#allocation4 + $0x40] sm:$0xff]
      %v877 = vld [vmem:[#allocation4 + $0x48] sm:$0xff]
      %v878 = vld [vmem:[#allocation4 + $0x50] sm:$0xff]
      %v879 = vld [vmem:[#allocation4 + $0x58] sm:$0xff]
      %v880 = vld [vmem:[#allocation4 + $0x60] sm:$0xff]
      %v881 = vld [vmem:[#allocation4 + $0x68] sm:$0xff]
      %v882 = vld [vmem:[#allocation4 + $0x70] sm:$0xff]
      %v883 = vld [vmem:[#allocation4 + $0x78] sm:$0xff]
      %v884 = vmul.f32 %v612, %v868
      %v885 = vmul.f32 %v614, %v869
      %v886 = vmul.f32 %v616, %v870
      %v887 = vmul.f32 %v618, %v871
      %v888 = vmul.f32 %v620, %v872
      %v889 = vmul.f32 %v622, %v873
      %v890 = vmul.f32 %v624, %v874
      %v891 = vmul.f32 %v626, %v875
      %v892 = vmul.f32 %v628, %v876
      %v893 = vmul.f32 %v630, %v877
      %v894 = vmul.f32 %v632, %v878
      %v895 = vmul.f32 %v634, %v879
      %v896 = vmul.f32 %v636, %v880
      %v897 = vmul.f32 %v638, %v881
      %v898 = vmul.f32 %v640, %v882
      %v899 = vmul.f32 %v642, %v883
      %v900 = vld [vmem:[%s219] sm:$0x1]
      %v902 = vperm.slane %v900, 0
      %v904 = vmul.f32 %v740, %v902
      %v905 = vmul.f32 %v742, %v902
      %v906 = vmul.f32 %v744, %v902
      %v907 = vmul.f32 %v746, %v902
      %v908 = vmul.f32 %v748, %v902
      %v909 = vmul.f32 %v750, %v902
      %v910 = vmul.f32 %v752, %v902
      %v911 = vmul.f32 %v754, %v902
      %v912 = vmul.f32 %v756, %v902
      %v913 = vmul.f32 %v758, %v902
      %v914 = vmul.f32 %v760, %v902
      %v915 = vmul.f32 %v762, %v902
      %v916 = vmul.f32 %v764, %v902
      %v917 = vmul.f32 %v766, %v902
      %v918 = vmul.f32 %v768, %v902
      %v919 = vmul.f32 %v770, %v902
      %920 = vadd.xlane.f32.xlu0 %v904
      %v921 = vpop.xlane.xlu0 %920
      %922 = vadd.xlane.f32.xlu0 %v905
      %v923 = vpop.xlane.xlu0 %922
      %924 = vadd.xlane.f32.xlu0 %v906
      %v925 = vpop.xlane.xlu0 %924
      %926 = vadd.xlane.f32.xlu0 %v907
      %v927 = vpop.xlane.xlu0 %926
      %928 = vadd.xlane.f32.xlu0 %v908
      %v929 = vpop.xlane.xlu0 %928
      %930 = vadd.xlane.f32.xlu0 %v909
      %v931 = vpop.xlane.xlu0 %930
      %932 = vadd.xlane.f32.xlu0 %v910
      %v933 = vpop.xlane.xlu0 %932
      %934 = vadd.xlane.f32.xlu0 %v911
      %v935 = vpop.xlane.xlu0 %934
      %936 = vadd.xlane.f32.xlu0 %v912
      %v937 = vpop.xlane.xlu0 %936
      %938 = vadd.xlane.f32.xlu0 %v913
      %v939 = vpop.xlane.xlu0 %938
      %940 = vadd.xlane.f32.xlu0 %v914
      %v941 = vpop.xlane.xlu0 %940
      %942 = vadd.xlane.f32.xlu0 %v915
      %v943 = vpop.xlane.xlu0 %942
      %944 = vadd.xlane.f32.xlu0 %v916
      %v945 = vpop.xlane.xlu0 %944
      %946 = vadd.xlane.f32.xlu0 %v917
      %v947 = vpop.xlane.xlu0 %946
      %948 = vadd.xlane.f32.xlu0 %v918
      %v949 = vpop.xlane.xlu0 %948
      %950 = vadd.xlane.f32.xlu0 %v919
      %v951 = vpop.xlane.xlu0 %950
      %v952 = vadd.f32 %v884, %v921
      %v953 = vadd.f32 %v885, %v923
      %v954 = vadd.f32 %v886, %v925
      %v955 = vadd.f32 %v887, %v927
      %v956 = vadd.f32 %v888, %v929
      %v957 = vadd.f32 %v889, %v931
      %v958 = vadd.f32 %v890, %v933
      %v959 = vadd.f32 %v891, %v935
      %v960 = vadd.f32 %v892, %v937
      %v961 = vadd.f32 %v893, %v939
      %v962 = vadd.f32 %v894, %v941
      %v963 = vadd.f32 %v895, %v943
      %v964 = vadd.f32 %v896, %v945
      %v965 = vadd.f32 %v897, %v947
      %v966 = vadd.f32 %v898, %v949
      %v967 = vadd.f32 %v899, %v951
      %968 = vst.msk [vmem:[#allocation4] sm:$0xff] %vm851, %v952
      %969 = vst.msk [vmem:[#allocation4 + $0x8] sm:$0xff] %vm851, %v953
      %970 = vst.msk [vmem:[#allocation4 + $0x10] sm:$0xff] %vm851, %v954
      %971 = vst.msk [vmem:[#allocation4 + $0x18] sm:$0xff] %vm851, %v955
      %972 = vst.msk [vmem:[#allocation4 + $0x20] sm:$0xff] %vm851, %v956
      %973 = vst.msk [vmem:[#allocation4 + $0x28] sm:$0xff] %vm851, %v957
      %974 = vst.msk [vmem:[#allocation4 + $0x30] sm:$0xff] %vm851, %v958
      %975 = vst.msk [vmem:[#allocation4 + $0x38] sm:$0xff] %vm851, %v959
      %976 = vst.msk [vmem:[#allocation4 + $0x40] sm:$0xff] %vm851, %v960
      %977 = vst.msk [vmem:[#allocation4 + $0x48] sm:$0xff] %vm851, %v961
      %978 = vst.msk [vmem:[#allocation4 + $0x50] sm:$0xff] %vm851, %v962
      %979 = vst.msk [vmem:[#allocation4 + $0x58] sm:$0xff] %vm851, %v963
      %980 = vst.msk [vmem:[#allocation4 + $0x60] sm:$0xff] %vm851, %v964
      %981 = vst.msk [vmem:[#allocation4 + $0x68] sm:$0xff] %vm851, %v965
      %982 = vst.msk [vmem:[#allocation4 + $0x70] sm:$0xff] %vm851, %v966
      %983 = vst.msk [vmem:[#allocation4 + $0x78] sm:$0xff] %vm851, %v967
      %984 = vst.msk [vmem:[#allocation2] sm:$0xff] %vm851, %v579
      %985 = vst.msk [vmem:[#allocation2 + $0x8] sm:$0xff] %vm851, %v580
      %986 = vst.msk [vmem:[#allocation2 + $0x10] sm:$0xff] %vm851, %v581
      %987 = vst.msk [vmem:[#allocation2 + $0x18] sm:$0xff] %vm851, %v582
      %988 = vst.msk [vmem:[#allocation2 + $0x20] sm:$0xff] %vm851, %v583
      %989 = vst.msk [vmem:[#allocation2 + $0x28] sm:$0xff] %vm851, %v584
      %990 = vst.msk [vmem:[#allocation2 + $0x30] sm:$0xff] %vm851, %v585
      %991 = vst.msk [vmem:[#allocation2 + $0x38] sm:$0xff] %vm851, %v586
      %992 = vst.msk [vmem:[#allocation2 + $0x40] sm:$0xff] %vm851, %v587
      %993 = vst.msk [vmem:[#allocation2 + $0x48] sm:$0xff] %vm851, %v588
      %994 = vst.msk [vmem:[#allocation2 + $0x50] sm:$0xff] %vm851, %v589
      %995 = vst.msk [vmem:[#allocation2 + $0x58] sm:$0xff] %vm851, %v590
      %996 = vst.msk [vmem:[#allocation2 + $0x60] sm:$0xff] %vm851, %v591
      %997 = vst.msk [vmem:[#allocation2 + $0x68] sm:$0xff] %vm851, %v592
      %998 = vst.msk [vmem:[#allocation2 + $0x70] sm:$0xff] %vm851, %v593
      %999 = vst.msk [vmem:[#allocation2 + $0x78] sm:$0xff] %vm851, %v594
      %p1000 = scmp.eq.s32.totalorder %s23, 1
      // Predicated region
      $region37: #{fwd.5} parent=31 // pred_check
        %p1001 = pneg %p1000
      $region38: #{fwd.5} parent=31 // pred_check_branch
        %1003 = sbr.rel (%p1001) target = $region40
      $region39: #{fwd.5} parent=31 // pred_region
        %v1004 = vld [vmem:[#allocation4] sm:$0xff]
        %v1005 = vld [vmem:[#allocation4 + $0x8] sm:$0xff]
        %v1006 = vld [vmem:[#allocation4 + $0x10] sm:$0xff]
        %v1007 = vld [vmem:[#allocation4 + $0x18] sm:$0xff]
        %v1008 = vld [vmem:[#allocation4 + $0x20] sm:$0xff]
        %v1009 = vld [vmem:[#allocation4 + $0x28] sm:$0xff]
        %v1010 = vld [vmem:[#allocation4 + $0x30] sm:$0xff]
        %v1011 = vld [vmem:[#allocation4 + $0x38] sm:$0xff]
        %v1012 = vld [vmem:[#allocation4 + $0x40] sm:$0xff]
        %v1013 = vld [vmem:[#allocation4 + $0x48] sm:$0xff]
        %v1014 = vld [vmem:[#allocation4 + $0x50] sm:$0xff]
        %v1015 = vld [vmem:[#allocation4 + $0x58] sm:$0xff]
        %v1016 = vld [vmem:[#allocation4 + $0x60] sm:$0xff]
        %v1017 = vld [vmem:[#allocation4 + $0x68] sm:$0xff]
        %v1018 = vld [vmem:[#allocation4 + $0x70] sm:$0xff]
        %v1019 = vld [vmem:[#allocation4 + $0x78] sm:$0xff]
        %v1020 = vld [vmem:[#allocation3] sm:$0xff]
        %v1021 = vld [vmem:[#allocation3 + $0x8] sm:$0xff]
        %v1022 = vld [vmem:[#allocation3 + $0x10] sm:$0xff]
        %v1023 = vld [vmem:[#allocation3 + $0x18] sm:$0xff]
        %v1024 = vld [vmem:[#allocation3 + $0x20] sm:$0xff]
        %v1025 = vld [vmem:[#allocation3 + $0x28] sm:$0xff]
        %v1026 = vld [vmem:[#allocation3 + $0x30] sm:$0xff]
        %v1027 = vld [vmem:[#allocation3 + $0x38] sm:$0xff]
        %v1028 = vld [vmem:[#allocation3 + $0x40] sm:$0xff]
        %v1029 = vld [vmem:[#allocation3 + $0x48] sm:$0xff]
        %v1030 = vld [vmem:[#allocation3 + $0x50] sm:$0xff]
        %v1031 = vld [vmem:[#allocation3 + $0x58] sm:$0xff]
        %v1032 = vld [vmem:[#allocation3 + $0x60] sm:$0xff]
        %v1033 = vld [vmem:[#allocation3 + $0x68] sm:$0xff]
        %v1034 = vld [vmem:[#allocation3 + $0x70] sm:$0xff]
        %v1035 = vld [vmem:[#allocation3 + $0x78] sm:$0xff]
        %v1036 = vrcp.pop %v1020
        %v1037 = vrcp.pop %v1021
        %v1038 = vrcp.pop %v1022
        %v1039 = vrcp.pop %v1023
        %v1040 = vrcp.pop %v1024
        %v1041 = vrcp.pop %v1025
        %v1042 = vrcp.pop %v1026
        %v1043 = vrcp.pop %v1027
        %v1044 = vrcp.pop %v1028
        %v1045 = vrcp.pop %v1029
        %v1046 = vrcp.pop %v1030
        %v1047 = vrcp.pop %v1031
        %v1048 = vrcp.pop %v1032
        %v1049 = vrcp.pop %v1033
        %v1050 = vrcp.pop %v1034
        %v1051 = vrcp.pop %v1035
        %v1052 = vmul.f32 %v1004, %v1036
        %v1053 = vmul.f32 %v1005, %v1037
        %v1054 = vmul.f32 %v1006, %v1038
        %v1055 = vmul.f32 %v1007, %v1039
        %v1056 = vmul.f32 %v1008, %v1040
        %v1057 = vmul.f32 %v1009, %v1041
        %v1058 = vmul.f32 %v1010, %v1042
        %v1059 = vmul.f32 %v1011, %v1043
        %v1060 = vmul.f32 %v1012, %v1044
        %v1061 = vmul.f32 %v1013, %v1045
        %v1062 = vmul.f32 %v1014, %v1046
        %v1063 = vmul.f32 %v1015, %v1047
        %v1064 = vmul.f32 %v1016, %v1048
        %v1065 = vmul.f32 %v1017, %v1049
        %v1066 = vmul.f32 %v1018, %v1050
        %v1067 = vmul.f32 %v1019, %v1051
        %1068 = vst.msk [vmem:[%s224] sm:$0xff] %vm851, %v1052
        %1069 = vst.msk [vmem:[%s224 + $0x8] sm:$0xff] %vm851, %v1053
        %1070 = vst.msk [vmem:[%s224 + $0x10] sm:$0xff] %vm851, %v1054
        %1071 = vst.msk [vmem:[%s224 + $0x18] sm:$0xff] %vm851, %v1055
        %1072 = vst.msk [vmem:[%s224 + $0x20] sm:$0xff] %vm851, %v1056
        %1073 = vst.msk [vmem:[%s224 + $0x28] sm:$0xff] %vm851, %v1057
        %1074 = vst.msk [vmem:[%s224 + $0x30] sm:$0xff] %vm851, %v1058
        %1075 = vst.msk [vmem:[%s224 + $0x38] sm:$0xff] %vm851, %v1059
        %1076 = vst.msk [vmem:[%s224 + $0x40] sm:$0xff] %vm851, %v1060
        %1077 = vst.msk [vmem:[%s224 + $0x48] sm:$0xff] %vm851, %v1061
        %1078 = vst.msk [vmem:[%s224 + $0x50] sm:$0xff] %vm851, %v1062
        %1079 = vst.msk [vmem:[%s224 + $0x58] sm:$0xff] %vm851, %v1063
        %1080 = vst.msk [vmem:[%s224 + $0x60] sm:$0xff] %vm851, %v1064
        %1081 = vst.msk [vmem:[%s224 + $0x68] sm:$0xff] %vm851, %v1065
        %1082 = vst.msk [vmem:[%s224 + $0x70] sm:$0xff] %vm851, %v1066
        %1083 = vst.msk [vmem:[%s224 + $0x78] sm:$0xff] %vm851, %v1067
      $region40: #{fwd.5} parent=31 // pred_fallthru
        _
      %s1084 = smul.u32 16, %s22
      %p1085 = scmp.lt.s32.totalorder %s1084, 31
      %s1086 = scalar_select %p1085, %s1084, 31
      %s1087 = smul.addr %s1086, 8
      %s1088 = scalar_lea.vmem %s5, %s1087
      // Predicated region
      $region41: #{fwd.5} parent=31 // pred_check
        %p1089 = pneg %p126
      $region42: #{fwd.5} parent=31 // pred_check_branch
        %1091 = sbr.rel (%p1089) target = $region44
      $region43: #{fwd.5} parent=31 // pred_region
        %s1092 = smul.u32 16, %s22
      $region44: #{fwd.5} parent=31 // pred_fallthru
        _
    $region32: #{fwd.5} parent=5 // pred_fallthru
      _
    %p1093 = scmp.le.s32.totalorder 2, %s13
    // Predicated region
    $region45: #{fwd.5} parent=5 // pred_check
      %p1094 = pneg %p1093
    $region46: #{fwd.5} parent=5 // pred_check_branch
      %1096 = sbr.rel (%p1094) target = $region48
    $region47: #{fwd.5} parent=5 // pred_region
      %s1097 = ssub.s32 %s13, 2
      // Predicated region
      $region49: #{fwd.5} parent=47 // pred_check
        %p1098 = pneg %p132
      $region50: #{fwd.5} parent=47 // pred_check_branch
        %1100 = sbr.rel (%p1098) target = $region52
      $region51: #{fwd.5} parent=47 // pred_region
        %s1101 = smul.u32 16, %s24
        %p1102 = scmp.lt.s32.totalorder %s1101, 31
        %s1103 = scalar_select %p1102, %s1101, 31
        %s1104 = smul.addr %s1103, 8
        %s1105 = scalar_lea.vmem %s5, %s1104
      $region52: #{fwd.5} parent=47 // pred_fallthru
        _
    $region48: #{fwd.5} parent=5 // pred_fallthru
      _
  $region6: #{fwd.5} parent=0 // loop_footer
    %s17 = sadd.s32 1, %s13
  $region7: #{fwd.5} parent=0 // loop_footer_branch
    %12 = sbr.rel target = $region3
  $region8: #{fwd.5} parent=0 // loop_exit
    _

</llo_original>
